<compile_context>
chip_gen: v7x
topology: tpu7x:2x2x1
jax: 0.10.0
libtpu: 0.0.40
codegen_flags: <defaults>
</compile_context>

<pallas_src>
import functools

import jax
import jax.numpy as jnp
from jax import lax
from jax.experimental import pallas as pl
from jax.experimental.pallas import tpu as pltpu

HIDDEN = 512          # fixed by nn.Linear(512, 512)
N_CLASSES = 11014     # default n_classes
EPS = 1e-8
TN = 2816             # fc2 class tile (22*128); n_classes pads to a multiple
                      # of TN (single constant couples tiling and init padding)


# ---------------------------------------------------------------------------
# Fused kernel: fc1 + L2-normalize + ReLU + (dropout=identity) + fc2 tile
# ---------------------------------------------------------------------------
def _ft_fused_kernel(x_ref, w1_ref, b1_ref, w2_ref, b2_ref, feat_ref, out_ref):
    # fc1: h = x @ W1^T + b1  (W1 stored pre-transposed as (512, 512)).
    # Recomputed per class tile so grid steps stay independent (megacore-safe);
    # cost is trivial vs. the 2.75 MiB bf16 fc2-weight tile streamed each step.
    h = jnp.dot(x_ref[...], w1_ref[...], preferred_element_type=jnp.float32)
    h = h + b1_ref[...]                                    # (B, 512) f32

    # features = F.normalize(h, p=2, dim=1, eps=1e-8) = h / max(||h||, eps)
    #          = h * rsqrt(max(sum(h*h), eps^2))   (rsqrt -> EUP, ~free)
    sumsq = jnp.sum(h * h, axis=1, keepdims=True)
    feat_ref[...] = h * lax.rsqrt(jnp.maximum(sumsq, EPS * EPS))

    # ReLU, Dropout2d (identity at inference), fc2 tile in bf16 with f32 acc.
    # TODO(synk): training-mode Dropout2d(p=0.1) channel RNG mask not implemented.
    relu_h = jnp.maximum(h, 0.0).astype(w2_ref.dtype)      # bf16 for the MXU
    out_ref[...] = (
        jnp.dot(relu_h, w2_ref[...], preferred_element_type=jnp.float32)
        + b2_ref[...]
    )


def ft_fused(x, w1_t, b1, w2_t_pad, b2_pad):
    B = x.shape[0]
    n_pad = w2_t_pad.shape[1]
    assert n_pad % TN == 0, "padded class dim must be a multiple of TN"
    grid = (n_pad // TN,)

    flops = grid[0] * (2 * B * HIDDEN * HIDDEN) + 2 * B * HIDDEN * n_pad
    bytes_accessed = int(
        w2_t_pad.size * w2_t_pad.dtype.itemsize    # dominant: bf16 fc2 weights
        + w1_t.size * 4 + b1.size * 4 + b2_pad.size * 4 + x.size * 4
        + B * n_pad * 4 + B * HIDDEN * 4            # logits + features out
    )

    return pl.pallas_call(
        _ft_fused_kernel,
        out_shape=(
            jax.ShapeDtypeStruct((B, HIDDEN), jnp.float32),   # features
            jax.ShapeDtypeStruct((B, n_pad), jnp.float32),    # padded logits
        ),
        grid_spec=pltpu.PrefetchScalarGridSpec(
            num_scalar_prefetch=0,
            grid=grid,
            in_specs=[
                pl.BlockSpec((B, HIDDEN), lambda j: (0, 0)),       # x (resident)
                pl.BlockSpec((HIDDEN, HIDDEN), lambda j: (0, 0)),  # W1 (resident)
                pl.BlockSpec((1, HIDDEN), lambda j: (0, 0)),       # b1 (resident)
                pl.BlockSpec((HIDDEN, TN), lambda j: (0, j)),      # W2 tile (bf16)
                pl.BlockSpec((1, TN), lambda j: (0, j)),           # b2 tile
            ],
            out_specs=[
                pl.BlockSpec((B, HIDDEN), lambda j: (0, 0)),       # features
                pl.BlockSpec((B, TN), lambda j: (0, j)),           # logits tile
            ],
        ),
        compiler_params=pltpu.CompilerParams(
            dimension_semantics=("parallel",),
        ),
        cost_estimate=pl.CostEstimate(
            flops=flops,
            transcendentals=grid[0] * B,
            bytes_accessed=bytes_accessed,
        ),
    )(x, w1_t, b1, w2_t_pad, b2_pad)


# ---------------------------------------------------------------------------
# Full model wrapper (glue in plain JAX: only the final class slice)
# ---------------------------------------------------------------------------
@functools.partial(jax.jit, static_argnames=("n_classes",))
def ft_model_forward(x, params, *, n_classes=N_CLASSES):
    w1_t, b1, w2_t_pad, b2_pad = params
    features, logits_pad = ft_fused(x, w1_t, b1, w2_t_pad, b2_pad)
    # Slice off class padding (tiny copy at B=8; keep the padded output
    # downstream instead if batch sizes ever grow large).
    return features, logits_pad[:, :n_classes]


def init_params(key, n_classes=N_CLASSES):
    """PyTorch-style uniform(+-1/sqrt(fan_in)) init; fc2 weights stored bf16."""
    k1, k2, k3, k4 = jax.random.split(key, 4)
    bound = 1.0 / jnp.sqrt(jnp.float32(HIDDEN))
    w1_t = jax.random.uniform(k1, (HIDDEN, HIDDEN), jnp.float32, -bound, bound)
    b1 = jax.random.uniform(k2, (1, HIDDEN), jnp.float32, -bound, bound)
    w2_t = jax.random.uniform(k3, (HIDDEN, n_classes), jnp.float32, -bound, bound)
    b2 = jax.random.uniform(k4, (1, n_classes), jnp.float32, -bound, bound)

    # Pad class dim up to a multiple of the kernel tile TN; bf16 weight stream.
    n_pad = pl.cdiv(n_classes, TN) * TN
    w2_t_pad = (
        jnp.zeros((HIDDEN, n_pad), jnp.float32).at[:, :n_classes].set(w2_t)
    ).astype(jnp.bfloat16)
    b2_pad = jnp.zeros((1, n_pad), jnp.float32).at[:, :n_classes].set(b2)
    return (w1_t, b1, w2_t_pad, b2_pad)


def ref_forward(x, params, n_classes):
    """Plain-JAX reference with the same bf16 fc2 weights."""
    w1_t, b1, w2_t_pad, b2_pad = params
    h = x @ w1_t + b1
    feat = h / jnp.maximum(jnp.sqrt(jnp.sum(h * h, axis=1, keepdims=True)), EPS)
    r = jnp.maximum(h, 0.0).astype(w2_t_pad.dtype)
    logits = (jnp.dot(r, w2_t_pad, preferred_element_type=jnp.float32)
              + b2_pad)[:, :n_classes]
    return feat, logits


if __name__ == "__main__":
    key = jax.random.PRNGKey(0)
    kx, kp = jax.random.split(key)

    B = 8  # small batch, sublane-aligned
    x = jax.random.normal(kx, (B, HIDDEN), jnp.float32)
    params = init_params(kp, n_classes=N_CLASSES)

    features, logits = ft_model_forward(x, params, n_classes=N_CLASSES)
    jax.block_until_ready((features, logits))

    assert features.shape == (B, HIDDEN)
    assert logits.shape == (B, N_CLASSES)

    # sanity: feature rows are unit-norm
    norms = jnp.sqrt(jnp.sum(features * features, axis=1))
    assert bool(jnp.all(jnp.abs(norms - 1.0) < 2e-3))

    # sanity: matches a plain-JAX reference (bf16 fc2 weights in both paths)
    feat_ref, logits_ref = ref_forward(x, params, N_CLASSES)
    assert bool(jnp.all(jnp.abs(features - feat_ref) < 3e-3))
    assert bool(jnp.all(jnp.abs(logits - logits_ref) < 5e-2))

    print("KERNEL_OK")
</pallas_src>

<mosaic_0001>
module attributes {stable_mosaic.version = 11 : i64} {
  func.func @_ft_fused_kernel(%arg0: i32, %arg1: memref<8x512xf32, #tpu.memory_space<vmem>>, %arg2: memref<512x512xf32, #tpu.memory_space<vmem>>, %arg3: memref<1x512xf32, #tpu.memory_space<vmem>>, %arg4: memref<512x2816xbf16, #tpu.memory_space<vmem>>, %arg5: memref<1x2816xf32, #tpu.memory_space<vmem>>, %arg6: memref<8x512xf32, #tpu.memory_space<vmem>>, %arg7: memref<8x2816xf32, #tpu.memory_space<vmem>>) attributes {dimension_semantics = [#tpu.dimension_semantics<parallel>], iteration_bounds = array<i64: 4>, scalar_prefetch = 0 : i64, scratch_operands = 0 : i64, tpu.core_type = #tpu.core_type<tc>, window_params = [{pipeline_mode = #tpu.pipeline_mode<synchronous>, transform_indices = @transform_0, window_bounds = array<i64: 8, 512>}, {pipeline_mode = #tpu.pipeline_mode<synchronous>, transform_indices = @transform_1, window_bounds = array<i64: 512, 512>}, {pipeline_mode = #tpu.pipeline_mode<synchronous>, transform_indices = @transform_2, window_bounds = array<i64: 1, 512>}, {transform_indices = @transform_3, window_bounds = array<i64: 512, 2816>}, {transform_indices = @transform_4, window_bounds = array<i64: 1, 2816>}, {pipeline_mode = #tpu.pipeline_mode<synchronous>, transform_indices = @transform_5, window_bounds = array<i64: 8, 512>}, {transform_indices = @transform_6, window_bounds = array<i64: 8, 2816>}]} {
    %c0 = arith.constant 0 : index
    %c0_0 = arith.constant 0 : index
    %0 = vector.load %arg1[%c0, %c0_0] : memref<8x512xf32, #tpu.memory_space<vmem>>, vector<8x512xf32>
    %c0_1 = arith.constant 0 : index
    %c0_2 = arith.constant 0 : index
    %1 = vector.load %arg2[%c0_1, %c0_2] : memref<512x512xf32, #tpu.memory_space<vmem>>, vector<512x512xf32>
    %cst = arith.constant dense<0.000000e+00> : vector<8x512xf32>
    %2 = tpu.matmul %0, %1, %cst {dimension_numbers = #tpu.dot_dimension_numbers<[1], [0], [0], [1], [0, 0, 1, 1], [], []>} : vector<8x512xf32>, vector<512x512xf32>, vector<8x512xf32> -> vector<8x512xf32>
    %c0_3 = arith.constant 0 : index
    %c0_4 = arith.constant 0 : index
    %3 = vector.load %arg3[%c0_3, %c0_4] : memref<1x512xf32, #tpu.memory_space<vmem>>, vector<1x512xf32>
    %4 = vector.broadcast %3 : vector<1x512xf32> to vector<8x512xf32>
    %5 = arith.addf %2, %4 : vector<8x512xf32>
    %6 = arith.mulf %5, %5 : vector<8x512xf32>
    %cst_5 = arith.constant dense<0.000000e+00> : vector<8xf32>
    %7 = vector.multi_reduction <add>, %6, %cst_5 [1] : vector<8x512xf32> to vector<8xf32>
    %8 = vector.shape_cast %7 : vector<8xf32> to vector<8x1xf32>
    %cst_6 = arith.constant 1.000000e-16 : f32
    %9 = vector.broadcast %cst_6 : f32 to vector<8x1xf32>
    %10 = arith.maximumf %8, %9 : vector<8x1xf32>
    %11 = math.rsqrt %10 : vector<8x1xf32>
    %12 = vector.broadcast %11 : vector<8x1xf32> to vector<8x512xf32>
    %13 = arith.mulf %5, %12 : vector<8x512xf32>
    %c0_7 = arith.constant 0 : index
    %c0_8 = arith.constant 0 : index
    %14 = vector.load %arg6[%c0_7, %c0_8] : memref<8x512xf32, #tpu.memory_space<vmem>>, vector<8x512xf32>
    tpu.vector_store %arg6[%c0_7, %c0_8], %13 {strides = array<i32>} : memref<8x512xf32, #tpu.memory_space<vmem>>, vector<8x512xf32>,
    %cst_9 = arith.constant 0.000000e+00 : f32
    %15 = vector.broadcast %cst_9 : f32 to vector<8x512xf32>
    %16 = arith.maximumf %5, %15 : vector<8x512xf32>
    %17 = arith.truncf %16 : vector<8x512xf32> to vector<8x512xbf16>
    %c0_10 = arith.constant 0 : index
    %c0_11 = arith.constant 0 : index
    %18 = vector.load %arg4[%c0_10, %c0_11] : memref<512x2816xbf16, #tpu.memory_space<vmem>>, vector<512x2816xbf16>
    %cst_12 = arith.constant dense<0.000000e+00> : vector<8x2816xf32>
    %19 = tpu.matmul %17, %18, %cst_12 {dimension_numbers = #tpu.dot_dimension_numbers<[1], [0], [0], [1], [0, 0, 1, 1], [], []>} : vector<8x512xbf16>, vector<512x2816xbf16>, vector<8x2816xf32> -> vector<8x2816xf32>
    %c0_13 = arith.constant 0 : index
    %c0_14 = arith.constant 0 : index
    %20 = vector.load %arg5[%c0_13, %c0_14] : memref<1x2816xf32, #tpu.memory_space<vmem>>, vector<1x2816xf32>
    %21 = vector.broadcast %20 : vector<1x2816xf32> to vector<8x2816xf32>
    %22 = arith.addf %19, %21 : vector<8x2816xf32>
    %c0_15 = arith.constant 0 : index
    %c0_16 = arith.constant 0 : index
    %23 = vector.load %arg7[%c0_15, %c0_16] : memref<8x2816xf32, #tpu.memory_space<vmem>>, vector<8x2816xf32>
    tpu.vector_store %arg7[%c0_15, %c0_16], %22 {strides = array<i32>} : memref<8x2816xf32, #tpu.memory_space<vmem>>, vector<8x2816xf32>,
    return
  }
  func.func @transform_0(%arg0: i32) -> (i32, i32) {
    %c0_i32 = arith.constant 0 : i32
    %c0_i32_0 = arith.constant 0 : i32
    %c0_i32_1 = arith.constant 0 : i32
    return %c0_i32, %c0_i32_0 : i32, i32
  }
  func.func @transform_1(%arg0: i32) -> (i32, i32) {
    %c0_i32 = arith.constant 0 : i32
    %c0_i32_0 = arith.constant 0 : i32
    %c0_i32_1 = arith.constant 0 : i32
    return %c0_i32, %c0_i32_0 : i32, i32
  }
  func.func @transform_2(%arg0: i32) -> (i32, i32) {
    %c0_i32 = arith.constant 0 : i32
    %c0_i32_0 = arith.constant 0 : i32
    %c0_i32_1 = arith.constant 0 : i32
    return %c0_i32, %c0_i32_0 : i32, i32
  }
  func.func @transform_3(%arg0: i32) -> (i32, i32) {
    %c0_i32 = arith.constant 0 : i32
    %c0_i32_0 = arith.constant 0 : i32
    return %c0_i32, %arg0 : i32, i32
  }
  func.func @transform_4(%arg0: i32) -> (i32, i32) {
    %c0_i32 = arith.constant 0 : i32
    %c0_i32_0 = arith.constant 0 : i32
    return %c0_i32, %arg0 : i32, i32
  }
  func.func @transform_5(%arg0: i32) -> (i32, i32) {
    %c0_i32 = arith.constant 0 : i32
    %c0_i32_0 = arith.constant 0 : i32
    %c0_i32_1 = arith.constant 0 : i32
    return %c0_i32, %c0_i32_0 : i32, i32
  }
  func.func @transform_6(%arg0: i32) -> (i32, i32) {
    %c0_i32 = arith.constant 0 : i32
    %c0_i32_0 = arith.constant 0 : i32
    return %c0_i32, %arg0 : i32, i32
  }
}

</mosaic_0001>

<llo_original>
// kernel: ft_model_forward.1
$region0: #{ft_model_forward.1}
  #allocation0 [shape = 'u32[]', space=smem, size = 0x4, offset = 0x4, fixed_abs, tag = 'smem constant byte address 0x4 - core index']
  #allocation1 [shape = 'u32[144,128]{1,0:T(1,128)}', space=vmem, size = 0x12000, scoped, tag = 'internal scratch']
  %s0 = inlined_call_operand.hbm [shape: f32[8,512], index: 0, kind: input, shape index: {}]
  %s1 = inlined_call_operand.hbm [shape: f32[512,512], index: 1, kind: input, shape index: {}]
  %s2 = inlined_call_operand.hbm [shape: f32[1,512], index: 2, kind: input, shape index: {}]
  %s3 = inlined_call_operand.hbm [shape: bf16[512,11264], index: 3, kind: input, shape index: {}]
  %s4 = inlined_call_operand.hbm [shape: f32[1,11264], index: 4, kind: input, shape index: {}]
  %s5 = inlined_call_operand.hbm [shape: f32[8,512], index: 5, kind: output, shape index: {0}]
  %s6 = inlined_call_operand.vmem [shape: f32[8,11264], index: 6, kind: output, shape index: {1}]
  %7 = xla_tuple %s5, %s6
  %s8 = sld [smem:[#allocation0]]
  $region81: #{ft_model_forward.1} parent=0
    _
  %s10 = ssub.s32 1, %s8
  %s11 = scalar_select 0, %s10, %s8
  $region1: #{ft_model_forward.1} parent=0
    #allocation2 [shape = 'u8[16384]{0}', space=vmem, size = 0x4000, scoped, tag = 'input window, operand 0, single buffered']
    #allocation3 [shape = 's32[2]{0}', space=sflag, size = 0x8, scoped, tag = 'scoped memory for ft_model_forward.1']
    #allocation4 [shape = 's32[2]{0}', space=sflag, size = 0x8, scoped, tag = 'scoped memory for ft_model_forward.1']
    #allocation5 [shape = 'u8[1048576]{0}', space=vmem, size = 0x100000, scoped, tag = 'input window, operand 1, single buffered']
    #allocation6 [shape = 's32[1]{0}', space=sflag, size = 0x4, scoped, tag = 'scoped memory for ft_model_forward.1']
    #allocation7 [shape = 'u8[2048]{0}', space=vmem, size = 0x800, scoped, tag = 'input window, operand 2, single buffered']
    #allocation8 [shape = 'u8[5767168]{0}', space=vmem, size = 0x580000, scoped, tag = 'input window, operand 3']
    #allocation9 [shape = 's32[2]{0}', space=sflag, size = 0x8, scoped, tag = 'scoped memory for ft_model_forward.1']
    #allocation10 [shape = 'u8[22528]{0}', space=vmem, size = 0x5800, scoped, tag = 'input window, operand 4']
    #allocation11 [shape = 'u8[16384]{0}', space=vmem, size = 0x4000, scoped, tag = 'output window, operand 0, single buffered']
    %12 = vsyncpa [#allocation3], 0
    %13 = vsyncpa [#allocation6], 0
    %14 = vsyncpa [#allocation9], 0
    %s15 = scalar_lea.sflag [#allocation9], 1
    %16 = vsyncpa %s15, 0
    %17 = vsyncpa [#allocation4], 0
    loop: start=0, step=1, limit=6
    $region2: #{ft_model_forward.1} parent=1 // loop_pre_header
      _
    $region3: #{ft_model_forward.1} parent=1 // loop_header
      %s19 = sphi 0, %s23
      %p20 = scmp.ge.s32.totalorder %s19, 6
      %s27 = sphi 0, %s27
      %s29 = sphi 0, %s27
      %s30 = sphi 0, %s29
      %s44 = sphi 0, %s30
      %s48 = sphi 0, %s48
      %s50 = sphi 0, %s48
      %s51 = sphi 0, %s50
      %s65 = sphi 0, %s51
      %s69 = sphi 0, %s69
      %s71 = sphi 0, %s69
      %s72 = sphi 0, %s71
      %s86 = sphi 0, %s72
      %s92 = sphi 0, %s94
      %s95 = sphi 0, %s92
      %s96 = sphi 0, %s95
      %s112 = sphi 0, %s96
      %s118 = sphi 0, %s120
      %s121 = sphi 0, %s118
      %s122 = sphi 0, %s121
      %s138 = sphi 0, %s122
      %s142 = sphi 0, %s142
      %s144 = sphi 0, %s142
      %s145 = sphi 0, %s144
      %s159 = sphi 0, %s145
      %s165 = sphi 0, %s167
      %s168 = sphi 0, %s165
      %s169 = sphi 0, %s168
      %s185 = sphi 0, %s169
    $region4: #{ft_model_forward.1} parent=1 // loop_header_branch
      %22 = sbr.rel (%p20) target = $region8
    $region5: #{ft_model_forward.1} parent=1 // loop_body
      %s24 = ssub.s32 %s19, 1
      %s25 = ssub.s32 %s19, 2
      %s26 = sadd.s32 %s19, 1
      %s28 = sadd.s32 %s27, 1
      %p31 = scmp.eq.s32.totalorder %s19, 3
      %p32 = scmp.ne.s32.totalorder %s27, %s29
      %p33 = scmp.eq.s32.totalorder %s19, 0
      %p34 = por %p32, %p33
      %p35 = scmp.ne.s32.totalorder %s27, %s29
      %p36 = scmp.eq.s32.totalorder %s24, 3
      %p37 = por %p35, %p36
      %p38 = scmp.ne.s32.totalorder %s29, %s30
      %p39 = scmp.eq.s32.totalorder %s24, 0
      %p40 = por %p38, %p39
      %p41 = scmp.ne.s32.totalorder %s29, %s30
      %p42 = scmp.eq.s32.totalorder %s25, 3
      %p43 = por %p41, %p42
      %p45 = scmp.ne.s32.totalorder %s30, %s44
      %p46 = scmp.eq.s32.totalorder %s25, 0
      %p47 = por %p45, %p46
      %s49 = sadd.s32 %s48, 1
      %p52 = scmp.eq.s32.totalorder %s19, 3
      %p53 = scmp.ne.s32.totalorder %s48, %s50
      %p54 = scmp.eq.s32.totalorder %s19, 0
      %p55 = por %p53, %p54
      %p56 = scmp.ne.s32.totalorder %s48, %s50
      %p57 = scmp.eq.s32.totalorder %s24, 3
      %p58 = por %p56, %p57
      %p59 = scmp.ne.s32.totalorder %s50, %s51
      %p60 = scmp.eq.s32.totalorder %s24, 0
      %p61 = por %p59, %p60
      %p62 = scmp.ne.s32.totalorder %s50, %s51
      %p63 = scmp.eq.s32.totalorder %s25, 3
      %p64 = por %p62, %p63
      %p66 = scmp.ne.s32.totalorder %s51, %s65
      %p67 = scmp.eq.s32.totalorder %s25, 0
      %p68 = por %p66, %p67
      %s70 = sadd.s32 %s69, 1
      %p73 = scmp.eq.s32.totalorder %s19, 3
      %p74 = scmp.ne.s32.totalorder %s69, %s71
      %p75 = scmp.eq.s32.totalorder %s19, 0
      %p76 = por %p74, %p75
      %p77 = scmp.ne.s32.totalorder %s69, %s71
      %p78 = scmp.eq.s32.totalorder %s24, 3
      %p79 = por %p77, %p78
      %p80 = scmp.ne.s32.totalorder %s71, %s72
      %p81 = scmp.eq.s32.totalorder %s24, 0
      %p82 = por %p80, %p81
      %p83 = scmp.ne.s32.totalorder %s71, %s72
      %p84 = scmp.eq.s32.totalorder %s25, 3
      %p85 = por %p83, %p84
      %p87 = scmp.ne.s32.totalorder %s72, %s86
      %p88 = scmp.eq.s32.totalorder %s25, 0
      %p89 = por %p87, %p88
      %s90 = ssub.s32 %s19, %s26
      %p91 = scmp.eq.s32.totalorder %s90, 0
      %s93 = sadd.s32 %s92, 1
      %s94 = scalar_select %p91, %s92, %s93
      %p97 = pneg %p91
      %p98 = scmp.eq.s32.totalorder %s19, 3
      %p99 = por %p97, %p98
      %p100 = scmp.ne.s32.totalorder %s92, %s95
      %p101 = scmp.eq.s32.totalorder %s19, 0
      %p102 = por %p100, %p101
      %p103 = scmp.ne.s32.totalorder %s92, %s95
      %p104 = scmp.eq.s32.totalorder %s24, 3
      %p105 = por %p103, %p104
      %p106 = scmp.ne.s32.totalorder %s95, %s96
      %p107 = scmp.eq.s32.totalorder %s24, 0
      %p108 = por %p106, %p107
      %p109 = scmp.ne.s32.totalorder %s95, %s96
      %p110 = scmp.eq.s32.totalorder %s25, 3
      %p111 = por %p109, %p110
      %p113 = scmp.ne.s32.totalorder %s96, %s112
      %p114 = scmp.eq.s32.totalorder %s25, 0
      %p115 = por %p113, %p114
      %s116 = ssub.s32 %s19, %s26
      %p117 = scmp.eq.s32.totalorder %s116, 0
      %s119 = sadd.s32 %s118, 1
      %s120 = scalar_select %p117, %s118, %s119
      %p123 = pneg %p117
      %p124 = scmp.eq.s32.totalorder %s19, 3
      %p125 = por %p123, %p124
      %p126 = scmp.ne.s32.totalorder %s118, %s121
      %p127 = scmp.eq.s32.totalorder %s19, 0
      %p128 = por %p126, %p127
      %p129 = scmp.ne.s32.totalorder %s118, %s121
      %p130 = scmp.eq.s32.totalorder %s24, 3
      %p131 = por %p129, %p130
      %p132 = scmp.ne.s32.totalorder %s121, %s122
      %p133 = scmp.eq.s32.totalorder %s24, 0
      %p134 = por %p132, %p133
      %p135 = scmp.ne.s32.totalorder %s121, %s122
      %p136 = scmp.eq.s32.totalorder %s25, 3
      %p137 = por %p135, %p136
      %p139 = scmp.ne.s32.totalorder %s122, %s138
      %p140 = scmp.eq.s32.totalorder %s25, 0
      %p141 = por %p139, %p140
      %s143 = sadd.s32 %s142, 1
      %p146 = scmp.eq.s32.totalorder %s19, 3
      %p147 = scmp.ne.s32.totalorder %s142, %s144
      %p148 = scmp.eq.s32.totalorder %s19, 0
      %p149 = por %p147, %p148
      %p150 = scmp.ne.s32.totalorder %s142, %s144
      %p151 = scmp.eq.s32.totalorder %s24, 3
      %p152 = por %p150, %p151
      %p153 = scmp.ne.s32.totalorder %s144, %s145
      %p154 = scmp.eq.s32.totalorder %s24, 0
      %p155 = por %p153, %p154
      %p156 = scmp.ne.s32.totalorder %s144, %s145
      %p157 = scmp.eq.s32.totalorder %s25, 3
      %p158 = por %p156, %p157
      %p160 = scmp.ne.s32.totalorder %s145, %s159
      %p161 = scmp.eq.s32.totalorder %s25, 0
      %p162 = por %p160, %p161
      %s163 = ssub.s32 %s19, %s26
      %p164 = scmp.eq.s32.totalorder %s163, 0
      %s166 = sadd.s32 %s165, 1
      %s167 = scalar_select %p164, %s165, %s166
      %p170 = pneg %p164
      %p171 = scmp.eq.s32.totalorder %s19, 3
      %p172 = por %p170, %p171
      %p173 = scmp.ne.s32.totalorder %s165, %s168
      %p174 = scmp.eq.s32.totalorder %s19, 0
      %p175 = por %p173, %p174
      %p176 = scmp.ne.s32.totalorder %s165, %s168
      %p177 = scmp.eq.s32.totalorder %s24, 3
      %p178 = por %p176, %p177
      %p179 = scmp.ne.s32.totalorder %s168, %s169
      %p180 = scmp.eq.s32.totalorder %s24, 0
      %p181 = por %p179, %p180
      %p182 = scmp.ne.s32.totalorder %s168, %s169
      %p183 = scmp.eq.s32.totalorder %s25, 3
      %p184 = por %p182, %p183
      %p186 = scmp.ne.s32.totalorder %s169, %s185
      %p187 = scmp.eq.s32.totalorder %s25, 0
      %p188 = por %p186, %p187
      %p189 = scmp.le.s32.totalorder 1, %s19
      %p190 = scmp.lt.s32.totalorder %s19, 5
      %p191 = pnand %p189, %p190
      %p192 = pneg %p191
      // Predicated region
      $region9: #{ft_model_forward.1} parent=5 // pred_check
        _
      $region10: #{ft_model_forward.1} parent=5 // pred_check_branch
        %194 = sbr.rel (%p191) target = $region12
      $region11: #{ft_model_forward.1} parent=5 // pred_region
        %s195 = ssub.s32 %s19, 1
        // Predicated region
        $region13: #{ft_model_forward.1} parent=11 // pred_check
          %p196 = pneg %p40
        $region14: #{ft_model_forward.1} parent=11 // pred_check_branch
          %198 = sbr.rel (%p196) target = $region16
        $region15: #{ft_model_forward.1} parent=11 // pred_region
          %s200 = ssub.s32 512, 512
          %201 = vsyncadd [#allocation3], %s200
          %s203 = sshll.u32 [#allocation2], 4
          %s204 = int_to_ptr.vmem [resolvable:$true] %s203
          %206 = dma.hbm_to_vmem [thread:$0]  %s0, 512, %s204, [#allocation3]
        $region16: #{ft_model_forward.1} parent=11 // pred_fallthru
          _
        // Predicated region
        $region17: #{ft_model_forward.1} parent=11 // pred_check
          %p207 = pneg %p61
        $region18: #{ft_model_forward.1} parent=11 // pred_check_branch
          %209 = sbr.rel (%p207) target = $region20
        $region19: #{ft_model_forward.1} parent=11 // pred_region
          %s211 = ssub.s32 32768, 32768
          %212 = vsyncadd [#allocation6], %s211
          %s213 = sshll.u32 [#allocation5], 4
          %s214 = int_to_ptr.vmem [resolvable:$true] %s213
          %219 = dma.hbm_to_vmem [thread:$0]  %s1, 32768, %s214, [#allocation6], 512, 512, 32
        $region20: #{ft_model_forward.1} parent=11 // pred_fallthru
          _
        // Predicated region
        $region21: #{ft_model_forward.1} parent=11 // pred_check
          %p220 = pneg %p82
        $region22: #{ft_model_forward.1} parent=11 // pred_check_branch
          %222 = sbr.rel (%p220) target = $region24
        $region23: #{ft_model_forward.1} parent=11 // pred_region
          %s224 = ssub.s32 64, 64
          %225 = vsyncadd [#allocation6], %s224
          %s227 = sshll.u32 [#allocation7], 4
          %s228 = int_to_ptr.vmem [resolvable:$true] %s227
          %230 = dma.hbm_to_vmem [thread:$0]  %s2, 64, %s228, [#allocation6]
        $region24: #{ft_model_forward.1} parent=11 // pred_fallthru
          _
      $region12: #{ft_model_forward.1} parent=5 // pred_fallthru
        _
      %p231 = scmp.lt.s32.totalorder %s19, 4
      // Predicated region
      $region25: #{ft_model_forward.1} parent=5 // pred_check
        %p232 = pneg %p231
      $region26: #{ft_model_forward.1} parent=5 // pred_check_branch
        %234 = sbr.rel (%p232) target = $region28
      $region27: #{ft_model_forward.1} parent=5 // pred_region
        // Predicated region
        $region29: #{ft_model_forward.1} parent=27 // pred_check
          %p235 = pneg %p102
        $region30: #{ft_model_forward.1} parent=27 // pred_check_branch
          %237 = sbr.rel (%p235) target = $region32
        $region31: #{ft_model_forward.1} parent=27 // pred_region
          %s238 = sand.u32 %s19, 1
          %s239 = scalar_lea.sflag [#allocation9], %s238
          %s240 = sand.u32 %s92, 1
          %s241 = smul.addr %s240, 5632
          %s242 = scalar_lea.vmem [#allocation8], %s241
          %s243 = smul.u32 22, %s19
          %s245 = ssub.s32 90112, 90112
          %246 = vsyncadd %s239, %s245
          %s247 = smul.addr %s243, 64
          %s248 = scalar_lea.hbm %s3, %s247
          %s249 = sshll.u32 %s242, 4
          %s250 = int_to_ptr.vmem [resolvable:$true] %s249
          %255 = dma.hbm_to_vmem [thread:$0]  %s248, 90112, %s250, %s239, 5632, 1408, 88
        $region32: #{ft_model_forward.1} parent=27 // pred_fallthru
          _
        // Predicated region
        $region33: #{ft_model_forward.1} parent=27 // pred_check
          %p256 = pneg %p128
        $region34: #{ft_model_forward.1} parent=27 // pred_check_branch
          %258 = sbr.rel (%p256) target = $region36
        $region35: #{ft_model_forward.1} parent=27 // pred_region
          %s259 = sand.u32 %s19, 1
          %s260 = scalar_lea.sflag [#allocation9], %s259
          %s261 = sand.u32 %s118, 1
          %s262 = smul.addr %s261, 22
          %s263 = scalar_lea.vmem [#allocation10], %s262
          %s264 = smul.u32 22, %s19
          %s266 = ssub.s32 352, 352
          %267 = vsyncadd %s260, %s266
          %s268 = smul.addr %s264, 16
          %s269 = scalar_lea.hbm %s4, %s268
          %s271 = sshll.u32 %s263, 4
          %s272 = int_to_ptr.vmem [resolvable:$true] %s271
          %274 = dma.hbm_to_vmem [thread:$0]  %s269, 352, %s272, %s260
        $region36: #{ft_model_forward.1} parent=27 // pred_fallthru
          _
      $region28: #{ft_model_forward.1} parent=5 // pred_fallthru
        _
      %p275 = scmp.le.s32.totalorder 1, %s19
      %p276 = scmp.lt.s32.totalorder %s19, 5
      %p277 = pnand %p275, %p276
      %p278 = pneg %p277
      // Predicated region
      $region37: #{ft_model_forward.1} parent=5 // pred_check
        _
      $region38: #{ft_model_forward.1} parent=5 // pred_check_branch
        %280 = sbr.rel (%p277) target = $region40
      $region39: #{ft_model_forward.1} parent=5 // pred_region
        %s281 = ssub.s32 %s19, 1
        // Predicated region
        $region41: #{ft_model_forward.1} parent=39 // pred_check
          %p282 = pneg %p40
        $region42: #{ft_model_forward.1} parent=39 // pred_check_branch
          %284 = sbr.rel (%p282) target = $region44
        $region43: #{ft_model_forward.1} parent=39 // pred_region
          %285 = dma.done [#allocation3], 512
        $region44: #{ft_model_forward.1} parent=39 // pred_fallthru
          _
        // Predicated region
        $region45: #{ft_model_forward.1} parent=39 // pred_check
          %p286 = pneg %p61
        $region46: #{ft_model_forward.1} parent=39 // pred_check_branch
          %288 = sbr.rel (%p286) target = $region48
        $region47: #{ft_model_forward.1} parent=39 // pred_region
          %289 = dma.done [#allocation6], 32768
        $region48: #{ft_model_forward.1} parent=39 // pred_fallthru
          _
        // Predicated region
        $region49: #{ft_model_forward.1} parent=39 // pred_check
          %p290 = pneg %p82
        $region50: #{ft_model_forward.1} parent=39 // pred_check_branch
          %292 = sbr.rel (%p290) target = $region52
        $region51: #{ft_model_forward.1} parent=39 // pred_region
          %293 = dma.done [#allocation6], 64
        $region52: #{ft_model_forward.1} parent=39 // pred_fallthru
          _
        %s294 = sand.u32 %s24, 1
        %s295 = scalar_lea.sflag [#allocation9], %s294
        %s296 = sand.u32 %s95, 1
        %s297 = smul.addr %s296, 5632
        %s298 = scalar_lea.vmem [#allocation8], %s297
        // Predicated region
        $region53: #{ft_model_forward.1} parent=39 // pred_check
          %p299 = pneg %p108
        $region54: #{ft_model_forward.1} parent=39 // pred_check_branch
          %301 = sbr.rel (%p299) target = $region56
        $region55: #{ft_model_forward.1} parent=39 // pred_region
          %302 = dma.done %s295, 90112
        $region56: #{ft_model_forward.1} parent=39 // pred_fallthru
          _
        %s303 = sand.u32 %s24, 1
        %s304 = scalar_lea.sflag [#allocation9], %s303
        %s305 = sand.u32 %s121, 1
        %s306 = smul.addr %s305, 22
        %s307 = scalar_lea.vmem [#allocation10], %s306
        // Predicated region
        $region57: #{ft_model_forward.1} parent=39 // pred_check
          %p308 = pneg %p134
        $region58: #{ft_model_forward.1} parent=39 // pred_check_branch
          %310 = sbr.rel (%p308) target = $region60
        $region59: #{ft_model_forward.1} parent=39 // pred_region
          %311 = dma.done %s304, 352
        $region60: #{ft_model_forward.1} parent=39 // pred_fallthru
          _
        %p312 = pneg %p40
        %p313 = pneg %p37
        %p314 = pneg %p61
        %p315 = pneg %p58
        %p316 = pneg %p82
        %p317 = pneg %p79
        %s318 = sand.u32 %s24, 1
        %s319 = scalar_lea.sflag [#allocation9], %s318
        %s320 = sand.u32 %s95, 1
        %s321 = smul.addr %s320, 5632
        %s322 = scalar_lea.vmem [#allocation8], %s321
        %p323 = pneg %p108
        %p324 = pneg %p105
        %s325 = sand.u32 %s24, 1
        %s326 = scalar_lea.sflag [#allocation9], %s325
        %s327 = sand.u32 %s121, 1
        %s328 = smul.addr %s327, 22
        %s329 = scalar_lea.vmem [#allocation10], %s328
        %p330 = pneg %p134
        %p331 = pneg %p131
        %p332 = pneg %p155
        %p333 = pneg %p152
        %p334 = pneg %p181
        %p335 = pneg %p178
        %s336 = smul.u32 22, %s24
        %p337 = scmp.lt.s32.totalorder %s336, 87
        %s338 = scalar_select %p337, %s336, 87
        %s339 = smul.addr %s338, 8
        %s340 = scalar_lea.vmem %s6, %s339
        %s341 = smul.u32 22, %s24
        %s342 = smul.u32 22, %s24
        %s343 = smul.u32 22, %s24
        %p344 = scmp.lt.s32.totalorder %s343, 87
        %s345 = scalar_select %p344, %s343, 87
        %s346 = smul.addr %s345, 8
        %s347 = scalar_lea.vmem %s6, %s346
        %s348 = smul.u32 22, %s24
        %v349 = vld [vmem:[#allocation2] sm:$0xff]
        %v350 = vld [vmem:[#allocation2 + $0x8] sm:$0xff]
        %v351 = vld [vmem:[#allocation2 + $0x10] sm:$0xff]
        %v352 = vld [vmem:[#allocation2 + $0x18] sm:$0xff]
        %v353 = vld [vmem:[#allocation5] sm:$0xff]
        %v354 = vld [vmem:[#allocation5 + $0x8] sm:$0xff]
        %v355 = vld [vmem:[#allocation5 + $0x10] sm:$0xff]
        %v356 = vld [vmem:[#allocation5 + $0x18] sm:$0xff]
        %v357 = vld [vmem:[#allocation5 + $0x20] sm:$0xff]
        %v358 = vld [vmem:[#allocation5 + $0x28] sm:$0xff]
        %v359 = vld [vmem:[#allocation5 + $0x30] sm:$0xff]
        %v360 = vld [vmem:[#allocation5 + $0x38] sm:$0xff]
        %v361 = vld [vmem:[#allocation5 + $0x40] sm:$0xff]
        %v362 = vld [vmem:[#allocation5 + $0x48] sm:$0xff]
        %v363 = vld [vmem:[#allocation5 + $0x50] sm:$0xff]
        %v364 = vld [vmem:[#allocation5 + $0x58] sm:$0xff]
        %v365 = vld [vmem:[#allocation5 + $0x60] sm:$0xff]
        %v366 = vld [vmem:[#allocation5 + $0x68] sm:$0xff]
        %v367 = vld [vmem:[#allocation5 + $0x70] sm:$0xff]
        %v368 = vld [vmem:[#allocation5 + $0x78] sm:$0xff]
        %v369 = vld [vmem:[#allocation5 + $0x80] sm:$0xff]
        %v370 = vld [vmem:[#allocation5 + $0x88] sm:$0xff]
        %v371 = vld [vmem:[#allocation5 + $0x90] sm:$0xff]
        %v372 = vld [vmem:[#allocation5 + $0x98] sm:$0xff]
        %v373 = vld [vmem:[#allocation5 + $0xa0] sm:$0xff]
        %v374 = vld [vmem:[#allocation5 + $0xa8] sm:$0xff]
        %v375 = vld [vmem:[#allocation5 + $0xb0] sm:$0xff]
        %v376 = vld [vmem:[#allocation5 + $0xb8] sm:$0xff]
        %v377 = vld [vmem:[#allocation5 + $0xc0] sm:$0xff]
        %v378 = vld [vmem:[#allocation5 + $0xc8] sm:$0xff]
        %v379 = vld [vmem:[#allocation5 + $0xd0] sm:$0xff]
        %v380 = vld [vmem:[#allocation5 + $0xd8] sm:$0xff]
        %v381 = vld [vmem:[#allocation5 + $0xe0] sm:$0xff]
        %v382 = vld [vmem:[#allocation5 + $0xe8] sm:$0xff]
        %v383 = vld [vmem:[#allocation5 + $0xf0] sm:$0xff]
        %v384 = vld [vmem:[#allocation5 + $0xf8] sm:$0xff]
        %v385 = vld [vmem:[#allocation5 + $0x100] sm:$0xff]
        %v386 = vld [vmem:[#allocation5 + $0x108] sm:$0xff]
        %v387 = vld [vmem:[#allocation5 + $0x110] sm:$0xff]
        %v388 = vld [vmem:[#allocation5 + $0x118] sm:$0xff]
        %v389 = vld [vmem:[#allocation5 + $0x120] sm:$0xff]
        %v390 = vld [vmem:[#allocation5 + $0x128] sm:$0xff]
        %v391 = vld [vmem:[#allocation5 + $0x130] sm:$0xff]
        %v392 = vld [vmem:[#allocation5 + $0x138] sm:$0xff]
        %v393 = vld [vmem:[#allocation5 + $0x140] sm:$0xff]
        %v394 = vld [vmem:[#allocation5 + $0x148] sm:$0xff]
        %v395 = vld [vmem:[#allocation5 + $0x150] sm:$0xff]
        %v396 = vld [vmem:[#allocation5 + $0x158] sm:$0xff]
        %v397 = vld [vmem:[#allocation5 + $0x160] sm:$0xff]
        %v398 = vld [vmem:[#allocation5 + $0x168] sm:$0xff]
        %v399 = vld [vmem:[#allocation5 + $0x170] sm:$0xff]
        %v400 = vld [vmem:[#allocation5 + $0x178] sm:$0xff]
        %v401 = vld [vmem:[#allocation5 + $0x180] sm:$0xff]
        %v402 = vld [vmem:[#allocation5 + $0x188] sm:$0xff]
        %v403 = vld [vmem:[#allocation5 + $0x190] sm:$0xff]
        %v404 = vld [vmem:[#allocation5 + $0x198] sm:$0xff]
        %v405 = vld [vmem:[#allocation5 + $0x1a0] sm:$0xff]
        %v406 = vld [vmem:[#allocation5 + $0x1a8] sm:$0xff]
        %v407 = vld [vmem:[#allocation5 + $0x1b0] sm:$0xff]
        %v408 = vld [vmem:[#allocation5 + $0x1b8] sm:$0xff]
        %v409 = vld [vmem:[#allocation5 + $0x1c0] sm:$0xff]
        %v410 = vld [vmem:[#allocation5 + $0x1c8] sm:$0xff]
        %v411 = vld [vmem:[#allocation5 + $0x1d0] sm:$0xff]
        %v412 = vld [vmem:[#allocation5 + $0x1d8] sm:$0xff]
        %v413 = vld [vmem:[#allocation5 + $0x1e0] sm:$0xff]
        %v414 = vld [vmem:[#allocation5 + $0x1e8] sm:$0xff]
        %v415 = vld [vmem:[#allocation5 + $0x1f0] sm:$0xff]
        %v416 = vld [vmem:[#allocation5 + $0x1f8] sm:$0xff]
        %v417 = vld [vmem:[#allocation5 + $0x200] sm:$0xff]
        %v418 = vld [vmem:[#allocation5 + $0x208] sm:$0xff]
        %v419 = vld [vmem:[#allocation5 + $0x210] sm:$0xff]
        %v420 = vld [vmem:[#allocation5 + $0x218] sm:$0xff]
        %v421 = vld [vmem:[#allocation5 + $0x220] sm:$0xff]
        %v422 = vld [vmem:[#allocation5 + $0x228] sm:$0xff]
        %v423 = vld [vmem:[#allocation5 + $0x230] sm:$0xff]
        %v424 = vld [vmem:[#allocation5 + $0x238] sm:$0xff]
        %v425 = vld [vmem:[#allocation5 + $0x240] sm:$0xff]
        %v426 = vld [vmem:[#allocation5 + $0x248] sm:$0xff]
        %v427 = vld [vmem:[#allocation5 + $0x250] sm:$0xff]
        %v428 = vld [vmem:[#allocation5 + $0x258] sm:$0xff]
        %v429 = vld [vmem:[#allocation5 + $0x260] sm:$0xff]
        %v430 = vld [vmem:[#allocation5 + $0x268] sm:$0xff]
        %v431 = vld [vmem:[#allocation5 + $0x270] sm:$0xff]
        %v432 = vld [vmem:[#allocation5 + $0x278] sm:$0xff]
        %v433 = vld [vmem:[#allocation5 + $0x280] sm:$0xff]
        %v434 = vld [vmem:[#allocation5 + $0x288] sm:$0xff]
        %v435 = vld [vmem:[#allocation5 + $0x290] sm:$0xff]
        %v436 = vld [vmem:[#allocation5 + $0x298] sm:$0xff]
        %v437 = vld [vmem:[#allocation5 + $0x2a0] sm:$0xff]
        %v438 = vld [vmem:[#allocation5 + $0x2a8] sm:$0xff]
        %v439 = vld [vmem:[#allocation5 + $0x2b0] sm:$0xff]
        %v440 = vld [vmem:[#allocation5 + $0x2b8] sm:$0xff]
        %v441 = vld [vmem:[#allocation5 + $0x2c0] sm:$0xff]
        %v442 = vld [vmem:[#allocation5 + $0x2c8] sm:$0xff]
        %v443 = vld [vmem:[#allocation5 + $0x2d0] sm:$0xff]
        %v444 = vld [vmem:[#allocation5 + $0x2d8] sm:$0xff]
        %v445 = vld [vmem:[#allocation5 + $0x2e0] sm:$0xff]
        %v446 = vld [vmem:[#allocation5 + $0x2e8] sm:$0xff]
        %v447 = vld [vmem:[#allocation5 + $0x2f0] sm:$0xff]
        %v448 = vld [vmem:[#allocation5 + $0x2f8] sm:$0xff]
        %v449 = vld [vmem:[#allocation5 + $0x300] sm:$0xff]
        %v450 = vld [vmem:[#allocation5 + $0x308] sm:$0xff]
        %v451 = vld [vmem:[#allocation5 + $0x310] sm:$0xff]
        %v452 = vld [vmem:[#allocation5 + $0x318] sm:$0xff]
        %v453 = vld [vmem:[#allocation5 + $0x320] sm:$0xff]
        %v454 = vld [vmem:[#allocation5 + $0x328] sm:$0xff]
        %v455 = vld [vmem:[#allocation5 + $0x330] sm:$0xff]
        %v456 = vld [vmem:[#allocation5 + $0x338] sm:$0xff]
        %v457 = vld [vmem:[#allocation5 + $0x340] sm:$0xff]
        %v458 = vld [vmem:[#allocation5 + $0x348] sm:$0xff]
        %v459 = vld [vmem:[#allocation5 + $0x350] sm:$0xff]
        %v460 = vld [vmem:[#allocation5 + $0x358] sm:$0xff]
        %v461 = vld [vmem:[#allocation5 + $0x360] sm:$0xff]
        %v462 = vld [vmem:[#allocation5 + $0x368] sm:$0xff]
        %v463 = vld [vmem:[#allocation5 + $0x370] sm:$0xff]
        %v464 = vld [vmem:[#allocation5 + $0x378] sm:$0xff]
        %v465 = vld [vmem:[#allocation5 + $0x380] sm:$0xff]
        %v466 = vld [vmem:[#allocation5 + $0x388] sm:$0xff]
        %v467 = vld [vmem:[#allocation5 + $0x390] sm:$0xff]
        %v468 = vld [vmem:[#allocation5 + $0x398] sm:$0xff]
        %v469 = vld [vmem:[#allocation5 + $0x3a0] sm:$0xff]
        %v470 = vld [vmem:[#allocation5 + $0x3a8] sm:$0xff]
        %v471 = vld [vmem:[#allocation5 + $0x3b0] sm:$0xff]
        %v472 = vld [vmem:[#allocation5 + $0x3b8] sm:$0xff]
        %v473 = vld [vmem:[#allocation5 + $0x3c0] sm:$0xff]
        %v474 = vld [vmem:[#allocation5 + $0x3c8] sm:$0xff]
        %v475 = vld [vmem:[#allocation5 + $0x3d0] sm:$0xff]
        %v476 = vld [vmem:[#allocation5 + $0x3d8] sm:$0xff]
        %v477 = vld [vmem:[#allocation5 + $0x3e0] sm:$0xff]
        %v478 = vld [vmem:[#allocation5 + $0x3e8] sm:$0xff]
        %v479 = vld [vmem:[#allocation5 + $0x3f0] sm:$0xff]
        %v480 = vld [vmem:[#allocation5 + $0x3f8] sm:$0xff]
        %v481 = vld [vmem:[#allocation5 + $0x400] sm:$0xff]
        %v482 = vld [vmem:[#allocation5 + $0x408] sm:$0xff]
        %v483 = vld [vmem:[#allocation5 + $0x410] sm:$0xff]
        %v484 = vld [vmem:[#allocation5 + $0x418] sm:$0xff]
        %v485 = vld [vmem:[#allocation5 + $0x420] sm:$0xff]
        %v486 = vld [vmem:[#allocation5 + $0x428] sm:$0xff]
        %v487 = vld [vmem:[#allocation5 + $0x430] sm:$0xff]
        %v488 = vld [vmem:[#allocation5 + $0x438] sm:$0xff]
        %v489 = vld [vmem:[#allocation5 + $0x440] sm:$0xff]
        %v490 = vld [vmem:[#allocation5 + $0x448] sm:$0xff]
        %v491 = vld [vmem:[#allocation5 + $0x450] sm:$0xff]
        %v492 = vld [vmem:[#allocation5 + $0x458] sm:$0xff]
        %v493 = vld [vmem:[#allocation5 + $0x460] sm:$0xff]
        %v494 = vld [vmem:[#allocation5 + $0x468] sm:$0xff]
        %v495 = vld [vmem:[#allocation5 + $0x470] sm:$0xff]
        %v496 = vld [vmem:[#allocation5 + $0x478] sm:$0xff]
        %v497 = vld [vmem:[#allocation5 + $0x480] sm:$0xff]
        %v498 = vld [vmem:[#allocation5 + $0x488] sm:$0xff]
        %v499 = vld [vmem:[#allocation5 + $0x490] sm:$0xff]
        %v500 = vld [vmem:[#allocation5 + $0x498] sm:$0xff]
        %v501 = vld [vmem:[#allocation5 + $0x4a0] sm:$0xff]
        %v502 = vld [vmem:[#allocation5 + $0x4a8] sm:$0xff]
        %v503 = vld [vmem:[#allocation5 + $0x4b0] sm:$0xff]
        %v504 = vld [vmem:[#allocation5 + $0x4b8] sm:$0xff]
        %v505 = vld [vmem:[#allocation5 + $0x4c0] sm:$0xff]
        %v506 = vld [vmem:[#allocation5 + $0x4c8] sm:$0xff]
        %v507 = vld [vmem:[#allocation5 + $0x4d0] sm:$0xff]
        %v508 = vld [vmem:[#allocation5 + $0x4d8] sm:$0xff]
        %v509 = vld [vmem:[#allocation5 + $0x4e0] sm:$0xff]
        %v510 = vld [vmem:[#allocation5 + $0x4e8] sm:$0xff]
        %v511 = vld [vmem:[#allocation5 + $0x4f0] sm:$0xff]
        %v512 = vld [vmem:[#allocation5 + $0x4f8] sm:$0xff]
        %v513 = vld [vmem:[#allocation5 + $0x500] sm:$0xff]
        %v514 = vld [vmem:[#allocation5 + $0x508] sm:$0xff]
        %v515 = vld [vmem:[#allocation5 + $0x510] sm:$0xff]
        %v516 = vld [vmem:[#allocation5 + $0x518] sm:$0xff]
        %v517 = vld [vmem:[#allocation5 + $0x520] sm:$0xff]
        %v518 = vld [vmem:[#allocation5 + $0x528] sm:$0xff]
        %v519 = vld [vmem:[#allocation5 + $0x530] sm:$0xff]
        %v520 = vld [vmem:[#allocation5 + $0x538] sm:$0xff]
        %v521 = vld [vmem:[#allocation5 + $0x540] sm:$0xff]
        %v522 = vld [vmem:[#allocation5 + $0x548] sm:$0xff]
        %v523 = vld [vmem:[#allocation5 + $0x550] sm:$0xff]
        %v524 = vld [vmem:[#allocation5 + $0x558] sm:$0xff]
        %v525 = vld [vmem:[#allocation5 + $0x560] sm:$0xff]
        %v526 = vld [vmem:[#allocation5 + $0x568] sm:$0xff]
        %v527 = vld [vmem:[#allocation5 + $0x570] sm:$0xff]
        %v528 = vld [vmem:[#allocation5 + $0x578] sm:$0xff]
        %v529 = vld [vmem:[#allocation5 + $0x580] sm:$0xff]
        %v530 = vld [vmem:[#allocation5 + $0x588] sm:$0xff]
        %v531 = vld [vmem:[#allocation5 + $0x590] sm:$0xff]
        %v532 = vld [vmem:[#allocation5 + $0x598] sm:$0xff]
        %v533 = vld [vmem:[#allocation5 + $0x5a0] sm:$0xff]
        %v534 = vld [vmem:[#allocation5 + $0x5a8] sm:$0xff]
        %v535 = vld [vmem:[#allocation5 + $0x5b0] sm:$0xff]
        %v536 = vld [vmem:[#allocation5 + $0x5b8] sm:$0xff]
        %v537 = vld [vmem:[#allocation5 + $0x5c0] sm:$0xff]
        %v538 = vld [vmem:[#allocation5 + $0x5c8] sm:$0xff]
        %v539 = vld [vmem:[#allocation5 + $0x5d0] sm:$0xff]
        %v540 = vld [vmem:[#allocation5 + $0x5d8] sm:$0xff]
        %v541 = vld [vmem:[#allocation5 + $0x5e0] sm:$0xff]
        %v542 = vld [vmem:[#allocation5 + $0x5e8] sm:$0xff]
        %v543 = vld [vmem:[#allocation5 + $0x5f0] sm:$0xff]
        %v544 = vld [vmem:[#allocation5 + $0x5f8] sm:$0xff]
        %v545 = vld [vmem:[#allocation5 + $0x600] sm:$0xff]
        %v546 = vld [vmem:[#allocation5 + $0x608] sm:$0xff]
        %v547 = vld [vmem:[#allocation5 + $0x610] sm:$0xff]
        %v548 = vld [vmem:[#allocation5 + $0x618] sm:$0xff]
        %v549 = vld [vmem:[#allocation5 + $0x620] sm:$0xff]
        %v550 = vld [vmem:[#allocation5 + $0x628] sm:$0xff]
        %v551 = vld [vmem:[#allocation5 + $0x630] sm:$0xff]
        %v552 = vld [vmem:[#allocation5 + $0x638] sm:$0xff]
        %v553 = vld [vmem:[#allocation5 + $0x640] sm:$0xff]
        %v554 = vld [vmem:[#allocation5 + $0x648] sm:$0xff]
        %v555 = vld [vmem:[#allocation5 + $0x650] sm:$0xff]
        %v556 = vld [vmem:[#allocation5 + $0x658] sm:$0xff]
        %v557 = vld [vmem:[#allocation5 + $0x660] sm:$0xff]
        %v558 = vld [vmem:[#allocation5 + $0x668] sm:$0xff]
        %v559 = vld [vmem:[#allocation5 + $0x670] sm:$0xff]
        %v560 = vld [vmem:[#allocation5 + $0x678] sm:$0xff]
        %v561 = vld [vmem:[#allocation5 + $0x680] sm:$0xff]
        %v562 = vld [vmem:[#allocation5 + $0x688] sm:$0xff]
        %v563 = vld [vmem:[#allocation5 + $0x690] sm:$0xff]
        %v564 = vld [vmem:[#allocation5 + $0x698] sm:$0xff]
        %v565 = vld [vmem:[#allocation5 + $0x6a0] sm:$0xff]
        %v566 = vld [vmem:[#allocation5 + $0x6a8] sm:$0xff]
        %v567 = vld [vmem:[#allocation5 + $0x6b0] sm:$0xff]
        %v568 = vld [vmem:[#allocation5 + $0x6b8] sm:$0xff]
        %v569 = vld [vmem:[#allocation5 + $0x6c0] sm:$0xff]
        %v570 = vld [vmem:[#allocation5 + $0x6c8] sm:$0xff]
        %v571 = vld [vmem:[#allocation5 + $0x6d0] sm:$0xff]
        %v572 = vld [vmem:[#allocation5 + $0x6d8] sm:$0xff]
        %v573 = vld [vmem:[#allocation5 + $0x6e0] sm:$0xff]
        %v574 = vld [vmem:[#allocation5 + $0x6e8] sm:$0xff]
        %v575 = vld [vmem:[#allocation5 + $0x6f0] sm:$0xff]
        %v576 = vld [vmem:[#allocation5 + $0x6f8] sm:$0xff]
        %v577 = vld [vmem:[#allocation5 + $0x700] sm:$0xff]
        %v578 = vld [vmem:[#allocation5 + $0x708] sm:$0xff]
        %v579 = vld [vmem:[#allocation5 + $0x710] sm:$0xff]
        %v580 = vld [vmem:[#allocation5 + $0x718] sm:$0xff]
        %v581 = vld [vmem:[#allocation5 + $0x720] sm:$0xff]
        %v582 = vld [vmem:[#allocation5 + $0x728] sm:$0xff]
        %v583 = vld [vmem:[#allocation5 + $0x730] sm:$0xff]
        %v584 = vld [vmem:[#allocation5 + $0x738] sm:$0xff]
        %v585 = vld [vmem:[#allocation5 + $0x740] sm:$0xff]
        %v586 = vld [vmem:[#allocation5 + $0x748] sm:$0xff]
        %v587 = vld [vmem:[#allocation5 + $0x750] sm:$0xff]
        %v588 = vld [vmem:[#allocation5 + $0x758] sm:$0xff]
        %v589 = vld [vmem:[#allocation5 + $0x760] sm:$0xff]
        %v590 = vld [vmem:[#allocation5 + $0x768] sm:$0xff]
        %v591 = vld [vmem:[#allocation5 + $0x770] sm:$0xff]
        %v592 = vld [vmem:[#allocation5 + $0x778] sm:$0xff]
        %v593 = vld [vmem:[#allocation5 + $0x780] sm:$0xff]
        %v594 = vld [vmem:[#allocation5 + $0x788] sm:$0xff]
        %v595 = vld [vmem:[#allocation5 + $0x790] sm:$0xff]
        %v596 = vld [vmem:[#allocation5 + $0x798] sm:$0xff]
        %v597 = vld [vmem:[#allocation5 + $0x7a0] sm:$0xff]
        %v598 = vld [vmem:[#allocation5 + $0x7a8] sm:$0xff]
        %v599 = vld [vmem:[#allocation5 + $0x7b0] sm:$0xff]
        %v600 = vld [vmem:[#allocation5 + $0x7b8] sm:$0xff]
        %v601 = vld [vmem:[#allocation5 + $0x7c0] sm:$0xff]
        %v602 = vld [vmem:[#allocation5 + $0x7c8] sm:$0xff]
        %v603 = vld [vmem:[#allocation5 + $0x7d0] sm:$0xff]
        %v604 = vld [vmem:[#allocation5 + $0x7d8] sm:$0xff]
        %v605 = vld [vmem:[#allocation5 + $0x7e0] sm:$0xff]
        %v606 = vld [vmem:[#allocation5 + $0x7e8] sm:$0xff]
        %v607 = vld [vmem:[#allocation5 + $0x7f0] sm:$0xff]
        %v608 = vld [vmem:[#allocation5 + $0x7f8] sm:$0xff]
        %v609 = vld [vmem:[#allocation7] sm:$0xf]
        %v611 = vlaneseq
        %v612 = vshrl.u32 %v611, 7
        %v613 = vsub.s32 0, %v612
        %v614 = vrot.slane %v609, %v613
        %v615 = vlaneseq
        %v616 = vshrl.u32 %v615, 7
        %v617 = vsub.s32 1, %v616
        %v618 = vrot.slane %v609, %v617
        %v619 = vlaneseq
        %v620 = vshrl.u32 %v619, 7
        %v621 = vsub.s32 2, %v620
        %v622 = vrot.slane %v609, %v621
        %v623 = vlaneseq
        %v624 = vshrl.u32 %v623, 7
        %v625 = vsub.s32 3, %v624
        %v626 = vrot.slane %v609, %v625
        %631 = vmatprep.subr.mxu0 %v354
        %632 = vmatpush1.msra.mxu0 %v353
        %633 = vmatprep.subr.mxu0 %v358
        %634 = vmatpush1.msra.mxu0 %v357
        %635 = vmatprep.subr.mxu0 %v362
        %636 = vmatpush1.msra.mxu0 %v361
        %637 = vmatprep.subr.mxu0 %v366
        %638 = vmatpush1.msra.mxu0 %v365
        %639 = vmatprep.subr.mxu0 %v370
        %640 = vmatpush1.msra.mxu0 %v369
        %641 = vmatprep.subr.mxu0 %v374
        %642 = vmatpush1.msra.mxu0 %v373
        %643 = vmatprep.subr.mxu0 %v378
        %644 = vmatpush1.msra.mxu0 %v377
        %645 = vmatprep.subr.mxu0 %v382
        %646 = vmatpush1.msra.mxu0 %v381
        %647 = vmatprep.subr.mxu0 %v386
        %648 = vmatpush1.msra.mxu0 %v385
        %649 = vmatprep.subr.mxu0 %v390
        %650 = vmatpush1.msra.mxu0 %v389
        %651 = vmatprep.subr.mxu0 %v394
        %652 = vmatpush1.msra.mxu0 %v393
        %653 = vmatprep.subr.mxu0 %v398
        %654 = vmatpush1.msra.mxu0 %v397
        %655 = vmatprep.subr.mxu0 %v402
        %656 = vmatpush1.msra.mxu0 %v401
        %657 = vmatprep.subr.mxu0 %v406
        %658 = vmatpush1.msra.mxu0 %v405
        %659 = vmatprep.subr.mxu0 %v410
        %660 = vmatpush1.msra.mxu0 %v409
        %661 = vmatprep.subr.mxu0 %v414
        %662 = vmatpush1.msra.mxu0 %v413
        %663 = vmatprep.subr.mxu0 %v418
        %664 = vmatpush1.msra.mxu0 %v417
        %665 = vmatprep.subr.mxu0 %v422
        %666 = vmatpush1.msra.mxu0 %v421
        %667 = vmatprep.subr.mxu0 %v426
        %668 = vmatpush1.msra.mxu0 %v425
        %669 = vmatprep.subr.mxu0 %v430
        %670 = vmatpush1.msra.mxu0 %v429
        %671 = vmatprep.subr.mxu0 %v434
        %672 = vmatpush1.msra.mxu0 %v433
        %673 = vmatprep.subr.mxu0 %v438
        %674 = vmatpush1.msra.mxu0 %v437
        %675 = vmatprep.subr.mxu0 %v442
        %676 = vmatpush1.msra.mxu0 %v441
        %677 = vmatprep.subr.mxu0 %v446
        %678 = vmatpush1.msra.mxu0 %v445
        %679 = vmatprep.subr.mxu0 %v450
        %680 = vmatpush1.msra.mxu0 %v449
        %681 = vmatprep.subr.mxu0 %v454
        %682 = vmatpush1.msra.mxu0 %v453
        %683 = vmatprep.subr.mxu0 %v458
        %684 = vmatpush1.msra.mxu0 %v457
        %685 = vmatprep.subr.mxu0 %v462
        %686 = vmatpush1.msra.mxu0 %v461
        %687 = vmatprep.subr.mxu0 %v466
        %688 = vmatpush1.msra.mxu0 %v465
        %689 = vmatprep.subr.mxu0 %v470
        %690 = vmatpush1.msra.mxu0 %v469
        %691 = vmatprep.subr.mxu0 %v474
        %692 = vmatpush1.msra.mxu0 %v473
        %693 = vmatprep.subr.mxu0 %v478
        %694 = vmatpush1.msra.mxu0 %v477
        %695 = vmatprep.mubr.f32.mxu0 %v350
        %696 = vmatmul.mubr.f32.gmra.mrb[0].mxu0 %v349
        %v697 = vpop.f32.mrb[0].mxu0
        %v698 = vadd.f32 %v614, %v697
        %v699 = vpop.f32.mrb[0].mxu0
        %v700 = vadd.f32 %v618, %v699
        %701 = vdwg.mxu0
        %702 = vmatprep.subr.mxu0 %v482
        %703 = vmatpush1.msra.mxu0 %v481
        %704 = vmatprep.subr.mxu0 %v486
        %705 = vmatpush1.msra.mxu0 %v485
        %706 = vmatprep.subr.mxu0 %v490
        %707 = vmatpush1.msra.mxu0 %v489
        %708 = vmatprep.subr.mxu0 %v494
        %709 = vmatpush1.msra.mxu0 %v493
        %710 = vmatprep.subr.mxu0 %v498
        %711 = vmatpush1.msra.mxu0 %v497
        %712 = vmatprep.subr.mxu0 %v502
        %713 = vmatpush1.msra.mxu0 %v501
        %714 = vmatprep.subr.mxu0 %v506
        %715 = vmatpush1.msra.mxu0 %v505
        %716 = vmatprep.subr.mxu0 %v510
        %717 = vmatpush1.msra.mxu0 %v509
        %718 = vmatprep.subr.mxu0 %v514
        %719 = vmatpush1.msra.mxu0 %v513
        %720 = vmatprep.subr.mxu0 %v518
        %721 = vmatpush1.msra.mxu0 %v517
        %722 = vmatprep.subr.mxu0 %v522
        %723 = vmatpush1.msra.mxu0 %v521
        %724 = vmatprep.subr.mxu0 %v526
        %725 = vmatpush1.msra.mxu0 %v525
        %726 = vmatprep.subr.mxu0 %v530
        %727 = vmatpush1.msra.mxu0 %v529
        %728 = vmatprep.subr.mxu0 %v534
        %729 = vmatpush1.msra.mxu0 %v533
        %730 = vmatprep.subr.mxu0 %v538
        %731 = vmatpush1.msra.mxu0 %v537
        %732 = vmatprep.subr.mxu0 %v542
        %733 = vmatpush1.msra.mxu0 %v541
        %734 = vmatprep.subr.mxu0 %v546
        %735 = vmatpush1.msra.mxu0 %v545
        %736 = vmatprep.subr.mxu0 %v550
        %737 = vmatpush1.msra.mxu0 %v549
        %738 = vmatprep.subr.mxu0 %v554
        %739 = vmatpush1.msra.mxu0 %v553
        %740 = vmatprep.subr.mxu0 %v558
        %741 = vmatpush1.msra.mxu0 %v557
        %742 = vmatprep.subr.mxu0 %v562
        %743 = vmatpush1.msra.mxu0 %v561
        %744 = vmatprep.subr.mxu0 %v566
        %745 = vmatpush1.msra.mxu0 %v565
        %746 = vmatprep.subr.mxu0 %v570
        %747 = vmatpush1.msra.mxu0 %v569
        %748 = vmatprep.subr.mxu0 %v574
        %749 = vmatpush1.msra.mxu0 %v573
        %750 = vmatprep.subr.mxu0 %v578
        %751 = vmatpush1.msra.mxu0 %v577
        %752 = vmatprep.subr.mxu0 %v582
        %753 = vmatpush1.msra.mxu0 %v581
        %754 = vmatprep.subr.mxu0 %v586
        %755 = vmatpush1.msra.mxu0 %v585
        %756 = vmatprep.subr.mxu0 %v590
        %757 = vmatpush1.msra.mxu0 %v589
        %758 = vmatprep.subr.mxu0 %v594
        %759 = vmatpush1.msra.mxu0 %v593
        %760 = vmatprep.subr.mxu0 %v598
        %761 = vmatpush1.msra.mxu0 %v597
        %762 = vmatprep.subr.mxu0 %v602
        %763 = vmatpush1.msra.mxu0 %v601
        %764 = vmatprep.subr.mxu0 %v606
        %765 = vmatpush1.msra.mxu0 %v605
        %766 = vmatprep.mubr.f32.mxu0 %v352
        %767 = vmatmul.mubr.f32.gmra.mrb[0].mxu0 %v351
        %v768 = vpop.f32.mrb[0].mxu0
        %v769 = vadd.f32 %v698, %v768
        %v770 = vpop.f32.mrb[0].mxu0
        %v771 = vadd.f32 %v700, %v770
        %772 = vdwg.mxu0
        %773 = vmatprep.subr.mxu0 %v356
        %774 = vmatpush1.msra.mxu0 %v355
        %775 = vmatprep.subr.mxu0 %v360
        %776 = vmatpush1.msra.mxu0 %v359
        %777 = vmatprep.subr.mxu0 %v364
        %778 = vmatpush1.msra.mxu0 %v363
        %779 = vmatprep.subr.mxu0 %v368
        %780 = vmatpush1.msra.mxu0 %v367
        %781 = vmatprep.subr.mxu0 %v372
        %782 = vmatpush1.msra.mxu0 %v371
        %783 = vmatprep.subr.mxu0 %v376
        %784 = vmatpush1.msra.mxu0 %v375
        %785 = vmatprep.subr.mxu0 %v380
        %786 = vmatpush1.msra.mxu0 %v379
        %787 = vmatprep.subr.mxu0 %v384
        %788 = vmatpush1.msra.mxu0 %v383
        %789 = vmatprep.subr.mxu0 %v388
        %790 = vmatpush1.msra.mxu0 %v387
        %791 = vmatprep.subr.mxu0 %v392
        %792 = vmatpush1.msra.mxu0 %v391
        %793 = vmatprep.subr.mxu0 %v396
        %794 = vmatpush1.msra.mxu0 %v395
        %795 = vmatprep.subr.mxu0 %v400
        %796 = vmatpush1.msra.mxu0 %v399
        %797 = vmatprep.subr.mxu0 %v404
        %798 = vmatpush1.msra.mxu0 %v403
        %799 = vmatprep.subr.mxu0 %v408
        %800 = vmatpush1.msra.mxu0 %v407
        %801 = vmatprep.subr.mxu0 %v412
        %802 = vmatpush1.msra.mxu0 %v411
        %803 = vmatprep.subr.mxu0 %v416
        %804 = vmatpush1.msra.mxu0 %v415
        %805 = vmatprep.subr.mxu0 %v420
        %806 = vmatpush1.msra.mxu0 %v419
        %807 = vmatprep.subr.mxu0 %v424
        %808 = vmatpush1.msra.mxu0 %v423
        %809 = vmatprep.subr.mxu0 %v428
        %810 = vmatpush1.msra.mxu0 %v427
        %811 = vmatprep.subr.mxu0 %v432
        %812 = vmatpush1.msra.mxu0 %v431
        %813 = vmatprep.subr.mxu0 %v436
        %814 = vmatpush1.msra.mxu0 %v435
        %815 = vmatprep.subr.mxu0 %v440
        %816 = vmatpush1.msra.mxu0 %v439
        %817 = vmatprep.subr.mxu0 %v444
        %818 = vmatpush1.msra.mxu0 %v443
        %819 = vmatprep.subr.mxu0 %v448
        %820 = vmatpush1.msra.mxu0 %v447
        %821 = vmatprep.subr.mxu0 %v452
        %822 = vmatpush1.msra.mxu0 %v451
        %823 = vmatprep.subr.mxu0 %v456
        %824 = vmatpush1.msra.mxu0 %v455
        %825 = vmatprep.subr.mxu0 %v460
        %826 = vmatpush1.msra.mxu0 %v459
        %827 = vmatprep.subr.mxu0 %v464
        %828 = vmatpush1.msra.mxu0 %v463
        %829 = vmatprep.subr.mxu0 %v468
        %830 = vmatpush1.msra.mxu0 %v467
        %831 = vmatprep.subr.mxu0 %v472
        %832 = vmatpush1.msra.mxu0 %v471
        %833 = vmatprep.subr.mxu0 %v476
        %834 = vmatpush1.msra.mxu0 %v475
        %835 = vmatprep.subr.mxu0 %v480
        %836 = vmatpush1.msra.mxu0 %v479
        %837 = vmatprep.mubr.f32.mxu0 %v350
        %838 = vmatmul.mubr.f32.gmra.mrb[0].mxu0 %v349
        %v839 = vpop.f32.mrb[0].mxu0
        %v840 = vadd.f32 %v622, %v839
        %v841 = vpop.f32.mrb[0].mxu0
        %v842 = vadd.f32 %v626, %v841
        %843 = vdwg.mxu0
        %844 = vmatprep.subr.mxu0 %v484
        %845 = vmatpush1.msra.mxu0 %v483
        %846 = vmatprep.subr.mxu0 %v488
        %847 = vmatpush1.msra.mxu0 %v487
        %848 = vmatprep.subr.mxu0 %v492
        %849 = vmatpush1.msra.mxu0 %v491
        %850 = vmatprep.subr.mxu0 %v496
        %851 = vmatpush1.msra.mxu0 %v495
        %852 = vmatprep.subr.mxu0 %v500
        %853 = vmatpush1.msra.mxu0 %v499
        %854 = vmatprep.subr.mxu0 %v504
        %855 = vmatpush1.msra.mxu0 %v503
        %856 = vmatprep.subr.mxu0 %v508
        %857 = vmatpush1.msra.mxu0 %v507
        %858 = vmatprep.subr.mxu0 %v512
        %859 = vmatpush1.msra.mxu0 %v511
        %860 = vmatprep.subr.mxu0 %v516
        %861 = vmatpush1.msra.mxu0 %v515
        %862 = vmatprep.subr.mxu0 %v520
        %863 = vmatpush1.msra.mxu0 %v519
        %864 = vmatprep.subr.mxu0 %v524
        %865 = vmatpush1.msra.mxu0 %v523
        %866 = vmatprep.subr.mxu0 %v528
        %867 = vmatpush1.msra.mxu0 %v527
        %868 = vmatprep.subr.mxu0 %v532
        %869 = vmatpush1.msra.mxu0 %v531
        %870 = vmatprep.subr.mxu0 %v536
        %871 = vmatpush1.msra.mxu0 %v535
        %872 = vmatprep.subr.mxu0 %v540
        %873 = vmatpush1.msra.mxu0 %v539
        %874 = vmatprep.subr.mxu0 %v544
        %875 = vmatpush1.msra.mxu0 %v543
        %876 = vmatprep.subr.mxu0 %v548
        %877 = vmatpush1.msra.mxu0 %v547
        %878 = vmatprep.subr.mxu0 %v552
        %879 = vmatpush1.msra.mxu0 %v551
        %880 = vmatprep.subr.mxu0 %v556
        %881 = vmatpush1.msra.mxu0 %v555
        %882 = vmatprep.subr.mxu0 %v560
        %883 = vmatpush1.msra.mxu0 %v559
        %884 = vmatprep.subr.mxu0 %v564
        %885 = vmatpush1.msra.mxu0 %v563
        %886 = vmatprep.subr.mxu0 %v568
        %887 = vmatpush1.msra.mxu0 %v567
        %888 = vmatprep.subr.mxu0 %v572
        %889 = vmatpush1.msra.mxu0 %v571
        %890 = vmatprep.subr.mxu0 %v576
        %891 = vmatpush1.msra.mxu0 %v575
        %892 = vmatprep.subr.mxu0 %v580
        %893 = vmatpush1.msra.mxu0 %v579
        %894 = vmatprep.subr.mxu0 %v584
        %895 = vmatpush1.msra.mxu0 %v583
        %896 = vmatprep.subr.mxu0 %v588
        %897 = vmatpush1.msra.mxu0 %v587
        %898 = vmatprep.subr.mxu0 %v592
        %899 = vmatpush1.msra.mxu0 %v591
        %900 = vmatprep.subr.mxu0 %v596
        %901 = vmatpush1.msra.mxu0 %v595
        %902 = vmatprep.subr.mxu0 %v600
        %903 = vmatpush1.msra.mxu0 %v599
        %904 = vmatprep.subr.mxu0 %v604
        %905 = vmatpush1.msra.mxu0 %v603
        %906 = vmatprep.subr.mxu0 %v608
        %907 = vmatpush1.msra.mxu0 %v607
        %908 = vmatprep.mubr.f32.mxu0 %v352
        %909 = vmatmul.mubr.f32.gmra.mrb[0].mxu0 %v351
        %v910 = vpop.f32.mrb[0].mxu0
        %v911 = vadd.f32 %v840, %v910
        %v912 = vpop.f32.mrb[0].mxu0
        %v913 = vadd.f32 %v842, %v912
        %914 = vdwg.mxu0
        %v915 = vmul.f32 %v769, %v769
        %v916 = vmul.f32 %v771, %v771
        %v917 = vmul.f32 %v911, %v911
        %v918 = vmul.f32 %v913, %v913
        %v919 = vadd.f32 %v915, %v916
        %v920 = vadd.f32 %v919, %v917
        %v921 = vadd.f32 %v920, %v918
        %922 = vadd.xlane.f32.xlu0 %v921
        %v923 = vpop.xlane.xlu0 %922
        %v924 = vmax.f32 %v923, 1e-16
        %v925 = vrsqrt.pop %v924
        %v926 = vmul.f32 %v769, %v925
        %v927 = vmul.f32 %v771, %v925
        %v928 = vmul.f32 %v911, %v925
        %v929 = vmul.f32 %v913, %v925
        %930 = vst [vmem:[#allocation11] sm:$0xff] %v926
        %931 = vst [vmem:[#allocation11 + $0x8] sm:$0xff] %v927
        %932 = vst [vmem:[#allocation11 + $0x10] sm:$0xff] %v928
        %933 = vst [vmem:[#allocation11 + $0x18] sm:$0xff] %v929
        %v934 = vmax.f32 %v769, 0.0
        %v935 = vmax.f32 %v771, 0.0
        %v936 = vmax.f32 %v911, 0.0
        %v937 = vmax.f32 %v913, 0.0
        %v938 = vpack.c.bf16 %v934, %v934
        %v939 = vpack.c.bf16 %v935, %v935
        %v940 = vpack.c.bf16 %v936, %v936
        %v941 = vpack.c.bf16 %v937, %v937
        %v942 = vld [vmem:[%s298] sm:$0xff]
        %v943 = vld [vmem:[%s298 + $0x8] sm:$0xff]
        %v944 = vld [vmem:[%s298 + $0x10] sm:$0xff]
        %v945 = vld [vmem:[%s298 + $0x18] sm:$0xff]
        %v946 = vld [vmem:[%s298 + $0x20] sm:$0xff]
        %v947 = vld [vmem:[%s298 + $0x28] sm:$0xff]
        %v948 = vld [vmem:[%s298 + $0x30] sm:$0xff]
        %v949 = vld [vmem:[%s298 + $0x38] sm:$0xff]
        %v950 = vld [vmem:[%s298 + $0x40] sm:$0xff]
        %v951 = vld [vmem:[%s298 + $0x48] sm:$0xff]
        %v952 = vld [vmem:[%s298 + $0x50] sm:$0xff]
        %v953 = vld [vmem:[%s298 + $0x58] sm:$0xff]
        %v954 = vld [vmem:[%s298 + $0x60] sm:$0xff]
        %v955 = vld [vmem:[%s298 + $0x68] sm:$0xff]
        %v956 = vld [vmem:[%s298 + $0x70] sm:$0xff]
        %v957 = vld [vmem:[%s298 + $0x78] sm:$0xff]
        %v958 = vld [vmem:[%s298 + $0x80] sm:$0xff]
        %v959 = vld [vmem:[%s298 + $0x88] sm:$0xff]
        %v960 = vld [vmem:[%s298 + $0x90] sm:$0xff]
        %v961 = vld [vmem:[%s298 + $0x98] sm:$0xff]
        %v962 = vld [vmem:[%s298 + $0xa0] sm:$0xff]
        %v963 = vld [vmem:[%s298 + $0xa8] sm:$0xff]
        %v964 = vld [vmem:[%s298 + $0xb0] sm:$0xff]
        %v965 = vld [vmem:[%s298 + $0xb8] sm:$0xff]
        %v966 = vld [vmem:[%s298 + $0xc0] sm:$0xff]
        %v967 = vld [vmem:[%s298 + $0xc8] sm:$0xff]
        %v968 = vld [vmem:[%s298 + $0xd0] sm:$0xff]
        %v969 = vld [vmem:[%s298 + $0xd8] sm:$0xff]
        %v970 = vld [vmem:[%s298 + $0xe0] sm:$0xff]
        %v971 = vld [vmem:[%s298 + $0xe8] sm:$0xff]
        %v972 = vld [vmem:[%s298 + $0xf0] sm:$0xff]
        %v973 = vld [vmem:[%s298 + $0xf8] sm:$0xff]
        %v974 = vld [vmem:[%s298 + $0x100] sm:$0xff]
        %v975 = vld [vmem:[%s298 + $0x108] sm:$0xff]
        %v976 = vld [vmem:[%s298 + $0x110] sm:$0xff]
        %v977 = vld [vmem:[%s298 + $0x118] sm:$0xff]
        %v978 = vld [vmem:[%s298 + $0x120] sm:$0xff]
        %v979 = vld [vmem:[%s298 + $0x128] sm:$0xff]
        %v980 = vld [vmem:[%s298 + $0x130] sm:$0xff]
        %v981 = vld [vmem:[%s298 + $0x138] sm:$0xff]
        %v982 = vld [vmem:[%s298 + $0x140] sm:$0xff]
        %v983 = vld [vmem:[%s298 + $0x148] sm:$0xff]
        %v984 = vld [vmem:[%s298 + $0x150] sm:$0xff]
        %v985 = vld [vmem:[%s298 + $0x158] sm:$0xff]
        %v986 = vld [vmem:[%s298 + $0x160] sm:$0xff]
        %v987 = vld [vmem:[%s298 + $0x168] sm:$0xff]
        %v988 = vld [vmem:[%s298 + $0x170] sm:$0xff]
        %v989 = vld [vmem:[%s298 + $0x178] sm:$0xff]
        %v990 = vld [vmem:[%s298 + $0x180] sm:$0xff]
        %v991 = vld [vmem:[%s298 + $0x188] sm:$0xff]
        %v992 = vld [vmem:[%s298 + $0x190] sm:$0xff]
        %v993 = vld [vmem:[%s298 + $0x198] sm:$0xff]
        %v994 = vld [vmem:[%s298 + $0x1a0] sm:$0xff]
        %v995 = vld [vmem:[%s298 + $0x1a8] sm:$0xff]
        %v996 = vld [vmem:[%s298 + $0x1b0] sm:$0xff]
        %v997 = vld [vmem:[%s298 + $0x1b8] sm:$0xff]
        %v998 = vld [vmem:[%s298 + $0x1c0] sm:$0xff]
        %v999 = vld [vmem:[%s298 + $0x1c8] sm:$0xff]
        %v1000 = vld [vmem:[%s298 + $0x1d0] sm:$0xff]
        %v1001 = vld [vmem:[%s298 + $0x1d8] sm:$0xff]
        %v1002 = vld [vmem:[%s298 + $0x1e0] sm:$0xff]
        %v1003 = vld [vmem:[%s298 + $0x1e8] sm:$0xff]
        %v1004 = vld [vmem:[%s298 + $0x1f0] sm:$0xff]
        %v1005 = vld [vmem:[%s298 + $0x1f8] sm:$0xff]
        %v1006 = vld [vmem:[%s298 + $0x200] sm:$0xff]
        %v1007 = vld [vmem:[%s298 + $0x208] sm:$0xff]
        %v1008 = vld [vmem:[%s298 + $0x210] sm:$0xff]
        %v1009 = vld [vmem:[%s298 + $0x218] sm:$0xff]
        %v1010 = vld [vmem:[%s298 + $0x220] sm:$0xff]
        %v1011 = vld [vmem:[%s298 + $0x228] sm:$0xff]
        %v1012 = vld [vmem:[%s298 + $0x230] sm:$0xff]
        %v1013 = vld [vmem:[%s298 + $0x238] sm:$0xff]
        %v1014 = vld [vmem:[%s298 + $0x240] sm:$0xff]
        %v1015 = vld [vmem:[%s298 + $0x248] sm:$0xff]
        %v1016 = vld [vmem:[%s298 + $0x250] sm:$0xff]
        %v1017 = vld [vmem:[%s298 + $0x258] sm:$0xff]
        %v1018 = vld [vmem:[%s298 + $0x260] sm:$0xff]
        %v1019 = vld [vmem:[%s298 + $0x268] sm:$0xff]
        %v1020 = vld [vmem:[%s298 + $0x270] sm:$0xff]
        %v1021 = vld [vmem:[%s298 + $0x278] sm:$0xff]
        %v1022 = vld [vmem:[%s298 + $0x280] sm:$0xff]
        %v1023 = vld [vmem:[%s298 + $0x288] sm:$0xff]
        %v1024 = vld [vmem:[%s298 + $0x290] sm:$0xff]
        %v1025 = vld [vmem:[%s298 + $0x298] sm:$0xff]
        %v1026 = vld [vmem:[%s298 + $0x2a0] sm:$0xff]
        %v1027 = vld [vmem:[%s298 + $0x2a8] sm:$0xff]
        %v1028 = vld [vmem:[%s298 + $0x2b0] sm:$0xff]
        %v1029 = vld [vmem:[%s298 + $0x2b8] sm:$0xff]
        %v1030 = vld [vmem:[%s298 + $0x2c0] sm:$0xff]
        %v1031 = vld [vmem:[%s298 + $0x2c8] sm:$0xff]
        %v1032 = vld [vmem:[%s298 + $0x2d0] sm:$0xff]
        %v1033 = vld [vmem:[%s298 + $0x2d8] sm:$0xff]
        %v1034 = vld [vmem:[%s298 + $0x2e0] sm:$0xff]
        %v1035 = vld [vmem:[%s298 + $0x2e8] sm:$0xff]
        %v1036 = vld [vmem:[%s298 + $0x2f0] sm:$0xff]
        %v1037 = vld [vmem:[%s298 + $0x2f8] sm:$0xff]
        %v1038 = vld [vmem:[%s298 + $0x300] sm:$0xff]
        %v1039 = vld [vmem:[%s298 + $0x308] sm:$0xff]
        %v1040 = vld [vmem:[%s298 + $0x310] sm:$0xff]
        %v1041 = vld [vmem:[%s298 + $0x318] sm:$0xff]
        %v1042 = vld [vmem:[%s298 + $0x320] sm:$0xff]
        %v1043 = vld [vmem:[%s298 + $0x328] sm:$0xff]
        %v1044 = vld [vmem:[%s298 + $0x330] sm:$0xff]
        %v1045 = vld [vmem:[%s298 + $0x338] sm:$0xff]
        %v1046 = vld [vmem:[%s298 + $0x340] sm:$0xff]
        %v1047 = vld [vmem:[%s298 + $0x348] sm:$0xff]
        %v1048 = vld [vmem:[%s298 + $0x350] sm:$0xff]
        %v1049 = vld [vmem:[%s298 + $0x358] sm:$0xff]
        %v1050 = vld [vmem:[%s298 + $0x360] sm:$0xff]
        %v1051 = vld [vmem:[%s298 + $0x368] sm:$0xff]
        %v1052 = vld [vmem:[%s298 + $0x370] sm:$0xff]
        %v1053 = vld [vmem:[%s298 + $0x378] sm:$0xff]
        %v1054 = vld [vmem:[%s298 + $0x380] sm:$0xff]
        %v1055 = vld [vmem:[%s298 + $0x388] sm:$0xff]
        %v1056 = vld [vmem:[%s298 + $0x390] sm:$0xff]
        %v1057 = vld [vmem:[%s298 + $0x398] sm:$0xff]
        %v1058 = vld [vmem:[%s298 + $0x3a0] sm:$0xff]
        %v1059 = vld [vmem:[%s298 + $0x3a8] sm:$0xff]
        %v1060 = vld [vmem:[%s298 + $0x3b0] sm:$0xff]
        %v1061 = vld [vmem:[%s298 + $0x3b8] sm:$0xff]
        %v1062 = vld [vmem:[%s298 + $0x3c0] sm:$0xff]
        %v1063 = vld [vmem:[%s298 + $0x3c8] sm:$0xff]
        %v1064 = vld [vmem:[%s298 + $0x3d0] sm:$0xff]
        %v1065 = vld [vmem:[%s298 + $0x3d8] sm:$0xff]
        %v1066 = vld [vmem:[%s298 + $0x3e0] sm:$0xff]
        %v1067 = vld [vmem:[%s298 + $0x3e8] sm:$0xff]
        %v1068 = vld [vmem:[%s298 + $0x3f0] sm:$0xff]
        %v1069 = vld [vmem:[%s298 + $0x3f8] sm:$0xff]
        %v1070 = vld [vmem:[%s298 + $0x400] sm:$0xff]
        %v1071 = vld [vmem:[%s298 + $0x408] sm:$0xff]
        %v1072 = vld [vmem:[%s298 + $0x410] sm:$0xff]
        %v1073 = vld [vmem:[%s298 + $0x418] sm:$0xff]
        %v1074 = vld [vmem:[%s298 + $0x420] sm:$0xff]
        %v1075 = vld [vmem:[%s298 + $0x428] sm:$0xff]
        %v1076 = vld [vmem:[%s298 + $0x430] sm:$0xff]
        %v1077 = vld [vmem:[%s298 + $0x438] sm:$0xff]
        %v1078 = vld [vmem:[%s298 + $0x440] sm:$0xff]
        %v1079 = vld [vmem:[%s298 + $0x448] sm:$0xff]
        %v1080 = vld [vmem:[%s298 + $0x450] sm:$0xff]
        %v1081 = vld [vmem:[%s298 + $0x458] sm:$0xff]
        %v1082 = vld [vmem:[%s298 + $0x460] sm:$0xff]
        %v1083 = vld [vmem:[%s298 + $0x468] sm:$0xff]
        %v1084 = vld [vmem:[%s298 + $0x470] sm:$0xff]
        %v1085 = vld [vmem:[%s298 + $0x478] sm:$0xff]
        %v1086 = vld [vmem:[%s298 + $0x480] sm:$0xff]
        %v1087 = vld [vmem:[%s298 + $0x488] sm:$0xff]
        %v1088 = vld [vmem:[%s298 + $0x490] sm:$0xff]
        %v1089 = vld [vmem:[%s298 + $0x498] sm:$0xff]
        %v1090 = vld [vmem:[%s298 + $0x4a0] sm:$0xff]
        %v1091 = vld [vmem:[%s298 + $0x4a8] sm:$0xff]
        %v1092 = vld [vmem:[%s298 + $0x4b0] sm:$0xff]
        %v1093 = vld [vmem:[%s298 + $0x4b8] sm:$0xff]
        %v1094 = vld [vmem:[%s298 + $0x4c0] sm:$0xff]
        %v1095 = vld [vmem:[%s298 + $0x4c8] sm:$0xff]
        %v1096 = vld [vmem:[%s298 + $0x4d0] sm:$0xff]
        %v1097 = vld [vmem:[%s298 + $0x4d8] sm:$0xff]
        %v1098 = vld [vmem:[%s298 + $0x4e0] sm:$0xff]
        %v1099 = vld [vmem:[%s298 + $0x4e8] sm:$0xff]
        %v1100 = vld [vmem:[%s298 + $0x4f0] sm:$0xff]
        %v1101 = vld [vmem:[%s298 + $0x4f8] sm:$0xff]
        %v1102 = vld [vmem:[%s298 + $0x500] sm:$0xff]
        %v1103 = vld [vmem:[%s298 + $0x508] sm:$0xff]
        %v1104 = vld [vmem:[%s298 + $0x510] sm:$0xff]
        %v1105 = vld [vmem:[%s298 + $0x518] sm:$0xff]
        %v1106 = vld [vmem:[%s298 + $0x520] sm:$0xff]
        %v1107 = vld [vmem:[%s298 + $0x528] sm:$0xff]
        %v1108 = vld [vmem:[%s298 + $0x530] sm:$0xff]
        %v1109 = vld [vmem:[%s298 + $0x538] sm:$0xff]
        %v1110 = vld [vmem:[%s298 + $0x540] sm:$0xff]
        %v1111 = vld [vmem:[%s298 + $0x548] sm:$0xff]
        %v1112 = vld [vmem:[%s298 + $0x550] sm:$0xff]
        %v1113 = vld [vmem:[%s298 + $0x558] sm:$0xff]
        %v1114 = vld [vmem:[%s298 + $0x560] sm:$0xff]
        %v1115 = vld [vmem:[%s298 + $0x568] sm:$0xff]
        %v1116 = vld [vmem:[%s298 + $0x570] sm:$0xff]
        %v1117 = vld [vmem:[%s298 + $0x578] sm:$0xff]
        %v1118 = vld [vmem:[%s298 + $0x580] sm:$0xff]
        %v1119 = vld [vmem:[%s298 + $0x588] sm:$0xff]
        %v1120 = vld [vmem:[%s298 + $0x590] sm:$0xff]
        %v1121 = vld [vmem:[%s298 + $0x598] sm:$0xff]
        %v1122 = vld [vmem:[%s298 + $0x5a0] sm:$0xff]
        %v1123 = vld [vmem:[%s298 + $0x5a8] sm:$0xff]
        %v1124 = vld [vmem:[%s298 + $0x5b0] sm:$0xff]
        %v1125 = vld [vmem:[%s298 + $0x5b8] sm:$0xff]
        %v1126 = vld [vmem:[%s298 + $0x5c0] sm:$0xff]
        %v1127 = vld [vmem:[%s298 + $0x5c8] sm:$0xff]
        %v1128 = vld [vmem:[%s298 + $0x5d0] sm:$0xff]
        %v1129 = vld [vmem:[%s298 + $0x5d8] sm:$0xff]
        %v1130 = vld [vmem:[%s298 + $0x5e0] sm:$0xff]
        %v1131 = vld [vmem:[%s298 + $0x5e8] sm:$0xff]
        %v1132 = vld [vmem:[%s298 + $0x5f0] sm:$0xff]
        %v1133 = vld [vmem:[%s298 + $0x5f8] sm:$0xff]
        %v1134 = vld [vmem:[%s298 + $0x600] sm:$0xff]
        %v1135 = vld [vmem:[%s298 + $0x608] sm:$0xff]
        %v1136 = vld [vmem:[%s298 + $0x610] sm:$0xff]
        %v1137 = vld [vmem:[%s298 + $0x618] sm:$0xff]
        %v1138 = vld [vmem:[%s298 + $0x620] sm:$0xff]
        %v1139 = vld [vmem:[%s298 + $0x628] sm:$0xff]
        %v1140 = vld [vmem:[%s298 + $0x630] sm:$0xff]
        %v1141 = vld [vmem:[%s298 + $0x638] sm:$0xff]
        %v1142 = vld [vmem:[%s298 + $0x640] sm:$0xff]
        %v1143 = vld [vmem:[%s298 + $0x648] sm:$0xff]
        %v1144 = vld [vmem:[%s298 + $0x650] sm:$0xff]
        %v1145 = vld [vmem:[%s298 + $0x658] sm:$0xff]
        %v1146 = vld [vmem:[%s298 + $0x660] sm:$0xff]
        %v1147 = vld [vmem:[%s298 + $0x668] sm:$0xff]
        %v1148 = vld [vmem:[%s298 + $0x670] sm:$0xff]
        %v1149 = vld [vmem:[%s298 + $0x678] sm:$0xff]
        %v1150 = vld [vmem:[%s298 + $0x680] sm:$0xff]
        %v1151 = vld [vmem:[%s298 + $0x688] sm:$0xff]
        %v1152 = vld [vmem:[%s298 + $0x690] sm:$0xff]
        %v1153 = vld [vmem:[%s298 + $0x698] sm:$0xff]
        %v1154 = vld [vmem:[%s298 + $0x6a0] sm:$0xff]
        %v1155 = vld [vmem:[%s298 + $0x6a8] sm:$0xff]
        %v1156 = vld [vmem:[%s298 + $0x6b0] sm:$0xff]
        %v1157 = vld [vmem:[%s298 + $0x6b8] sm:$0xff]
        %v1158 = vld [vmem:[%s298 + $0x6c0] sm:$0xff]
        %v1159 = vld [vmem:[%s298 + $0x6c8] sm:$0xff]
        %v1160 = vld [vmem:[%s298 + $0x6d0] sm:$0xff]
        %v1161 = vld [vmem:[%s298 + $0x6d8] sm:$0xff]
        %v1162 = vld [vmem:[%s298 + $0x6e0] sm:$0xff]
        %v1163 = vld [vmem:[%s298 + $0x6e8] sm:$0xff]
        %v1164 = vld [vmem:[%s298 + $0x6f0] sm:$0xff]
        %v1165 = vld [vmem:[%s298 + $0x6f8] sm:$0xff]
        %v1166 = vld [vmem:[%s298 + $0x700] sm:$0xff]
        %v1167 = vld [vmem:[%s298 + $0x708] sm:$0xff]
        %v1168 = vld [vmem:[%s298 + $0x710] sm:$0xff]
        %v1169 = vld [vmem:[%s298 + $0x718] sm:$0xff]
        %v1170 = vld [vmem:[%s298 + $0x720] sm:$0xff]
        %v1171 = vld [vmem:[%s298 + $0x728] sm:$0xff]
        %v1172 = vld [vmem:[%s298 + $0x730] sm:$0xff]
        %v1173 = vld [vmem:[%s298 + $0x738] sm:$0xff]
        %v1174 = vld [vmem:[%s298 + $0x740] sm:$0xff]
        %v1175 = vld [vmem:[%s298 + $0x748] sm:$0xff]
        %v1176 = vld [vmem:[%s298 + $0x750] sm:$0xff]
        %v1177 = vld [vmem:[%s298 + $0x758] sm:$0xff]
        %v1178 = vld [vmem:[%s298 + $0x760] sm:$0xff]
        %v1179 = vld [vmem:[%s298 + $0x768] sm:$0xff]
        %v1180 = vld [vmem:[%s298 + $0x770] sm:$0xff]
        %v1181 = vld [vmem:[%s298 + $0x778] sm:$0xff]
        %v1182 = vld [vmem:[%s298 + $0x780] sm:$0xff]
        %v1183 = vld [vmem:[%s298 + $0x788] sm:$0xff]
        %v1184 = vld [vmem:[%s298 + $0x790] sm:$0xff]
        %v1185 = vld [vmem:[%s298 + $0x798] sm:$0xff]
        %v1186 = vld [vmem:[%s298 + $0x7a0] sm:$0xff]
        %v1187 = vld [vmem:[%s298 + $0x7a8] sm:$0xff]
        %v1188 = vld [vmem:[%s298 + $0x7b0] sm:$0xff]
        %v1189 = vld [vmem:[%s298 + $0x7b8] sm:$0xff]
        %v1190 = vld [vmem:[%s298 + $0x7c0] sm:$0xff]
        %v1191 = vld [vmem:[%s298 + $0x7c8] sm:$0xff]
        %v1192 = vld [vmem:[%s298 + $0x7d0] sm:$0xff]
        %v1193 = vld [vmem:[%s298 + $0x7d8] sm:$0xff]
        %v1194 = vld [vmem:[%s298 + $0x7e0] sm:$0xff]
        %v1195 = vld [vmem:[%s298 + $0x7e8] sm:$0xff]
        %v1196 = vld [vmem:[%s298 + $0x7f0] sm:$0xff]
        %v1197 = vld [vmem:[%s298 + $0x7f8] sm:$0xff]
        %v1198 = vld [vmem:[%s298 + $0x800] sm:$0xff]
        %v1199 = vld [vmem:[%s298 + $0x808] sm:$0xff]
        %v1200 = vld [vmem:[%s298 + $0x810] sm:$0xff]
        %v1201 = vld [vmem:[%s298 + $0x818] sm:$0xff]
        %v1202 = vld [vmem:[%s298 + $0x820] sm:$0xff]
        %v1203 = vld [vmem:[%s298 + $0x828] sm:$0xff]
        %v1204 = vld [vmem:[%s298 + $0x830] sm:$0xff]
        %v1205 = vld [vmem:[%s298 + $0x838] sm:$0xff]
        %v1206 = vld [vmem:[%s298 + $0x840] sm:$0xff]
        %v1207 = vld [vmem:[%s298 + $0x848] sm:$0xff]
        %v1208 = vld [vmem:[%s298 + $0x850] sm:$0xff]
        %v1209 = vld [vmem:[%s298 + $0x858] sm:$0xff]
        %v1210 = vld [vmem:[%s298 + $0x860] sm:$0xff]
        %v1211 = vld [vmem:[%s298 + $0x868] sm:$0xff]
        %v1212 = vld [vmem:[%s298 + $0x870] sm:$0xff]
        %v1213 = vld [vmem:[%s298 + $0x878] sm:$0xff]
        %v1214 = vld [vmem:[%s298 + $0x880] sm:$0xff]
        %v1215 = vld [vmem:[%s298 + $0x888] sm:$0xff]
        %v1216 = vld [vmem:[%s298 + $0x890] sm:$0xff]
        %v1217 = vld [vmem:[%s298 + $0x898] sm:$0xff]
        %v1218 = vld [vmem:[%s298 + $0x8a0] sm:$0xff]
        %v1219 = vld [vmem:[%s298 + $0x8a8] sm:$0xff]
        %v1220 = vld [vmem:[%s298 + $0x8b0] sm:$0xff]
        %v1221 = vld [vmem:[%s298 + $0x8b8] sm:$0xff]
        %v1222 = vld [vmem:[%s298 + $0x8c0] sm:$0xff]
        %v1223 = vld [vmem:[%s298 + $0x8c8] sm:$0xff]
        %v1224 = vld [vmem:[%s298 + $0x8d0] sm:$0xff]
        %v1225 = vld [vmem:[%s298 + $0x8d8] sm:$0xff]
        %v1226 = vld [vmem:[%s298 + $0x8e0] sm:$0xff]
        %v1227 = vld [vmem:[%s298 + $0x8e8] sm:$0xff]
        %v1228 = vld [vmem:[%s298 + $0x8f0] sm:$0xff]
        %v1229 = vld [vmem:[%s298 + $0x8f8] sm:$0xff]
        %v1230 = vld [vmem:[%s298 + $0x900] sm:$0xff]
        %v1231 = vld [vmem:[%s298 + $0x908] sm:$0xff]
        %v1232 = vld [vmem:[%s298 + $0x910] sm:$0xff]
        %v1233 = vld [vmem:[%s298 + $0x918] sm:$0xff]
        %v1234 = vld [vmem:[%s298 + $0x920] sm:$0xff]
        %v1235 = vld [vmem:[%s298 + $0x928] sm:$0xff]
        %v1236 = vld [vmem:[%s298 + $0x930] sm:$0xff]
        %v1237 = vld [vmem:[%s298 + $0x938] sm:$0xff]
        %v1238 = vld [vmem:[%s298 + $0x940] sm:$0xff]
        %v1239 = vld [vmem:[%s298 + $0x948] sm:$0xff]
        %v1240 = vld [vmem:[%s298 + $0x950] sm:$0xff]
        %v1241 = vld [vmem:[%s298 + $0x958] sm:$0xff]
        %v1242 = vld [vmem:[%s298 + $0x960] sm:$0xff]
        %v1243 = vld [vmem:[%s298 + $0x968] sm:$0xff]
        %v1244 = vld [vmem:[%s298 + $0x970] sm:$0xff]
        %v1245 = vld [vmem:[%s298 + $0x978] sm:$0xff]
        %v1246 = vld [vmem:[%s298 + $0x980] sm:$0xff]
        %v1247 = vld [vmem:[%s298 + $0x988] sm:$0xff]
        %v1248 = vld [vmem:[%s298 + $0x990] sm:$0xff]
        %v1249 = vld [vmem:[%s298 + $0x998] sm:$0xff]
        %v1250 = vld [vmem:[%s298 + $0x9a0] sm:$0xff]
        %v1251 = vld [vmem:[%s298 + $0x9a8] sm:$0xff]
        %v1252 = vld [vmem:[%s298 + $0x9b0] sm:$0xff]
        %v1253 = vld [vmem:[%s298 + $0x9b8] sm:$0xff]
        %v1254 = vld [vmem:[%s298 + $0x9c0] sm:$0xff]
        %v1255 = vld [vmem:[%s298 + $0x9c8] sm:$0xff]
        %v1256 = vld [vmem:[%s298 + $0x9d0] sm:$0xff]
        %v1257 = vld [vmem:[%s298 + $0x9d8] sm:$0xff]
        %v1258 = vld [vmem:[%s298 + $0x9e0] sm:$0xff]
        %v1259 = vld [vmem:[%s298 + $0x9e8] sm:$0xff]
        %v1260 = vld [vmem:[%s298 + $0x9f0] sm:$0xff]
        %v1261 = vld [vmem:[%s298 + $0x9f8] sm:$0xff]
        %v1262 = vld [vmem:[%s298 + $0xa00] sm:$0xff]
        %v1263 = vld [vmem:[%s298 + $0xa08] sm:$0xff]
        %v1264 = vld [vmem:[%s298 + $0xa10] sm:$0xff]
        %v1265 = vld [vmem:[%s298 + $0xa18] sm:$0xff]
        %v1266 = vld [vmem:[%s298 + $0xa20] sm:$0xff]
        %v1267 = vld [vmem:[%s298 + $0xa28] sm:$0xff]
        %v1268 = vld [vmem:[%s298 + $0xa30] sm:$0xff]
        %v1269 = vld [vmem:[%s298 + $0xa38] sm:$0xff]
        %v1270 = vld [vmem:[%s298 + $0xa40] sm:$0xff]
        %v1271 = vld [vmem:[%s298 + $0xa48] sm:$0xff]
        %v1272 = vld [vmem:[%s298 + $0xa50] sm:$0xff]
        %v1273 = vld [vmem:[%s298 + $0xa58] sm:$0xff]
        %v1274 = vld [vmem:[%s298 + $0xa60] sm:$0xff]
        %v1275 = vld [vmem:[%s298 + $0xa68] sm:$0xff]
        %v1276 = vld [vmem:[%s298 + $0xa70] sm:$0xff]
        %v1277 = vld [vmem:[%s298 + $0xa78] sm:$0xff]
        %v1278 = vld [vmem:[%s298 + $0xa80] sm:$0xff]
        %v1279 = vld [vmem:[%s298 + $0xa88] sm:$0xff]
        %v1280 = vld [vmem:[%s298 + $0xa90] sm:$0xff]
        %v1281 = vld [vmem:[%s298 + $0xa98] sm:$0xff]
        %v1282 = vld [vmem:[%s298 + $0xaa0] sm:$0xff]
        %v1283 = vld [vmem:[%s298 + $0xaa8] sm:$0xff]
        %v1284 = vld [vmem:[%s298 + $0xab0] sm:$0xff]
        %v1285 = vld [vmem:[%s298 + $0xab8] sm:$0xff]
        %v1286 = vld [vmem:[%s298 + $0xac0] sm:$0xff]
        %v1287 = vld [vmem:[%s298 + $0xac8] sm:$0xff]
        %v1288 = vld [vmem:[%s298 + $0xad0] sm:$0xff]
        %v1289 = vld [vmem:[%s298 + $0xad8] sm:$0xff]
        %v1290 = vld [vmem:[%s298 + $0xae0] sm:$0xff]
        %v1291 = vld [vmem:[%s298 + $0xae8] sm:$0xff]
        %v1292 = vld [vmem:[%s298 + $0xaf0] sm:$0xff]
        %v1293 = vld [vmem:[%s298 + $0xaf8] sm:$0xff]
        %v1294 = vld [vmem:[%s298 + $0xb00] sm:$0xff]
        %v1295 = vld [vmem:[%s298 + $0xb08] sm:$0xff]
        %v1296 = vld [vmem:[%s298 + $0xb10] sm:$0xff]
        %v1297 = vld [vmem:[%s298 + $0xb18] sm:$0xff]
        %v1298 = vld [vmem:[%s298 + $0xb20] sm:$0xff]
        %v1299 = vld [vmem:[%s298 + $0xb28] sm:$0xff]
        %v1300 = vld [vmem:[%s298 + $0xb30] sm:$0xff]
        %v1301 = vld [vmem:[%s298 + $0xb38] sm:$0xff]
        %v1302 = vld [vmem:[%s298 + $0xb40] sm:$0xff]
        %v1303 = vld [vmem:[%s298 + $0xb48] sm:$0xff]
        %v1304 = vld [vmem:[%s298 + $0xb50] sm:$0xff]
        %v1305 = vld [vmem:[%s298 + $0xb58] sm:$0xff]
        %v1306 = vld [vmem:[%s298 + $0xb60] sm:$0xff]
        %v1307 = vld [vmem:[%s298 + $0xb68] sm:$0xff]
        %v1308 = vld [vmem:[%s298 + $0xb70] sm:$0xff]
        %v1309 = vld [vmem:[%s298 + $0xb78] sm:$0xff]
        %v1310 = vld [vmem:[%s298 + $0xb80] sm:$0xff]
        %v1311 = vld [vmem:[%s298 + $0xb88] sm:$0xff]
        %v1312 = vld [vmem:[%s298 + $0xb90] sm:$0xff]
        %v1313 = vld [vmem:[%s298 + $0xb98] sm:$0xff]
        %v1314 = vld [vmem:[%s298 + $0xba0] sm:$0xff]
        %v1315 = vld [vmem:[%s298 + $0xba8] sm:$0xff]
        %v1316 = vld [vmem:[%s298 + $0xbb0] sm:$0xff]
        %v1317 = vld [vmem:[%s298 + $0xbb8] sm:$0xff]
        %v1318 = vld [vmem:[%s298 + $0xbc0] sm:$0xff]
        %v1319 = vld [vmem:[%s298 + $0xbc8] sm:$0xff]
        %v1320 = vld [vmem:[%s298 + $0xbd0] sm:$0xff]
        %v1321 = vld [vmem:[%s298 + $0xbd8] sm:$0xff]
        %v1322 = vld [vmem:[%s298 + $0xbe0] sm:$0xff]
        %v1323 = vld [vmem:[%s298 + $0xbe8] sm:$0xff]
        %v1324 = vld [vmem:[%s298 + $0xbf0] sm:$0xff]
        %v1325 = vld [vmem:[%s298 + $0xbf8] sm:$0xff]
        %v1326 = vld [vmem:[%s298 + $0xc00] sm:$0xff]
        %v1327 = vld [vmem:[%s298 + $0xc08] sm:$0xff]
        %v1328 = vld [vmem:[%s298 + $0xc10] sm:$0xff]
        %v1329 = vld [vmem:[%s298 + $0xc18] sm:$0xff]
        %v1330 = vld [vmem:[%s298 + $0xc20] sm:$0xff]
        %v1331 = vld [vmem:[%s298 + $0xc28] sm:$0xff]
        %v1332 = vld [vmem:[%s298 + $0xc30] sm:$0xff]
        %v1333 = vld [vmem:[%s298 + $0xc38] sm:$0xff]
        %v1334 = vld [vmem:[%s298 + $0xc40] sm:$0xff]
        %v1335 = vld [vmem:[%s298 + $0xc48] sm:$0xff]
        %v1336 = vld [vmem:[%s298 + $0xc50] sm:$0xff]
        %v1337 = vld [vmem:[%s298 + $0xc58] sm:$0xff]
        %v1338 = vld [vmem:[%s298 + $0xc60] sm:$0xff]
        %v1339 = vld [vmem:[%s298 + $0xc68] sm:$0xff]
        %v1340 = vld [vmem:[%s298 + $0xc70] sm:$0xff]
        %v1341 = vld [vmem:[%s298 + $0xc78] sm:$0xff]
        %v1342 = vld [vmem:[%s298 + $0xc80] sm:$0xff]
        %v1343 = vld [vmem:[%s298 + $0xc88] sm:$0xff]
        %v1344 = vld [vmem:[%s298 + $0xc90] sm:$0xff]
        %v1345 = vld [vmem:[%s298 + $0xc98] sm:$0xff]
        %v1346 = vld [vmem:[%s298 + $0xca0] sm:$0xff]
        %v1347 = vld [vmem:[%s298 + $0xca8] sm:$0xff]
        %v1348 = vld [vmem:[%s298 + $0xcb0] sm:$0xff]
        %v1349 = vld [vmem:[%s298 + $0xcb8] sm:$0xff]
        %v1350 = vld [vmem:[%s298 + $0xcc0] sm:$0xff]
        %v1351 = vld [vmem:[%s298 + $0xcc8] sm:$0xff]
        %v1352 = vld [vmem:[%s298 + $0xcd0] sm:$0xff]
        %v1353 = vld [vmem:[%s298 + $0xcd8] sm:$0xff]
        %v1354 = vld [vmem:[%s298 + $0xce0] sm:$0xff]
        %v1355 = vld [vmem:[%s298 + $0xce8] sm:$0xff]
        %v1356 = vld [vmem:[%s298 + $0xcf0] sm:$0xff]
        %v1357 = vld [vmem:[%s298 + $0xcf8] sm:$0xff]
        %v1358 = vld [vmem:[%s298 + $0xd00] sm:$0xff]
        %v1359 = vld [vmem:[%s298 + $0xd08] sm:$0xff]
        %v1360 = vld [vmem:[%s298 + $0xd10] sm:$0xff]
        %v1361 = vld [vmem:[%s298 + $0xd18] sm:$0xff]
        %v1362 = vld [vmem:[%s298 + $0xd20] sm:$0xff]
        %v1363 = vld [vmem:[%s298 + $0xd28] sm:$0xff]
        %v1364 = vld [vmem:[%s298 + $0xd30] sm:$0xff]
        %v1365 = vld [vmem:[%s298 + $0xd38] sm:$0xff]
        %v1366 = vld [vmem:[%s298 + $0xd40] sm:$0xff]
        %v1367 = vld [vmem:[%s298 + $0xd48] sm:$0xff]
        %v1368 = vld [vmem:[%s298 + $0xd50] sm:$0xff]
        %v1369 = vld [vmem:[%s298 + $0xd58] sm:$0xff]
        %v1370 = vld [vmem:[%s298 + $0xd60] sm:$0xff]
        %v1371 = vld [vmem:[%s298 + $0xd68] sm:$0xff]
        %v1372 = vld [vmem:[%s298 + $0xd70] sm:$0xff]
        %v1373 = vld [vmem:[%s298 + $0xd78] sm:$0xff]
        %v1374 = vld [vmem:[%s298 + $0xd80] sm:$0xff]
        %v1375 = vld [vmem:[%s298 + $0xd88] sm:$0xff]
        %v1376 = vld [vmem:[%s298 + $0xd90] sm:$0xff]
        %v1377 = vld [vmem:[%s298 + $0xd98] sm:$0xff]
        %v1378 = vld [vmem:[%s298 + $0xda0] sm:$0xff]
        %v1379 = vld [vmem:[%s298 + $0xda8] sm:$0xff]
        %v1380 = vld [vmem:[%s298 + $0xdb0] sm:$0xff]
        %v1381 = vld [vmem:[%s298 + $0xdb8] sm:$0xff]
        %v1382 = vld [vmem:[%s298 + $0xdc0] sm:$0xff]
        %v1383 = vld [vmem:[%s298 + $0xdc8] sm:$0xff]
        %v1384 = vld [vmem:[%s298 + $0xdd0] sm:$0xff]
        %v1385 = vld [vmem:[%s298 + $0xdd8] sm:$0xff]
        %v1386 = vld [vmem:[%s298 + $0xde0] sm:$0xff]
        %v1387 = vld [vmem:[%s298 + $0xde8] sm:$0xff]
        %v1388 = vld [vmem:[%s298 + $0xdf0] sm:$0xff]
        %v1389 = vld [vmem:[%s298 + $0xdf8] sm:$0xff]
        %v1390 = vld [vmem:[%s298 + $0xe00] sm:$0xff]
        %v1391 = vld [vmem:[%s298 + $0xe08] sm:$0xff]
        %v1392 = vld [vmem:[%s298 + $0xe10] sm:$0xff]
        %v1393 = vld [vmem:[%s298 + $0xe18] sm:$0xff]
        %v1394 = vld [vmem:[%s298 + $0xe20] sm:$0xff]
        %v1395 = vld [vmem:[%s298 + $0xe28] sm:$0xff]
        %v1396 = vld [vmem:[%s298 + $0xe30] sm:$0xff]
        %v1397 = vld [vmem:[%s298 + $0xe38] sm:$0xff]
        %v1398 = vld [vmem:[%s298 + $0xe40] sm:$0xff]
        %v1399 = vld [vmem:[%s298 + $0xe48] sm:$0xff]
        %v1400 = vld [vmem:[%s298 + $0xe50] sm:$0xff]
        %v1401 = vld [vmem:[%s298 + $0xe58] sm:$0xff]
        %v1402 = vld [vmem:[%s298 + $0xe60] sm:$0xff]
        %v1403 = vld [vmem:[%s298 + $0xe68] sm:$0xff]
        %v1404 = vld [vmem:[%s298 + $0xe70] sm:$0xff]
        %v1405 = vld [vmem:[%s298 + $0xe78] sm:$0xff]
        %v1406 = vld [vmem:[%s298 + $0xe80] sm:$0xff]
        %v1407 = vld [vmem:[%s298 + $0xe88] sm:$0xff]
        %v1408 = vld [vmem:[%s298 + $0xe90] sm:$0xff]
        %v1409 = vld [vmem:[%s298 + $0xe98] sm:$0xff]
        %v1410 = vld [vmem:[%s298 + $0xea0] sm:$0xff]
        %v1411 = vld [vmem:[%s298 + $0xea8] sm:$0xff]
        %v1412 = vld [vmem:[%s298 + $0xeb0] sm:$0xff]
        %v1413 = vld [vmem:[%s298 + $0xeb8] sm:$0xff]
        %v1414 = vld [vmem:[%s298 + $0xec0] sm:$0xff]
        %v1415 = vld [vmem:[%s298 + $0xec8] sm:$0xff]
        %v1416 = vld [vmem:[%s298 + $0xed0] sm:$0xff]
        %v1417 = vld [vmem:[%s298 + $0xed8] sm:$0xff]
        %v1418 = vld [vmem:[%s298 + $0xee0] sm:$0xff]
        %v1419 = vld [vmem:[%s298 + $0xee8] sm:$0xff]
        %v1420 = vld [vmem:[%s298 + $0xef0] sm:$0xff]
        %v1421 = vld [vmem:[%s298 + $0xef8] sm:$0xff]
        %v1422 = vld [vmem:[%s298 + $0xf00] sm:$0xff]
        %v1423 = vld [vmem:[%s298 + $0xf08] sm:$0xff]
        %v1424 = vld [vmem:[%s298 + $0xf10] sm:$0xff]
        %v1425 = vld [vmem:[%s298 + $0xf18] sm:$0xff]
        %v1426 = vld [vmem:[%s298 + $0xf20] sm:$0xff]
        %v1427 = vld [vmem:[%s298 + $0xf28] sm:$0xff]
        %v1428 = vld [vmem:[%s298 + $0xf30] sm:$0xff]
        %v1429 = vld [vmem:[%s298 + $0xf38] sm:$0xff]
        %v1430 = vld [vmem:[%s298 + $0xf40] sm:$0xff]
        %v1431 = vld [vmem:[%s298 + $0xf48] sm:$0xff]
        %v1432 = vld [vmem:[%s298 + $0xf50] sm:$0xff]
        %v1433 = vld [vmem:[%s298 + $0xf58] sm:$0xff]
        %v1434 = vld [vmem:[%s298 + $0xf60] sm:$0xff]
        %v1435 = vld [vmem:[%s298 + $0xf68] sm:$0xff]
        %v1436 = vld [vmem:[%s298 + $0xf70] sm:$0xff]
        %v1437 = vld [vmem:[%s298 + $0xf78] sm:$0xff]
        %v1438 = vld [vmem:[%s298 + $0xf80] sm:$0xff]
        %v1439 = vld [vmem:[%s298 + $0xf88] sm:$0xff]
        %v1440 = vld [vmem:[%s298 + $0xf90] sm:$0xff]
        %v1441 = vld [vmem:[%s298 + $0xf98] sm:$0xff]
        %v1442 = vld [vmem:[%s298 + $0xfa0] sm:$0xff]
        %v1443 = vld [vmem:[%s298 + $0xfa8] sm:$0xff]
        %v1444 = vld [vmem:[%s298 + $0xfb0] sm:$0xff]
        %v1445 = vld [vmem:[%s298 + $0xfb8] sm:$0xff]
        %v1446 = vld [vmem:[%s298 + $0xfc0] sm:$0xff]
        %v1447 = vld [vmem:[%s298 + $0xfc8] sm:$0xff]
        %v1448 = vld [vmem:[%s298 + $0xfd0] sm:$0xff]
        %v1449 = vld [vmem:[%s298 + $0xfd8] sm:$0xff]
        %v1450 = vld [vmem:[%s298 + $0xfe0] sm:$0xff]
        %v1451 = vld [vmem:[%s298 + $0xfe8] sm:$0xff]
        %v1452 = vld [vmem:[%s298 + $0xff0] sm:$0xff]
        %v1453 = vld [vmem:[%s298 + $0xff8] sm:$0xff]
        %v1454 = vld [vmem:[%s298 + $0x1000] sm:$0xff]
        %v1455 = vld [vmem:[%s298 + $0x1008] sm:$0xff]
        %v1456 = vld [vmem:[%s298 + $0x1010] sm:$0xff]
        %v1457 = vld [vmem:[%s298 + $0x1018] sm:$0xff]
        %v1458 = vld [vmem:[%s298 + $0x1020] sm:$0xff]
        %v1459 = vld [vmem:[%s298 + $0x1028] sm:$0xff]
        %v1460 = vld [vmem:[%s298 + $0x1030] sm:$0xff]
        %v1461 = vld [vmem:[%s298 + $0x1038] sm:$0xff]
        %v1462 = vld [vmem:[%s298 + $0x1040] sm:$0xff]
        %v1463 = vld [vmem:[%s298 + $0x1048] sm:$0xff]
        %v1464 = vld [vmem:[%s298 + $0x1050] sm:$0xff]
        %v1465 = vld [vmem:[%s298 + $0x1058] sm:$0xff]
        %v1466 = vld [vmem:[%s298 + $0x1060] sm:$0xff]
        %v1467 = vld [vmem:[%s298 + $0x1068] sm:$0xff]
        %v1468 = vld [vmem:[%s298 + $0x1070] sm:$0xff]
        %v1469 = vld [vmem:[%s298 + $0x1078] sm:$0xff]
        %v1470 = vld [vmem:[%s298 + $0x1080] sm:$0xff]
        %v1471 = vld [vmem:[%s298 + $0x1088] sm:$0xff]
        %v1472 = vld [vmem:[%s298 + $0x1090] sm:$0xff]
        %v1473 = vld [vmem:[%s298 + $0x1098] sm:$0xff]
        %v1474 = vld [vmem:[%s298 + $0x10a0] sm:$0xff]
        %v1475 = vld [vmem:[%s298 + $0x10a8] sm:$0xff]
        %v1476 = vld [vmem:[%s298 + $0x10b0] sm:$0xff]
        %v1477 = vld [vmem:[%s298 + $0x10b8] sm:$0xff]
        %v1478 = vld [vmem:[%s298 + $0x10c0] sm:$0xff]
        %v1479 = vld [vmem:[%s298 + $0x10c8] sm:$0xff]
        %v1480 = vld [vmem:[%s298 + $0x10d0] sm:$0xff]
        %v1481 = vld [vmem:[%s298 + $0x10d8] sm:$0xff]
        %v1482 = vld [vmem:[%s298 + $0x10e0] sm:$0xff]
        %v1483 = vld [vmem:[%s298 + $0x10e8] sm:$0xff]
        %v1484 = vld [vmem:[%s298 + $0x10f0] sm:$0xff]
        %v1485 = vld [vmem:[%s298 + $0x10f8] sm:$0xff]
        %v1486 = vld [vmem:[%s298 + $0x1100] sm:$0xff]
        %v1487 = vld [vmem:[%s298 + $0x1108] sm:$0xff]
        %v1488 = vld [vmem:[%s298 + $0x1110] sm:$0xff]
        %v1489 = vld [vmem:[%s298 + $0x1118] sm:$0xff]
        %v1490 = vld [vmem:[%s298 + $0x1120] sm:$0xff]
        %v1491 = vld [vmem:[%s298 + $0x1128] sm:$0xff]
        %v1492 = vld [vmem:[%s298 + $0x1130] sm:$0xff]
        %v1493 = vld [vmem:[%s298 + $0x1138] sm:$0xff]
        %v1494 = vld [vmem:[%s298 + $0x1140] sm:$0xff]
        %v1495 = vld [vmem:[%s298 + $0x1148] sm:$0xff]
        %v1496 = vld [vmem:[%s298 + $0x1150] sm:$0xff]
        %v1497 = vld [vmem:[%s298 + $0x1158] sm:$0xff]
        %v1498 = vld [vmem:[%s298 + $0x1160] sm:$0xff]
        %v1499 = vld [vmem:[%s298 + $0x1168] sm:$0xff]
        %v1500 = vld [vmem:[%s298 + $0x1170] sm:$0xff]
        %v1501 = vld [vmem:[%s298 + $0x1178] sm:$0xff]
        %v1502 = vld [vmem:[%s298 + $0x1180] sm:$0xff]
        %v1503 = vld [vmem:[%s298 + $0x1188] sm:$0xff]
        %v1504 = vld [vmem:[%s298 + $0x1190] sm:$0xff]
        %v1505 = vld [vmem:[%s298 + $0x1198] sm:$0xff]
        %v1506 = vld [vmem:[%s298 + $0x11a0] sm:$0xff]
        %v1507 = vld [vmem:[%s298 + $0x11a8] sm:$0xff]
        %v1508 = vld [vmem:[%s298 + $0x11b0] sm:$0xff]
        %v1509 = vld [vmem:[%s298 + $0x11b8] sm:$0xff]
        %v1510 = vld [vmem:[%s298 + $0x11c0] sm:$0xff]
        %v1511 = vld [vmem:[%s298 + $0x11c8] sm:$0xff]
        %v1512 = vld [vmem:[%s298 + $0x11d0] sm:$0xff]
        %v1513 = vld [vmem:[%s298 + $0x11d8] sm:$0xff]
        %v1514 = vld [vmem:[%s298 + $0x11e0] sm:$0xff]
        %v1515 = vld [vmem:[%s298 + $0x11e8] sm:$0xff]
        %v1516 = vld [vmem:[%s298 + $0x11f0] sm:$0xff]
        %v1517 = vld [vmem:[%s298 + $0x11f8] sm:$0xff]
        %v1518 = vld [vmem:[%s298 + $0x1200] sm:$0xff]
        %v1519 = vld [vmem:[%s298 + $0x1208] sm:$0xff]
        %v1520 = vld [vmem:[%s298 + $0x1210] sm:$0xff]
        %v1521 = vld [vmem:[%s298 + $0x1218] sm:$0xff]
        %v1522 = vld [vmem:[%s298 + $0x1220] sm:$0xff]
        %v1523 = vld [vmem:[%s298 + $0x1228] sm:$0xff]
        %v1524 = vld [vmem:[%s298 + $0x1230] sm:$0xff]
        %v1525 = vld [vmem:[%s298 + $0x1238] sm:$0xff]
        %v1526 = vld [vmem:[%s298 + $0x1240] sm:$0xff]
        %v1527 = vld [vmem:[%s298 + $0x1248] sm:$0xff]
        %v1528 = vld [vmem:[%s298 + $0x1250] sm:$0xff]
        %v1529 = vld [vmem:[%s298 + $0x1258] sm:$0xff]
        %v1530 = vld [vmem:[%s298 + $0x1260] sm:$0xff]
        %v1531 = vld [vmem:[%s298 + $0x1268] sm:$0xff]
        %v1532 = vld [vmem:[%s298 + $0x1270] sm:$0xff]
        %v1533 = vld [vmem:[%s298 + $0x1278] sm:$0xff]
        %v1534 = vld [vmem:[%s298 + $0x1280] sm:$0xff]
        %v1535 = vld [vmem:[%s298 + $0x1288] sm:$0xff]
        %v1536 = vld [vmem:[%s298 + $0x1290] sm:$0xff]
        %v1537 = vld [vmem:[%s298 + $0x1298] sm:$0xff]
        %v1538 = vld [vmem:[%s298 + $0x12a0] sm:$0xff]
        %v1539 = vld [vmem:[%s298 + $0x12a8] sm:$0xff]
        %v1540 = vld [vmem:[%s298 + $0x12b0] sm:$0xff]
        %v1541 = vld [vmem:[%s298 + $0x12b8] sm:$0xff]
        %v1542 = vld [vmem:[%s298 + $0x12c0] sm:$0xff]
        %v1543 = vld [vmem:[%s298 + $0x12c8] sm:$0xff]
        %v1544 = vld [vmem:[%s298 + $0x12d0] sm:$0xff]
        %v1545 = vld [vmem:[%s298 + $0x12d8] sm:$0xff]
        %v1546 = vld [vmem:[%s298 + $0x12e0] sm:$0xff]
        %v1547 = vld [vmem:[%s298 + $0x12e8] sm:$0xff]
        %v1548 = vld [vmem:[%s298 + $0x12f0] sm:$0xff]
        %v1549 = vld [vmem:[%s298 + $0x12f8] sm:$0xff]
        %v1550 = vld [vmem:[%s298 + $0x1300] sm:$0xff]
        %v1551 = vld [vmem:[%s298 + $0x1308] sm:$0xff]
        %v1552 = vld [vmem:[%s298 + $0x1310] sm:$0xff]
        %v1553 = vld [vmem:[%s298 + $0x1318] sm:$0xff]
        %v1554 = vld [vmem:[%s298 + $0x1320] sm:$0xff]
        %v1555 = vld [vmem:[%s298 + $0x1328] sm:$0xff]
        %v1556 = vld [vmem:[%s298 + $0x1330] sm:$0xff]
        %v1557 = vld [vmem:[%s298 + $0x1338] sm:$0xff]
        %v1558 = vld [vmem:[%s298 + $0x1340] sm:$0xff]
        %v1559 = vld [vmem:[%s298 + $0x1348] sm:$0xff]
        %v1560 = vld [vmem:[%s298 + $0x1350] sm:$0xff]
        %v1561 = vld [vmem:[%s298 + $0x1358] sm:$0xff]
        %v1562 = vld [vmem:[%s298 + $0x1360] sm:$0xff]
        %v1563 = vld [vmem:[%s298 + $0x1368] sm:$0xff]
        %v1564 = vld [vmem:[%s298 + $0x1370] sm:$0xff]
        %v1565 = vld [vmem:[%s298 + $0x1378] sm:$0xff]
        %v1566 = vld [vmem:[%s298 + $0x1380] sm:$0xff]
        %v1567 = vld [vmem:[%s298 + $0x1388] sm:$0xff]
        %v1568 = vld [vmem:[%s298 + $0x1390] sm:$0xff]
        %v1569 = vld [vmem:[%s298 + $0x1398] sm:$0xff]
        %v1570 = vld [vmem:[%s298 + $0x13a0] sm:$0xff]
        %v1571 = vld [vmem:[%s298 + $0x13a8] sm:$0xff]
        %v1572 = vld [vmem:[%s298 + $0x13b0] sm:$0xff]
        %v1573 = vld [vmem:[%s298 + $0x13b8] sm:$0xff]
        %v1574 = vld [vmem:[%s298 + $0x13c0] sm:$0xff]
        %v1575 = vld [vmem:[%s298 + $0x13c8] sm:$0xff]
        %v1576 = vld [vmem:[%s298 + $0x13d0] sm:$0xff]
        %v1577 = vld [vmem:[%s298 + $0x13d8] sm:$0xff]
        %v1578 = vld [vmem:[%s298 + $0x13e0] sm:$0xff]
        %v1579 = vld [vmem:[%s298 + $0x13e8] sm:$0xff]
        %v1580 = vld [vmem:[%s298 + $0x13f0] sm:$0xff]
        %v1581 = vld [vmem:[%s298 + $0x13f8] sm:$0xff]
        %v1582 = vld [vmem:[%s298 + $0x1400] sm:$0xff]
        %v1583 = vld [vmem:[%s298 + $0x1408] sm:$0xff]
        %v1584 = vld [vmem:[%s298 + $0x1410] sm:$0xff]
        %v1585 = vld [vmem:[%s298 + $0x1418] sm:$0xff]
        %v1586 = vld [vmem:[%s298 + $0x1420] sm:$0xff]
        %v1587 = vld [vmem:[%s298 + $0x1428] sm:$0xff]
        %v1588 = vld [vmem:[%s298 + $0x1430] sm:$0xff]
        %v1589 = vld [vmem:[%s298 + $0x1438] sm:$0xff]
        %v1590 = vld [vmem:[%s298 + $0x1440] sm:$0xff]
        %v1591 = vld [vmem:[%s298 + $0x1448] sm:$0xff]
        %v1592 = vld [vmem:[%s298 + $0x1450] sm:$0xff]
        %v1593 = vld [vmem:[%s298 + $0x1458] sm:$0xff]
        %v1594 = vld [vmem:[%s298 + $0x1460] sm:$0xff]
        %v1595 = vld [vmem:[%s298 + $0x1468] sm:$0xff]
        %v1596 = vld [vmem:[%s298 + $0x1470] sm:$0xff]
        %v1597 = vld [vmem:[%s298 + $0x1478] sm:$0xff]
        %v1598 = vld [vmem:[%s298 + $0x1480] sm:$0xff]
        %v1599 = vld [vmem:[%s298 + $0x1488] sm:$0xff]
        %v1600 = vld [vmem:[%s298 + $0x1490] sm:$0xff]
        %v1601 = vld [vmem:[%s298 + $0x1498] sm:$0xff]
        %v1602 = vld [vmem:[%s298 + $0x14a0] sm:$0xff]
        %v1603 = vld [vmem:[%s298 + $0x14a8] sm:$0xff]
        %v1604 = vld [vmem:[%s298 + $0x14b0] sm:$0xff]
        %v1605 = vld [vmem:[%s298 + $0x14b8] sm:$0xff]
        %v1606 = vld [vmem:[%s298 + $0x14c0] sm:$0xff]
        %v1607 = vld [vmem:[%s298 + $0x14c8] sm:$0xff]
        %v1608 = vld [vmem:[%s298 + $0x14d0] sm:$0xff]
        %v1609 = vld [vmem:[%s298 + $0x14d8] sm:$0xff]
        %v1610 = vld [vmem:[%s298 + $0x14e0] sm:$0xff]
        %v1611 = vld [vmem:[%s298 + $0x14e8] sm:$0xff]
        %v1612 = vld [vmem:[%s298 + $0x14f0] sm:$0xff]
        %v1613 = vld [vmem:[%s298 + $0x14f8] sm:$0xff]
        %v1614 = vld [vmem:[%s298 + $0x1500] sm:$0xff]
        %v1615 = vld [vmem:[%s298 + $0x1508] sm:$0xff]
        %v1616 = vld [vmem:[%s298 + $0x1510] sm:$0xff]
        %v1617 = vld [vmem:[%s298 + $0x1518] sm:$0xff]
        %v1618 = vld [vmem:[%s298 + $0x1520] sm:$0xff]
        %v1619 = vld [vmem:[%s298 + $0x1528] sm:$0xff]
        %v1620 = vld [vmem:[%s298 + $0x1530] sm:$0xff]
        %v1621 = vld [vmem:[%s298 + $0x1538] sm:$0xff]
        %v1622 = vld [vmem:[%s298 + $0x1540] sm:$0xff]
        %v1623 = vld [vmem:[%s298 + $0x1548] sm:$0xff]
        %v1624 = vld [vmem:[%s298 + $0x1550] sm:$0xff]
        %v1625 = vld [vmem:[%s298 + $0x1558] sm:$0xff]
        %v1626 = vld [vmem:[%s298 + $0x1560] sm:$0xff]
        %v1627 = vld [vmem:[%s298 + $0x1568] sm:$0xff]
        %v1628 = vld [vmem:[%s298 + $0x1570] sm:$0xff]
        %v1629 = vld [vmem:[%s298 + $0x1578] sm:$0xff]
        %v1630 = vld [vmem:[%s298 + $0x1580] sm:$0xff]
        %v1631 = vld [vmem:[%s298 + $0x1588] sm:$0xff]
        %v1632 = vld [vmem:[%s298 + $0x1590] sm:$0xff]
        %v1633 = vld [vmem:[%s298 + $0x1598] sm:$0xff]
        %v1634 = vld [vmem:[%s298 + $0x15a0] sm:$0xff]
        %v1635 = vld [vmem:[%s298 + $0x15a8] sm:$0xff]
        %v1636 = vld [vmem:[%s298 + $0x15b0] sm:$0xff]
        %v1637 = vld [vmem:[%s298 + $0x15b8] sm:$0xff]
        %v1638 = vld [vmem:[%s298 + $0x15c0] sm:$0xff]
        %v1639 = vld [vmem:[%s298 + $0x15c8] sm:$0xff]
        %v1640 = vld [vmem:[%s298 + $0x15d0] sm:$0xff]
        %v1641 = vld [vmem:[%s298 + $0x15d8] sm:$0xff]
        %v1642 = vld [vmem:[%s298 + $0x15e0] sm:$0xff]
        %v1643 = vld [vmem:[%s298 + $0x15e8] sm:$0xff]
        %v1644 = vld [vmem:[%s298 + $0x15f0] sm:$0xff]
        %v1645 = vld [vmem:[%s298 + $0x15f8] sm:$0xff]
        %v1646 = vld [vmem:[%s307] sm:$0xff]
        %v1647 = vld [vmem:[%s307 + $0x8] sm:$0xff]
        %v1648 = vld [vmem:[%s307 + $0x10] sm:$0x3f]
        %v1652 = vlaneseq
        %v1653 = vshrl.u32 %v1652, 7
        %v1654 = vsub.s32 0, %v1653
        %v1655 = vrot.slane %v1646, %v1654
        %v1656 = vlaneseq
        %v1657 = vshrl.u32 %v1656, 7
        %v1658 = vsub.s32 1, %v1657
        %v1659 = vrot.slane %v1646, %v1658
        %v1660 = vlaneseq
        %v1661 = vshrl.u32 %v1660, 7
        %v1662 = vsub.s32 2, %v1661
        %v1663 = vrot.slane %v1646, %v1662
        %v1664 = vlaneseq
        %v1665 = vshrl.u32 %v1664, 7
        %v1666 = vsub.s32 3, %v1665
        %v1667 = vrot.slane %v1646, %v1666
        %v1668 = vlaneseq
        %v1669 = vshrl.u32 %v1668, 7
        %v1670 = vsub.s32 4, %v1669
        %v1671 = vrot.slane %v1646, %v1670
        %v1672 = vlaneseq
        %v1673 = vshrl.u32 %v1672, 7
        %v1674 = vsub.s32 5, %v1673
        %v1675 = vrot.slane %v1646, %v1674
        %v1676 = vlaneseq
        %v1677 = vshrl.u32 %v1676, 7
        %v1678 = vsub.s32 6, %v1677
        %v1679 = vrot.slane %v1646, %v1678
        %v1680 = vlaneseq
        %v1681 = vshrl.u32 %v1680, 7
        %v1682 = vsub.s32 7, %v1681
        %v1683 = vrot.slane %v1646, %v1682
        %v1684 = vlaneseq
        %v1685 = vshrl.u32 %v1684, 7
        %v1686 = vsub.s32 0, %v1685
        %v1687 = vrot.slane %v1647, %v1686
        %v1688 = vlaneseq
        %v1689 = vshrl.u32 %v1688, 7
        %v1690 = vsub.s32 1, %v1689
        %v1691 = vrot.slane %v1647, %v1690
        %v1692 = vlaneseq
        %v1693 = vshrl.u32 %v1692, 7
        %v1694 = vsub.s32 2, %v1693
        %v1695 = vrot.slane %v1647, %v1694
        %v1696 = vlaneseq
        %v1697 = vshrl.u32 %v1696, 7
        %v1698 = vsub.s32 3, %v1697
        %v1699 = vrot.slane %v1647, %v1698
        %v1700 = vlaneseq
        %v1701 = vshrl.u32 %v1700, 7
        %v1702 = vsub.s32 4, %v1701
        %v1703 = vrot.slane %v1647, %v1702
        %v1704 = vlaneseq
        %v1705 = vshrl.u32 %v1704, 7
        %v1706 = vsub.s32 5, %v1705
        %v1707 = vrot.slane %v1647, %v1706
        %v1708 = vlaneseq
        %v1709 = vshrl.u32 %v1708, 7
        %v1710 = vsub.s32 6, %v1709
        %v1711 = vrot.slane %v1647, %v1710
        %v1712 = vlaneseq
        %v1713 = vshrl.u32 %v1712, 7
        %v1714 = vsub.s32 7, %v1713
        %v1715 = vrot.slane %v1647, %v1714
        %v1716 = vlaneseq
        %v1717 = vshrl.u32 %v1716, 7
        %v1718 = vsub.s32 0, %v1717
        %v1719 = vrot.slane %v1648, %v1718
        %v1720 = vlaneseq
        %v1721 = vshrl.u32 %v1720, 7
        %v1722 = vsub.s32 1, %v1721
        %v1723 = vrot.slane %v1648, %v1722
        %v1724 = vlaneseq
        %v1725 = vshrl.u32 %v1724, 7
        %v1726 = vsub.s32 2, %v1725
        %v1727 = vrot.slane %v1648, %v1726
        %v1728 = vlaneseq
        %v1729 = vshrl.u32 %v1728, 7
        %v1730 = vsub.s32 3, %v1729
        %v1731 = vrot.slane %v1648, %v1730
        %v1732 = vlaneseq
        %v1733 = vshrl.u32 %v1732, 7
        %v1734 = vsub.s32 4, %v1733
        %v1735 = vrot.slane %v1648, %v1734
        %v1736 = vlaneseq
        %v1737 = vshrl.u32 %v1736, 7
        %v1738 = vsub.s32 5, %v1737
        %v1739 = vrot.slane %v1648, %v1738
        %v2466 = vunpack.c.l.b16 %v942
        %v2467 = vunpack.c.h.b16 %v942
        %v2468 = vunpack.c.l.b16 %v943
        %v2469 = vunpack.c.h.b16 %v943
        %v2470 = vunpack.c.l.b16 %v944
        %v2471 = vunpack.c.h.b16 %v944
        %v2472 = vunpack.c.l.b16 %v945
        %v2473 = vunpack.c.h.b16 %v945
        %v2474 = vunpack.c.l.b16 %v946
        %v2475 = vunpack.c.h.b16 %v946
        %v2476 = vunpack.c.l.b16 %v947
        %v2477 = vunpack.c.h.b16 %v947
        %v2478 = vunpack.c.l.b16 %v948
        %v2479 = vunpack.c.h.b16 %v948
        %v2480 = vunpack.c.l.b16 %v949
        %v2481 = vunpack.c.h.b16 %v949
        %v2482 = vunpack.c.l.b16 %v950
        %v2483 = vunpack.c.h.b16 %v950
        %v2484 = vunpack.c.l.b16 %v951
        %v2485 = vunpack.c.h.b16 %v951
        %v2486 = vunpack.c.l.b16 %v952
        %v2487 = vunpack.c.h.b16 %v952
        %v2488 = vunpack.c.l.b16 %v953
        %v2489 = vunpack.c.h.b16 %v953
        %v2490 = vunpack.c.l.b16 %v954
        %v2491 = vunpack.c.h.b16 %v954
        %v2492 = vunpack.c.l.b16 %v955
        %v2493 = vunpack.c.h.b16 %v955
        %v2494 = vunpack.c.l.b16 %v956
        %v2495 = vunpack.c.h.b16 %v956
        %v2496 = vunpack.c.l.b16 %v957
        %v2497 = vunpack.c.h.b16 %v957
        %v2498 = vunpack.c.l.b16 %v958
        %v2499 = vunpack.c.h.b16 %v958
        %v2500 = vunpack.c.l.b16 %v959
        %v2501 = vunpack.c.h.b16 %v959
        %v2502 = vunpack.c.l.b16 %v960
        %v2503 = vunpack.c.h.b16 %v960
        %v2504 = vunpack.c.l.b16 %v961
        %v2505 = vunpack.c.h.b16 %v961
        %v2506 = vunpack.c.l.b16 %v962
        %v2507 = vunpack.c.h.b16 %v962
        %v2508 = vunpack.c.l.b16 %v963
        %v2509 = vunpack.c.h.b16 %v963
        %v2510 = vunpack.c.l.b16 %v964
        %v2511 = vunpack.c.h.b16 %v964
        %v2512 = vunpack.c.l.b16 %v965
        %v2513 = vunpack.c.h.b16 %v965
        %v2514 = vunpack.c.l.b16 %v966
        %v2515 = vunpack.c.h.b16 %v966
        %v2516 = vunpack.c.l.b16 %v967
        %v2517 = vunpack.c.h.b16 %v967
        %v2518 = vunpack.c.l.b16 %v968
        %v2519 = vunpack.c.h.b16 %v968
        %v2520 = vunpack.c.l.b16 %v969
        %v2521 = vunpack.c.h.b16 %v969
        %v2522 = vunpack.c.l.b16 %v970
        %v2523 = vunpack.c.h.b16 %v970
        %v2524 = vunpack.c.l.b16 %v971
        %v2525 = vunpack.c.h.b16 %v971
        %v2526 = vunpack.c.l.b16 %v972
        %v2527 = vunpack.c.h.b16 %v972
        %v2528 = vunpack.c.l.b16 %v973
        %v2529 = vunpack.c.h.b16 %v973
        %v2530 = vunpack.c.l.b16 %v974
        %v2531 = vunpack.c.h.b16 %v974
        %v2532 = vunpack.c.l.b16 %v975
        %v2533 = vunpack.c.h.b16 %v975
        %v2534 = vunpack.c.l.b16 %v976
        %v2535 = vunpack.c.h.b16 %v976
        %v2536 = vunpack.c.l.b16 %v977
        %v2537 = vunpack.c.h.b16 %v977
        %v2538 = vunpack.c.l.b16 %v978
        %v2539 = vunpack.c.h.b16 %v978
        %v2540 = vunpack.c.l.b16 %v979
        %v2541 = vunpack.c.h.b16 %v979
        %v2542 = vunpack.c.l.b16 %v980
        %v2543 = vunpack.c.h.b16 %v980
        %v2544 = vunpack.c.l.b16 %v981
        %v2545 = vunpack.c.h.b16 %v981
        %v2546 = vunpack.c.l.b16 %v982
        %v2547 = vunpack.c.h.b16 %v982
        %v2548 = vunpack.c.l.b16 %v983
        %v2549 = vunpack.c.h.b16 %v983
        %v2550 = vunpack.c.l.b16 %v984
        %v2551 = vunpack.c.h.b16 %v984
        %v2552 = vunpack.c.l.b16 %v985
        %v2553 = vunpack.c.h.b16 %v985
        %v2554 = vunpack.c.l.b16 %v986
        %v2555 = vunpack.c.h.b16 %v986
        %v2556 = vunpack.c.l.b16 %v987
        %v2557 = vunpack.c.h.b16 %v987
        %v2558 = vunpack.c.l.b16 %v988
        %v2559 = vunpack.c.h.b16 %v988
        %v2560 = vunpack.c.l.b16 %v989
        %v2561 = vunpack.c.h.b16 %v989
        %v2562 = vunpack.c.l.b16 %v990
        %v2563 = vunpack.c.h.b16 %v990
        %v2564 = vunpack.c.l.b16 %v991
        %v2565 = vunpack.c.h.b16 %v991
        %v2566 = vunpack.c.l.b16 %v992
        %v2567 = vunpack.c.h.b16 %v992
        %v2568 = vunpack.c.l.b16 %v993
        %v2569 = vunpack.c.h.b16 %v993
        %v2570 = vunpack.c.l.b16 %v994
        %v2571 = vunpack.c.h.b16 %v994
        %v2572 = vunpack.c.l.b16 %v995
        %v2573 = vunpack.c.h.b16 %v995
        %v2574 = vunpack.c.l.b16 %v996
        %v2575 = vunpack.c.h.b16 %v996
        %v2576 = vunpack.c.l.b16 %v997
        %v2577 = vunpack.c.h.b16 %v997
        %v2578 = vunpack.c.l.b16 %v998
        %v2579 = vunpack.c.h.b16 %v998
        %v2580 = vunpack.c.l.b16 %v999
        %v2581 = vunpack.c.h.b16 %v999
        %v2582 = vunpack.c.l.b16 %v1000
        %v2583 = vunpack.c.h.b16 %v1000
        %v2584 = vunpack.c.l.b16 %v1001
        %v2585 = vunpack.c.h.b16 %v1001
        %v2586 = vunpack.c.l.b16 %v1002
        %v2587 = vunpack.c.h.b16 %v1002
        %v2588 = vunpack.c.l.b16 %v1003
        %v2589 = vunpack.c.h.b16 %v1003
        %v2590 = vunpack.c.l.b16 %v1004
        %v2591 = vunpack.c.h.b16 %v1004
        %v2592 = vunpack.c.l.b16 %v1005
        %v2593 = vunpack.c.h.b16 %v1005
        %v2594 = vunpack.c.l.b16 %v1006
        %v2595 = vunpack.c.h.b16 %v1006
        %v2596 = vunpack.c.l.b16 %v1007
        %v2597 = vunpack.c.h.b16 %v1007
        %v2598 = vunpack.c.l.b16 %v1008
        %v2599 = vunpack.c.h.b16 %v1008
        %v2600 = vunpack.c.l.b16 %v1009
        %v2601 = vunpack.c.h.b16 %v1009
        %v2602 = vunpack.c.l.b16 %v1010
        %v2603 = vunpack.c.h.b16 %v1010
        %v2604 = vunpack.c.l.b16 %v1011
        %v2605 = vunpack.c.h.b16 %v1011
        %v2606 = vunpack.c.l.b16 %v1012
        %v2607 = vunpack.c.h.b16 %v1012
        %v2608 = vunpack.c.l.b16 %v1013
        %v2609 = vunpack.c.h.b16 %v1013
        %v2610 = vunpack.c.l.b16 %v1014
        %v2611 = vunpack.c.h.b16 %v1014
        %v2612 = vunpack.c.l.b16 %v1015
        %v2613 = vunpack.c.h.b16 %v1015
        %v2614 = vunpack.c.l.b16 %v1016
        %v2615 = vunpack.c.h.b16 %v1016
        %v2616 = vunpack.c.l.b16 %v1017
        %v2617 = vunpack.c.h.b16 %v1017
        %v2618 = vunpack.c.l.b16 %v1018
        %v2619 = vunpack.c.h.b16 %v1018
        %v2620 = vunpack.c.l.b16 %v1019
        %v2621 = vunpack.c.h.b16 %v1019
        %v2622 = vunpack.c.l.b16 %v1020
        %v2623 = vunpack.c.h.b16 %v1020
        %v2624 = vunpack.c.l.b16 %v1021
        %v2625 = vunpack.c.h.b16 %v1021
        %v2626 = vunpack.c.l.b16 %v1022
        %v2627 = vunpack.c.h.b16 %v1022
        %v2628 = vunpack.c.l.b16 %v1023
        %v2629 = vunpack.c.h.b16 %v1023
        %v2630 = vunpack.c.l.b16 %v1024
        %v2631 = vunpack.c.h.b16 %v1024
        %v2632 = vunpack.c.l.b16 %v1025
        %v2633 = vunpack.c.h.b16 %v1025
        %v2634 = vunpack.c.l.b16 %v1026
        %v2635 = vunpack.c.h.b16 %v1026
        %v2636 = vunpack.c.l.b16 %v1027
        %v2637 = vunpack.c.h.b16 %v1027
        %v2638 = vunpack.c.l.b16 %v1028
        %v2639 = vunpack.c.h.b16 %v1028
        %v2640 = vunpack.c.l.b16 %v1029
        %v2641 = vunpack.c.h.b16 %v1029
        %v2642 = vunpack.c.l.b16 %v1030
        %v2643 = vunpack.c.h.b16 %v1030
        %v2644 = vunpack.c.l.b16 %v1031
        %v2645 = vunpack.c.h.b16 %v1031
        %v2646 = vunpack.c.l.b16 %v1032
        %v2647 = vunpack.c.h.b16 %v1032
        %v2648 = vunpack.c.l.b16 %v1033
        %v2649 = vunpack.c.h.b16 %v1033
        %v2650 = vunpack.c.l.b16 %v1034
        %v2651 = vunpack.c.h.b16 %v1034
        %v2652 = vunpack.c.l.b16 %v1035
        %v2653 = vunpack.c.h.b16 %v1035
        %v2654 = vunpack.c.l.b16 %v1036
        %v2655 = vunpack.c.h.b16 %v1036
        %v2656 = vunpack.c.l.b16 %v1037
        %v2657 = vunpack.c.h.b16 %v1037
        %v2658 = vunpack.c.l.b16 %v1038
        %v2659 = vunpack.c.h.b16 %v1038
        %v2660 = vunpack.c.l.b16 %v1039
        %v2661 = vunpack.c.h.b16 %v1039
        %v2662 = vunpack.c.l.b16 %v1040
        %v2663 = vunpack.c.h.b16 %v1040
        %v2664 = vunpack.c.l.b16 %v1041
        %v2665 = vunpack.c.h.b16 %v1041
        %v2666 = vunpack.c.l.b16 %v1042
        %v2667 = vunpack.c.h.b16 %v1042
        %v2668 = vunpack.c.l.b16 %v1043
        %v2669 = vunpack.c.h.b16 %v1043
        %v2670 = vunpack.c.l.b16 %v1044
        %v2671 = vunpack.c.h.b16 %v1044
        %v2672 = vunpack.c.l.b16 %v1045
        %v2673 = vunpack.c.h.b16 %v1045
        %v2674 = vunpack.c.l.b16 %v1046
        %v2675 = vunpack.c.h.b16 %v1046
        %v2676 = vunpack.c.l.b16 %v1047
        %v2677 = vunpack.c.h.b16 %v1047
        %v2678 = vunpack.c.l.b16 %v1048
        %v2679 = vunpack.c.h.b16 %v1048
        %v2680 = vunpack.c.l.b16 %v1049
        %v2681 = vunpack.c.h.b16 %v1049
        %v2682 = vunpack.c.l.b16 %v1050
        %v2683 = vunpack.c.h.b16 %v1050
        %v2684 = vunpack.c.l.b16 %v1051
        %v2685 = vunpack.c.h.b16 %v1051
        %v2686 = vunpack.c.l.b16 %v1052
        %v2687 = vunpack.c.h.b16 %v1052
        %v2688 = vunpack.c.l.b16 %v1053
        %v2689 = vunpack.c.h.b16 %v1053
        %v2690 = vunpack.c.l.b16 %v1054
        %v2691 = vunpack.c.h.b16 %v1054
        %v2692 = vunpack.c.l.b16 %v1055
        %v2693 = vunpack.c.h.b16 %v1055
        %v2694 = vunpack.c.l.b16 %v1056
        %v2695 = vunpack.c.h.b16 %v1056
        %v2696 = vunpack.c.l.b16 %v1057
        %v2697 = vunpack.c.h.b16 %v1057
        %v2698 = vunpack.c.l.b16 %v1058
        %v2699 = vunpack.c.h.b16 %v1058
        %v2700 = vunpack.c.l.b16 %v1059
        %v2701 = vunpack.c.h.b16 %v1059
        %v2702 = vunpack.c.l.b16 %v1060
        %v2703 = vunpack.c.h.b16 %v1060
        %v2704 = vunpack.c.l.b16 %v1061
        %v2705 = vunpack.c.h.b16 %v1061
        %v2706 = vunpack.c.l.b16 %v1062
        %v2707 = vunpack.c.h.b16 %v1062
        %v2708 = vunpack.c.l.b16 %v1063
        %v2709 = vunpack.c.h.b16 %v1063
        %v2710 = vunpack.c.l.b16 %v1064
        %v2711 = vunpack.c.h.b16 %v1064
        %v2712 = vunpack.c.l.b16 %v1065
        %v2713 = vunpack.c.h.b16 %v1065
        %v2714 = vunpack.c.l.b16 %v1066
        %v2715 = vunpack.c.h.b16 %v1066
        %v2716 = vunpack.c.l.b16 %v1067
        %v2717 = vunpack.c.h.b16 %v1067
        %v2718 = vunpack.c.l.b16 %v1068
        %v2719 = vunpack.c.h.b16 %v1068
        %v2720 = vunpack.c.l.b16 %v1069
        %v2721 = vunpack.c.h.b16 %v1069
        %v2722 = vunpack.c.l.b16 %v1070
        %v2723 = vunpack.c.h.b16 %v1070
        %v2724 = vunpack.c.l.b16 %v1071
        %v2725 = vunpack.c.h.b16 %v1071
        %v2726 = vunpack.c.l.b16 %v1072
        %v2727 = vunpack.c.h.b16 %v1072
        %v2728 = vunpack.c.l.b16 %v1073
        %v2729 = vunpack.c.h.b16 %v1073
        %v2730 = vunpack.c.l.b16 %v1074
        %v2731 = vunpack.c.h.b16 %v1074
        %v2732 = vunpack.c.l.b16 %v1075
        %v2733 = vunpack.c.h.b16 %v1075
        %v2734 = vunpack.c.l.b16 %v1076
        %v2735 = vunpack.c.h.b16 %v1076
        %v2736 = vunpack.c.l.b16 %v1077
        %v2737 = vunpack.c.h.b16 %v1077
        %v2738 = vunpack.c.l.b16 %v1078
        %v2739 = vunpack.c.h.b16 %v1078
        %v2740 = vunpack.c.l.b16 %v1079
        %v2741 = vunpack.c.h.b16 %v1079
        %v2742 = vunpack.c.l.b16 %v1080
        %v2743 = vunpack.c.h.b16 %v1080
        %v2744 = vunpack.c.l.b16 %v1081
        %v2745 = vunpack.c.h.b16 %v1081
        %v2746 = vunpack.c.l.b16 %v1082
        %v2747 = vunpack.c.h.b16 %v1082
        %v2748 = vunpack.c.l.b16 %v1083
        %v2749 = vunpack.c.h.b16 %v1083
        %v2750 = vunpack.c.l.b16 %v1084
        %v2751 = vunpack.c.h.b16 %v1084
        %v2752 = vunpack.c.l.b16 %v1085
        %v2753 = vunpack.c.h.b16 %v1085
        %v2754 = vunpack.c.l.b16 %v1086
        %v2755 = vunpack.c.h.b16 %v1086
        %v2756 = vunpack.c.l.b16 %v1087
        %v2757 = vunpack.c.h.b16 %v1087
        %v2758 = vunpack.c.l.b16 %v1088
        %v2759 = vunpack.c.h.b16 %v1088
        %v2760 = vunpack.c.l.b16 %v1089
        %v2761 = vunpack.c.h.b16 %v1089
        %v2762 = vunpack.c.l.b16 %v1090
        %v2763 = vunpack.c.h.b16 %v1090
        %v2764 = vunpack.c.l.b16 %v1091
        %v2765 = vunpack.c.h.b16 %v1091
        %v2766 = vunpack.c.l.b16 %v1092
        %v2767 = vunpack.c.h.b16 %v1092
        %v2768 = vunpack.c.l.b16 %v1093
        %v2769 = vunpack.c.h.b16 %v1093
        %v2770 = vunpack.c.l.b16 %v1094
        %v2771 = vunpack.c.h.b16 %v1094
        %v2772 = vunpack.c.l.b16 %v1095
        %v2773 = vunpack.c.h.b16 %v1095
        %v2774 = vunpack.c.l.b16 %v1096
        %v2775 = vunpack.c.h.b16 %v1096
        %v2776 = vunpack.c.l.b16 %v1097
        %v2777 = vunpack.c.h.b16 %v1097
        %v2778 = vunpack.c.l.b16 %v1098
        %v2779 = vunpack.c.h.b16 %v1098
        %v2780 = vunpack.c.l.b16 %v1099
        %v2781 = vunpack.c.h.b16 %v1099
        %v2782 = vunpack.c.l.b16 %v1100
        %v2783 = vunpack.c.h.b16 %v1100
        %v2784 = vunpack.c.l.b16 %v1101
        %v2785 = vunpack.c.h.b16 %v1101
        %v2786 = vunpack.c.l.b16 %v1102
        %v2787 = vunpack.c.h.b16 %v1102
        %v2788 = vunpack.c.l.b16 %v1103
        %v2789 = vunpack.c.h.b16 %v1103
        %v2790 = vunpack.c.l.b16 %v1104
        %v2791 = vunpack.c.h.b16 %v1104
        %v2792 = vunpack.c.l.b16 %v1105
        %v2793 = vunpack.c.h.b16 %v1105
        %v2794 = vunpack.c.l.b16 %v1106
        %v2795 = vunpack.c.h.b16 %v1106
        %v2796 = vunpack.c.l.b16 %v1107
        %v2797 = vunpack.c.h.b16 %v1107
        %v2798 = vunpack.c.l.b16 %v1108
        %v2799 = vunpack.c.h.b16 %v1108
        %v2800 = vunpack.c.l.b16 %v1109
        %v2801 = vunpack.c.h.b16 %v1109
        %v2802 = vunpack.c.l.b16 %v1110
        %v2803 = vunpack.c.h.b16 %v1110
        %v2804 = vunpack.c.l.b16 %v1111
        %v2805 = vunpack.c.h.b16 %v1111
        %v2806 = vunpack.c.l.b16 %v1112
        %v2807 = vunpack.c.h.b16 %v1112
        %v2808 = vunpack.c.l.b16 %v1113
        %v2809 = vunpack.c.h.b16 %v1113
        %v2810 = vunpack.c.l.b16 %v1114
        %v2811 = vunpack.c.h.b16 %v1114
        %v2812 = vunpack.c.l.b16 %v1115
        %v2813 = vunpack.c.h.b16 %v1115
        %v2814 = vunpack.c.l.b16 %v1116
        %v2815 = vunpack.c.h.b16 %v1116
        %v2816 = vunpack.c.l.b16 %v1117
        %v2817 = vunpack.c.h.b16 %v1117
        %v2818 = vunpack.c.l.b16 %v1118
        %v2819 = vunpack.c.h.b16 %v1118
        %v2820 = vunpack.c.l.b16 %v1119
        %v2821 = vunpack.c.h.b16 %v1119
        %v2822 = vunpack.c.l.b16 %v1120
        %v2823 = vunpack.c.h.b16 %v1120
        %v2824 = vunpack.c.l.b16 %v1121
        %v2825 = vunpack.c.h.b16 %v1121
        %v2826 = vunpack.c.l.b16 %v1122
        %v2827 = vunpack.c.h.b16 %v1122
        %v2828 = vunpack.c.l.b16 %v1123
        %v2829 = vunpack.c.h.b16 %v1123
        %v2830 = vunpack.c.l.b16 %v1124
        %v2831 = vunpack.c.h.b16 %v1124
        %v2832 = vunpack.c.l.b16 %v1125
        %v2833 = vunpack.c.h.b16 %v1125
        %v2834 = vunpack.c.l.b16 %v1126
        %v2835 = vunpack.c.h.b16 %v1126
        %v2836 = vunpack.c.l.b16 %v1127
        %v2837 = vunpack.c.h.b16 %v1127
        %v2838 = vunpack.c.l.b16 %v1128
        %v2839 = vunpack.c.h.b16 %v1128
        %v2840 = vunpack.c.l.b16 %v1129
        %v2841 = vunpack.c.h.b16 %v1129
        %v2842 = vunpack.c.l.b16 %v1130
        %v2843 = vunpack.c.h.b16 %v1130
        %v2844 = vunpack.c.l.b16 %v1131
        %v2845 = vunpack.c.h.b16 %v1131
        %v2846 = vunpack.c.l.b16 %v1132
        %v2847 = vunpack.c.h.b16 %v1132
        %v2848 = vunpack.c.l.b16 %v1133
        %v2849 = vunpack.c.h.b16 %v1133
        %v2850 = vunpack.c.l.b16 %v1134
        %v2851 = vunpack.c.h.b16 %v1134
        %v2852 = vunpack.c.l.b16 %v1135
        %v2853 = vunpack.c.h.b16 %v1135
        %v2854 = vunpack.c.l.b16 %v1136
        %v2855 = vunpack.c.h.b16 %v1136
        %v2856 = vunpack.c.l.b16 %v1137
        %v2857 = vunpack.c.h.b16 %v1137
        %v2858 = vunpack.c.l.b16 %v1138
        %v2859 = vunpack.c.h.b16 %v1138
        %v2860 = vunpack.c.l.b16 %v1139
        %v2861 = vunpack.c.h.b16 %v1139
        %v2862 = vunpack.c.l.b16 %v1140
        %v2863 = vunpack.c.h.b16 %v1140
        %v2864 = vunpack.c.l.b16 %v1141
        %v2865 = vunpack.c.h.b16 %v1141
        %v2866 = vunpack.c.l.b16 %v1142
        %v2867 = vunpack.c.h.b16 %v1142
        %v2868 = vunpack.c.l.b16 %v1143
        %v2869 = vunpack.c.h.b16 %v1143
        %v2870 = vunpack.c.l.b16 %v1144
        %v2871 = vunpack.c.h.b16 %v1144
        %v2872 = vunpack.c.l.b16 %v1145
        %v2873 = vunpack.c.h.b16 %v1145
        %v2874 = vunpack.c.l.b16 %v1146
        %v2875 = vunpack.c.h.b16 %v1146
        %v2876 = vunpack.c.l.b16 %v1147
        %v2877 = vunpack.c.h.b16 %v1147
        %v2878 = vunpack.c.l.b16 %v1148
        %v2879 = vunpack.c.h.b16 %v1148
        %v2880 = vunpack.c.l.b16 %v1149
        %v2881 = vunpack.c.h.b16 %v1149
        %v2882 = vunpack.c.l.b16 %v1150
        %v2883 = vunpack.c.h.b16 %v1150
        %v2884 = vunpack.c.l.b16 %v1151
        %v2885 = vunpack.c.h.b16 %v1151
        %v2886 = vunpack.c.l.b16 %v1152
        %v2887 = vunpack.c.h.b16 %v1152
        %v2888 = vunpack.c.l.b16 %v1153
        %v2889 = vunpack.c.h.b16 %v1153
        %v2890 = vunpack.c.l.b16 %v1154
        %v2891 = vunpack.c.h.b16 %v1154
        %v2892 = vunpack.c.l.b16 %v1155
        %v2893 = vunpack.c.h.b16 %v1155
        %v2894 = vunpack.c.l.b16 %v1156
        %v2895 = vunpack.c.h.b16 %v1156
        %v2896 = vunpack.c.l.b16 %v1157
        %v2897 = vunpack.c.h.b16 %v1157
        %v2898 = vunpack.c.l.b16 %v1158
        %v2899 = vunpack.c.h.b16 %v1158
        %v2900 = vunpack.c.l.b16 %v1159
        %v2901 = vunpack.c.h.b16 %v1159
        %v2902 = vunpack.c.l.b16 %v1160
        %v2903 = vunpack.c.h.b16 %v1160
        %v2904 = vunpack.c.l.b16 %v1161
        %v2905 = vunpack.c.h.b16 %v1161
        %v2906 = vunpack.c.l.b16 %v1162
        %v2907 = vunpack.c.h.b16 %v1162
        %v2908 = vunpack.c.l.b16 %v1163
        %v2909 = vunpack.c.h.b16 %v1163
        %v2910 = vunpack.c.l.b16 %v1164
        %v2911 = vunpack.c.h.b16 %v1164
        %v2912 = vunpack.c.l.b16 %v1165
        %v2913 = vunpack.c.h.b16 %v1165
        %v2914 = vunpack.c.l.b16 %v1166
        %v2915 = vunpack.c.h.b16 %v1166
        %v2916 = vunpack.c.l.b16 %v1167
        %v2917 = vunpack.c.h.b16 %v1167
        %v2918 = vunpack.c.l.b16 %v1168
        %v2919 = vunpack.c.h.b16 %v1168
        %v2920 = vunpack.c.l.b16 %v1169
        %v2921 = vunpack.c.h.b16 %v1169
        %v2922 = vunpack.c.l.b16 %v1170
        %v2923 = vunpack.c.h.b16 %v1170
        %v2924 = vunpack.c.l.b16 %v1171
        %v2925 = vunpack.c.h.b16 %v1171
        %v2926 = vunpack.c.l.b16 %v1172
        %v2927 = vunpack.c.h.b16 %v1172
        %v2928 = vunpack.c.l.b16 %v1173
        %v2929 = vunpack.c.h.b16 %v1173
        %v2930 = vunpack.c.l.b16 %v1174
        %v2931 = vunpack.c.h.b16 %v1174
        %v2932 = vunpack.c.l.b16 %v1175
        %v2933 = vunpack.c.h.b16 %v1175
        %v2934 = vunpack.c.l.b16 %v1176
        %v2935 = vunpack.c.h.b16 %v1176
        %v2936 = vunpack.c.l.b16 %v1177
        %v2937 = vunpack.c.h.b16 %v1177
        %v2938 = vunpack.c.l.b16 %v1178
        %v2939 = vunpack.c.h.b16 %v1178
        %v2940 = vunpack.c.l.b16 %v1179
        %v2941 = vunpack.c.h.b16 %v1179
        %v2942 = vunpack.c.l.b16 %v1180
        %v2943 = vunpack.c.h.b16 %v1180
        %v2944 = vunpack.c.l.b16 %v1181
        %v2945 = vunpack.c.h.b16 %v1181
        %v2946 = vunpack.c.l.b16 %v1182
        %v2947 = vunpack.c.h.b16 %v1182
        %v2948 = vunpack.c.l.b16 %v1183
        %v2949 = vunpack.c.h.b16 %v1183
        %v2950 = vunpack.c.l.b16 %v1184
        %v2951 = vunpack.c.h.b16 %v1184
        %v2952 = vunpack.c.l.b16 %v1185
        %v2953 = vunpack.c.h.b16 %v1185
        %v2954 = vunpack.c.l.b16 %v1186
        %v2955 = vunpack.c.h.b16 %v1186
        %v2956 = vunpack.c.l.b16 %v1187
        %v2957 = vunpack.c.h.b16 %v1187
        %v2958 = vunpack.c.l.b16 %v1188
        %v2959 = vunpack.c.h.b16 %v1188
        %v2960 = vunpack.c.l.b16 %v1189
        %v2961 = vunpack.c.h.b16 %v1189
        %v2962 = vunpack.c.l.b16 %v1190
        %v2963 = vunpack.c.h.b16 %v1190
        %v2964 = vunpack.c.l.b16 %v1191
        %v2965 = vunpack.c.h.b16 %v1191
        %v2966 = vunpack.c.l.b16 %v1192
        %v2967 = vunpack.c.h.b16 %v1192
        %v2968 = vunpack.c.l.b16 %v1193
        %v2969 = vunpack.c.h.b16 %v1193
        %v2970 = vunpack.c.l.b16 %v1194
        %v2971 = vunpack.c.h.b16 %v1194
        %v2972 = vunpack.c.l.b16 %v1195
        %v2973 = vunpack.c.h.b16 %v1195
        %v2974 = vunpack.c.l.b16 %v1196
        %v2975 = vunpack.c.h.b16 %v1196
        %v2976 = vunpack.c.l.b16 %v1197
        %v2977 = vunpack.c.h.b16 %v1197
        %v2978 = vunpack.c.l.b16 %v1198
        %v2979 = vunpack.c.h.b16 %v1198
        %v2980 = vunpack.c.l.b16 %v1199
        %v2981 = vunpack.c.h.b16 %v1199
        %v2982 = vunpack.c.l.b16 %v1200
        %v2983 = vunpack.c.h.b16 %v1200
        %v2984 = vunpack.c.l.b16 %v1201
        %v2985 = vunpack.c.h.b16 %v1201
        %v2986 = vunpack.c.l.b16 %v1202
        %v2987 = vunpack.c.h.b16 %v1202
        %v2988 = vunpack.c.l.b16 %v1203
        %v2989 = vunpack.c.h.b16 %v1203
        %v2990 = vunpack.c.l.b16 %v1204
        %v2991 = vunpack.c.h.b16 %v1204
        %v2992 = vunpack.c.l.b16 %v1205
        %v2993 = vunpack.c.h.b16 %v1205
        %v2994 = vunpack.c.l.b16 %v1206
        %v2995 = vunpack.c.h.b16 %v1206
        %v2996 = vunpack.c.l.b16 %v1207
        %v2997 = vunpack.c.h.b16 %v1207
        %v2998 = vunpack.c.l.b16 %v1208
        %v2999 = vunpack.c.h.b16 %v1208
        %v3000 = vunpack.c.l.b16 %v1209
        %v3001 = vunpack.c.h.b16 %v1209
        %v3002 = vunpack.c.l.b16 %v1210
        %v3003 = vunpack.c.h.b16 %v1210
        %v3004 = vunpack.c.l.b16 %v1211
        %v3005 = vunpack.c.h.b16 %v1211
        %v3006 = vunpack.c.l.b16 %v1212
        %v3007 = vunpack.c.h.b16 %v1212
        %v3008 = vunpack.c.l.b16 %v1213
        %v3009 = vunpack.c.h.b16 %v1213
        %v3010 = vunpack.c.l.b16 %v1214
        %v3011 = vunpack.c.h.b16 %v1214
        %v3012 = vunpack.c.l.b16 %v1215
        %v3013 = vunpack.c.h.b16 %v1215
        %v3014 = vunpack.c.l.b16 %v1216
        %v3015 = vunpack.c.h.b16 %v1216
        %v3016 = vunpack.c.l.b16 %v1217
        %v3017 = vunpack.c.h.b16 %v1217
        %v3018 = vunpack.c.l.b16 %v1218
        %v3019 = vunpack.c.h.b16 %v1218
        %v3020 = vunpack.c.l.b16 %v1219
        %v3021 = vunpack.c.h.b16 %v1219
        %v3022 = vunpack.c.l.b16 %v1220
        %v3023 = vunpack.c.h.b16 %v1220
        %v3024 = vunpack.c.l.b16 %v1221
        %v3025 = vunpack.c.h.b16 %v1221
        %v3026 = vunpack.c.l.b16 %v1222
        %v3027 = vunpack.c.h.b16 %v1222
        %v3028 = vunpack.c.l.b16 %v1223
        %v3029 = vunpack.c.h.b16 %v1223
        %v3030 = vunpack.c.l.b16 %v1224
        %v3031 = vunpack.c.h.b16 %v1224
        %v3032 = vunpack.c.l.b16 %v1225
        %v3033 = vunpack.c.h.b16 %v1225
        %v3034 = vunpack.c.l.b16 %v1226
        %v3035 = vunpack.c.h.b16 %v1226
        %v3036 = vunpack.c.l.b16 %v1227
        %v3037 = vunpack.c.h.b16 %v1227
        %v3038 = vunpack.c.l.b16 %v1228
        %v3039 = vunpack.c.h.b16 %v1228
        %v3040 = vunpack.c.l.b16 %v1229
        %v3041 = vunpack.c.h.b16 %v1229
        %v3042 = vunpack.c.l.b16 %v1230
        %v3043 = vunpack.c.h.b16 %v1230
        %v3044 = vunpack.c.l.b16 %v1231
        %v3045 = vunpack.c.h.b16 %v1231
        %v3046 = vunpack.c.l.b16 %v1232
        %v3047 = vunpack.c.h.b16 %v1232
        %v3048 = vunpack.c.l.b16 %v1233
        %v3049 = vunpack.c.h.b16 %v1233
        %v3050 = vunpack.c.l.b16 %v1234
        %v3051 = vunpack.c.h.b16 %v1234
        %v3052 = vunpack.c.l.b16 %v1235
        %v3053 = vunpack.c.h.b16 %v1235
        %v3054 = vunpack.c.l.b16 %v1236
        %v3055 = vunpack.c.h.b16 %v1236
        %v3056 = vunpack.c.l.b16 %v1237
        %v3057 = vunpack.c.h.b16 %v1237
        %v3058 = vunpack.c.l.b16 %v1238
        %v3059 = vunpack.c.h.b16 %v1238
        %v3060 = vunpack.c.l.b16 %v1239
        %v3061 = vunpack.c.h.b16 %v1239
        %v3062 = vunpack.c.l.b16 %v1240
        %v3063 = vunpack.c.h.b16 %v1240
        %v3064 = vunpack.c.l.b16 %v1241
        %v3065 = vunpack.c.h.b16 %v1241
        %v3066 = vunpack.c.l.b16 %v1242
        %v3067 = vunpack.c.h.b16 %v1242
        %v3068 = vunpack.c.l.b16 %v1243
        %v3069 = vunpack.c.h.b16 %v1243
        %v3070 = vunpack.c.l.b16 %v1244
        %v3071 = vunpack.c.h.b16 %v1244
        %v3072 = vunpack.c.l.b16 %v1245
        %v3073 = vunpack.c.h.b16 %v1245
        %v3074 = vunpack.c.l.b16 %v1246
        %v3075 = vunpack.c.h.b16 %v1246
        %v3076 = vunpack.c.l.b16 %v1247
        %v3077 = vunpack.c.h.b16 %v1247
        %v3078 = vunpack.c.l.b16 %v1248
        %v3079 = vunpack.c.h.b16 %v1248
        %v3080 = vunpack.c.l.b16 %v1249
        %v3081 = vunpack.c.h.b16 %v1249
        %v3082 = vunpack.c.l.b16 %v1250
        %v3083 = vunpack.c.h.b16 %v1250
        %v3084 = vunpack.c.l.b16 %v1251
        %v3085 = vunpack.c.h.b16 %v1251
        %v3086 = vunpack.c.l.b16 %v1252
        %v3087 = vunpack.c.h.b16 %v1252
        %v3088 = vunpack.c.l.b16 %v1253
        %v3089 = vunpack.c.h.b16 %v1253
        %v3090 = vunpack.c.l.b16 %v1254
        %v3091 = vunpack.c.h.b16 %v1254
        %v3092 = vunpack.c.l.b16 %v1255
        %v3093 = vunpack.c.h.b16 %v1255
        %v3094 = vunpack.c.l.b16 %v1256
        %v3095 = vunpack.c.h.b16 %v1256
        %v3096 = vunpack.c.l.b16 %v1257
        %v3097 = vunpack.c.h.b16 %v1257
        %v3098 = vunpack.c.l.b16 %v1258
        %v3099 = vunpack.c.h.b16 %v1258
        %v3100 = vunpack.c.l.b16 %v1259
        %v3101 = vunpack.c.h.b16 %v1259
        %v3102 = vunpack.c.l.b16 %v1260
        %v3103 = vunpack.c.h.b16 %v1260
        %v3104 = vunpack.c.l.b16 %v1261
        %v3105 = vunpack.c.h.b16 %v1261
        %v3106 = vunpack.c.l.b16 %v1262
        %v3107 = vunpack.c.h.b16 %v1262
        %v3108 = vunpack.c.l.b16 %v1263
        %v3109 = vunpack.c.h.b16 %v1263
        %v3110 = vunpack.c.l.b16 %v1264
        %v3111 = vunpack.c.h.b16 %v1264
        %v3112 = vunpack.c.l.b16 %v1265
        %v3113 = vunpack.c.h.b16 %v1265
        %v3114 = vunpack.c.l.b16 %v1266
        %v3115 = vunpack.c.h.b16 %v1266
        %v3116 = vunpack.c.l.b16 %v1267
        %v3117 = vunpack.c.h.b16 %v1267
        %v3118 = vunpack.c.l.b16 %v1268
        %v3119 = vunpack.c.h.b16 %v1268
        %v3120 = vunpack.c.l.b16 %v1269
        %v3121 = vunpack.c.h.b16 %v1269
        %v3122 = vunpack.c.l.b16 %v1270
        %v3123 = vunpack.c.h.b16 %v1270
        %v3124 = vunpack.c.l.b16 %v1271
        %v3125 = vunpack.c.h.b16 %v1271
        %v3126 = vunpack.c.l.b16 %v1272
        %v3127 = vunpack.c.h.b16 %v1272
        %v3128 = vunpack.c.l.b16 %v1273
        %v3129 = vunpack.c.h.b16 %v1273
        %v3130 = vunpack.c.l.b16 %v1274
        %v3131 = vunpack.c.h.b16 %v1274
        %v3132 = vunpack.c.l.b16 %v1275
        %v3133 = vunpack.c.h.b16 %v1275
        %v3134 = vunpack.c.l.b16 %v1276
        %v3135 = vunpack.c.h.b16 %v1276
        %v3136 = vunpack.c.l.b16 %v1277
        %v3137 = vunpack.c.h.b16 %v1277
        %v3138 = vunpack.c.l.b16 %v1278
        %v3139 = vunpack.c.h.b16 %v1278
        %v3140 = vunpack.c.l.b16 %v1279
        %v3141 = vunpack.c.h.b16 %v1279
        %v3142 = vunpack.c.l.b16 %v1280
        %v3143 = vunpack.c.h.b16 %v1280
        %v3144 = vunpack.c.l.b16 %v1281
        %v3145 = vunpack.c.h.b16 %v1281
        %v3146 = vunpack.c.l.b16 %v1282
        %v3147 = vunpack.c.h.b16 %v1282
        %v3148 = vunpack.c.l.b16 %v1283
        %v3149 = vunpack.c.h.b16 %v1283
        %v3150 = vunpack.c.l.b16 %v1284
        %v3151 = vunpack.c.h.b16 %v1284
        %v3152 = vunpack.c.l.b16 %v1285
        %v3153 = vunpack.c.h.b16 %v1285
        %v3154 = vunpack.c.l.b16 %v1286
        %v3155 = vunpack.c.h.b16 %v1286
        %v3156 = vunpack.c.l.b16 %v1287
        %v3157 = vunpack.c.h.b16 %v1287
        %v3158 = vunpack.c.l.b16 %v1288
        %v3159 = vunpack.c.h.b16 %v1288
        %v3160 = vunpack.c.l.b16 %v1289
        %v3161 = vunpack.c.h.b16 %v1289
        %v3162 = vunpack.c.l.b16 %v1290
        %v3163 = vunpack.c.h.b16 %v1290
        %v3164 = vunpack.c.l.b16 %v1291
        %v3165 = vunpack.c.h.b16 %v1291
        %v3166 = vunpack.c.l.b16 %v1292
        %v3167 = vunpack.c.h.b16 %v1292
        %v3168 = vunpack.c.l.b16 %v1293
        %v3169 = vunpack.c.h.b16 %v1293
        %v3170 = vunpack.c.l.b16 %v1294
        %v3171 = vunpack.c.h.b16 %v1294
        %v3172 = vunpack.c.l.b16 %v1295
        %v3173 = vunpack.c.h.b16 %v1295
        %v3174 = vunpack.c.l.b16 %v1296
        %v3175 = vunpack.c.h.b16 %v1296
        %v3176 = vunpack.c.l.b16 %v1297
        %v3177 = vunpack.c.h.b16 %v1297
        %v3178 = vunpack.c.l.b16 %v1298
        %v3179 = vunpack.c.h.b16 %v1298
        %v3180 = vunpack.c.l.b16 %v1299
        %v3181 = vunpack.c.h.b16 %v1299
        %v3182 = vunpack.c.l.b16 %v1300
        %v3183 = vunpack.c.h.b16 %v1300
        %v3184 = vunpack.c.l.b16 %v1301
        %v3185 = vunpack.c.h.b16 %v1301
        %v3186 = vunpack.c.l.b16 %v1302
        %v3187 = vunpack.c.h.b16 %v1302
        %v3188 = vunpack.c.l.b16 %v1303
        %v3189 = vunpack.c.h.b16 %v1303
        %v3190 = vunpack.c.l.b16 %v1304
        %v3191 = vunpack.c.h.b16 %v1304
        %v3192 = vunpack.c.l.b16 %v1305
        %v3193 = vunpack.c.h.b16 %v1305
        %v3194 = vunpack.c.l.b16 %v1306
        %v3195 = vunpack.c.h.b16 %v1306
        %v3196 = vunpack.c.l.b16 %v1307
        %v3197 = vunpack.c.h.b16 %v1307
        %v3198 = vunpack.c.l.b16 %v1308
        %v3199 = vunpack.c.h.b16 %v1308
        %v3200 = vunpack.c.l.b16 %v1309
        %v3201 = vunpack.c.h.b16 %v1309
        %v3202 = vunpack.c.l.b16 %v1310
        %v3203 = vunpack.c.h.b16 %v1310
        %v3204 = vunpack.c.l.b16 %v1311
        %v3205 = vunpack.c.h.b16 %v1311
        %v3206 = vunpack.c.l.b16 %v1312
        %v3207 = vunpack.c.h.b16 %v1312
        %v3208 = vunpack.c.l.b16 %v1313
        %v3209 = vunpack.c.h.b16 %v1313
        %v3210 = vunpack.c.l.b16 %v1314
        %v3211 = vunpack.c.h.b16 %v1314
        %v3212 = vunpack.c.l.b16 %v1315
        %v3213 = vunpack.c.h.b16 %v1315
        %v3214 = vunpack.c.l.b16 %v1316
        %v3215 = vunpack.c.h.b16 %v1316
        %v3216 = vunpack.c.l.b16 %v1317
        %v3217 = vunpack.c.h.b16 %v1317
        %v3218 = vunpack.c.l.b16 %v1318
        %v3219 = vunpack.c.h.b16 %v1318
        %v3220 = vunpack.c.l.b16 %v1319
        %v3221 = vunpack.c.h.b16 %v1319
        %v3222 = vunpack.c.l.b16 %v1320
        %v3223 = vunpack.c.h.b16 %v1320
        %v3224 = vunpack.c.l.b16 %v1321
        %v3225 = vunpack.c.h.b16 %v1321
        %v3226 = vunpack.c.l.b16 %v1322
        %v3227 = vunpack.c.h.b16 %v1322
        %v3228 = vunpack.c.l.b16 %v1323
        %v3229 = vunpack.c.h.b16 %v1323
        %v3230 = vunpack.c.l.b16 %v1324
        %v3231 = vunpack.c.h.b16 %v1324
        %v3232 = vunpack.c.l.b16 %v1325
        %v3233 = vunpack.c.h.b16 %v1325
        %v3234 = vunpack.c.l.b16 %v1326
        %v3235 = vunpack.c.h.b16 %v1326
        %v3236 = vunpack.c.l.b16 %v1327
        %v3237 = vunpack.c.h.b16 %v1327
        %v3238 = vunpack.c.l.b16 %v1328
        %v3239 = vunpack.c.h.b16 %v1328
        %v3240 = vunpack.c.l.b16 %v1329
        %v3241 = vunpack.c.h.b16 %v1329
        %v3242 = vunpack.c.l.b16 %v1330
        %v3243 = vunpack.c.h.b16 %v1330
        %v3244 = vunpack.c.l.b16 %v1331
        %v3245 = vunpack.c.h.b16 %v1331
        %v3246 = vunpack.c.l.b16 %v1332
        %v3247 = vunpack.c.h.b16 %v1332
        %v3248 = vunpack.c.l.b16 %v1333
        %v3249 = vunpack.c.h.b16 %v1333
        %v3250 = vunpack.c.l.b16 %v1334
        %v3251 = vunpack.c.h.b16 %v1334
        %v3252 = vunpack.c.l.b16 %v1335
        %v3253 = vunpack.c.h.b16 %v1335
        %v3254 = vunpack.c.l.b16 %v1336
        %v3255 = vunpack.c.h.b16 %v1336
        %v3256 = vunpack.c.l.b16 %v1337
        %v3257 = vunpack.c.h.b16 %v1337
        %v3258 = vunpack.c.l.b16 %v1338
        %v3259 = vunpack.c.h.b16 %v1338
        %v3260 = vunpack.c.l.b16 %v1339
        %v3261 = vunpack.c.h.b16 %v1339
        %v3262 = vunpack.c.l.b16 %v1340
        %v3263 = vunpack.c.h.b16 %v1340
        %v3264 = vunpack.c.l.b16 %v1341
        %v3265 = vunpack.c.h.b16 %v1341
        %v3266 = vunpack.c.l.b16 %v1342
        %v3267 = vunpack.c.h.b16 %v1342
        %v3268 = vunpack.c.l.b16 %v1343
        %v3269 = vunpack.c.h.b16 %v1343
        %v3270 = vunpack.c.l.b16 %v1344
        %v3271 = vunpack.c.h.b16 %v1344
        %v3272 = vunpack.c.l.b16 %v1345
        %v3273 = vunpack.c.h.b16 %v1345
        %v3274 = vunpack.c.l.b16 %v1346
        %v3275 = vunpack.c.h.b16 %v1346
        %v3276 = vunpack.c.l.b16 %v1347
        %v3277 = vunpack.c.h.b16 %v1347
        %v3278 = vunpack.c.l.b16 %v1348
        %v3279 = vunpack.c.h.b16 %v1348
        %v3280 = vunpack.c.l.b16 %v1349
        %v3281 = vunpack.c.h.b16 %v1349
        %v3282 = vunpack.c.l.b16 %v1350
        %v3283 = vunpack.c.h.b16 %v1350
        %v3284 = vunpack.c.l.b16 %v1351
        %v3285 = vunpack.c.h.b16 %v1351
        %v3286 = vunpack.c.l.b16 %v1352
        %v3287 = vunpack.c.h.b16 %v1352
        %v3288 = vunpack.c.l.b16 %v1353
        %v3289 = vunpack.c.h.b16 %v1353
        %v3290 = vunpack.c.l.b16 %v1354
        %v3291 = vunpack.c.h.b16 %v1354
        %v3292 = vunpack.c.l.b16 %v1355
        %v3293 = vunpack.c.h.b16 %v1355
        %v3294 = vunpack.c.l.b16 %v1356
        %v3295 = vunpack.c.h.b16 %v1356
        %v3296 = vunpack.c.l.b16 %v1357
        %v3297 = vunpack.c.h.b16 %v1357
        %v3298 = vunpack.c.l.b16 %v1358
        %v3299 = vunpack.c.h.b16 %v1358
        %v3300 = vunpack.c.l.b16 %v1359
        %v3301 = vunpack.c.h.b16 %v1359
        %v3302 = vunpack.c.l.b16 %v1360
        %v3303 = vunpack.c.h.b16 %v1360
        %v3304 = vunpack.c.l.b16 %v1361
        %v3305 = vunpack.c.h.b16 %v1361
        %v3306 = vunpack.c.l.b16 %v1362
        %v3307 = vunpack.c.h.b16 %v1362
        %v3308 = vunpack.c.l.b16 %v1363
        %v3309 = vunpack.c.h.b16 %v1363
        %v3310 = vunpack.c.l.b16 %v1364
        %v3311 = vunpack.c.h.b16 %v1364
        %v3312 = vunpack.c.l.b16 %v1365
        %v3313 = vunpack.c.h.b16 %v1365
        %v3314 = vunpack.c.l.b16 %v1366
        %v3315 = vunpack.c.h.b16 %v1366
        %v3316 = vunpack.c.l.b16 %v1367
        %v3317 = vunpack.c.h.b16 %v1367
        %v3318 = vunpack.c.l.b16 %v1368
        %v3319 = vunpack.c.h.b16 %v1368
        %v3320 = vunpack.c.l.b16 %v1369
        %v3321 = vunpack.c.h.b16 %v1369
        %v3322 = vunpack.c.l.b16 %v1370
        %v3323 = vunpack.c.h.b16 %v1370
        %v3324 = vunpack.c.l.b16 %v1371
        %v3325 = vunpack.c.h.b16 %v1371
        %v3326 = vunpack.c.l.b16 %v1372
        %v3327 = vunpack.c.h.b16 %v1372
        %v3328 = vunpack.c.l.b16 %v1373
        %v3329 = vunpack.c.h.b16 %v1373
        %v3330 = vunpack.c.l.b16 %v1374
        %v3331 = vunpack.c.h.b16 %v1374
        %v3332 = vunpack.c.l.b16 %v1375
        %v3333 = vunpack.c.h.b16 %v1375
        %v3334 = vunpack.c.l.b16 %v1376
        %v3335 = vunpack.c.h.b16 %v1376
        %v3336 = vunpack.c.l.b16 %v1377
        %v3337 = vunpack.c.h.b16 %v1377
        %v3338 = vunpack.c.l.b16 %v1378
        %v3339 = vunpack.c.h.b16 %v1378
        %v3340 = vunpack.c.l.b16 %v1379
        %v3341 = vunpack.c.h.b16 %v1379
        %v3342 = vunpack.c.l.b16 %v1380
        %v3343 = vunpack.c.h.b16 %v1380
        %v3344 = vunpack.c.l.b16 %v1381
        %v3345 = vunpack.c.h.b16 %v1381
        %v3346 = vunpack.c.l.b16 %v1382
        %v3347 = vunpack.c.h.b16 %v1382
        %v3348 = vunpack.c.l.b16 %v1383
        %v3349 = vunpack.c.h.b16 %v1383
        %v3350 = vunpack.c.l.b16 %v1384
        %v3351 = vunpack.c.h.b16 %v1384
        %v3352 = vunpack.c.l.b16 %v1385
        %v3353 = vunpack.c.h.b16 %v1385
        %v3354 = vunpack.c.l.b16 %v1386
        %v3355 = vunpack.c.h.b16 %v1386
        %v3356 = vunpack.c.l.b16 %v1387
        %v3357 = vunpack.c.h.b16 %v1387
        %v3358 = vunpack.c.l.b16 %v1388
        %v3359 = vunpack.c.h.b16 %v1388
        %v3360 = vunpack.c.l.b16 %v1389
        %v3361 = vunpack.c.h.b16 %v1389
        %v3362 = vunpack.c.l.b16 %v1390
        %v3363 = vunpack.c.h.b16 %v1390
        %v3364 = vunpack.c.l.b16 %v1391
        %v3365 = vunpack.c.h.b16 %v1391
        %v3366 = vunpack.c.l.b16 %v1392
        %v3367 = vunpack.c.h.b16 %v1392
        %v3368 = vunpack.c.l.b16 %v1393
        %v3369 = vunpack.c.h.b16 %v1393
        %v3370 = vunpack.c.l.b16 %v1394
        %v3371 = vunpack.c.h.b16 %v1394
        %v3372 = vunpack.c.l.b16 %v1395
        %v3373 = vunpack.c.h.b16 %v1395
        %v3374 = vunpack.c.l.b16 %v1396
        %v3375 = vunpack.c.h.b16 %v1396
        %v3376 = vunpack.c.l.b16 %v1397
        %v3377 = vunpack.c.h.b16 %v1397
        %v3378 = vunpack.c.l.b16 %v1398
        %v3379 = vunpack.c.h.b16 %v1398
        %v3380 = vunpack.c.l.b16 %v1399
        %v3381 = vunpack.c.h.b16 %v1399
        %v3382 = vunpack.c.l.b16 %v1400
        %v3383 = vunpack.c.h.b16 %v1400
        %v3384 = vunpack.c.l.b16 %v1401
        %v3385 = vunpack.c.h.b16 %v1401
        %v3386 = vunpack.c.l.b16 %v1402
        %v3387 = vunpack.c.h.b16 %v1402
        %v3388 = vunpack.c.l.b16 %v1403
        %v3389 = vunpack.c.h.b16 %v1403
        %v3390 = vunpack.c.l.b16 %v1404
        %v3391 = vunpack.c.h.b16 %v1404
        %v3392 = vunpack.c.l.b16 %v1405
        %v3393 = vunpack.c.h.b16 %v1405
        %v3394 = vunpack.c.l.b16 %v1406
        %v3395 = vunpack.c.h.b16 %v1406
        %v3396 = vunpack.c.l.b16 %v1407
        %v3397 = vunpack.c.h.b16 %v1407
        %v3398 = vunpack.c.l.b16 %v1408
        %v3399 = vunpack.c.h.b16 %v1408
        %v3400 = vunpack.c.l.b16 %v1409
        %v3401 = vunpack.c.h.b16 %v1409
        %v3402 = vunpack.c.l.b16 %v1410
        %v3403 = vunpack.c.h.b16 %v1410
        %v3404 = vunpack.c.l.b16 %v1411
        %v3405 = vunpack.c.h.b16 %v1411
        %v3406 = vunpack.c.l.b16 %v1412
        %v3407 = vunpack.c.h.b16 %v1412
        %v3408 = vunpack.c.l.b16 %v1413
        %v3409 = vunpack.c.h.b16 %v1413
        %v3410 = vunpack.c.l.b16 %v1414
        %v3411 = vunpack.c.h.b16 %v1414
        %v3412 = vunpack.c.l.b16 %v1415
        %v3413 = vunpack.c.h.b16 %v1415
        %v3414 = vunpack.c.l.b16 %v1416
        %v3415 = vunpack.c.h.b16 %v1416
        %v3416 = vunpack.c.l.b16 %v1417
        %v3417 = vunpack.c.h.b16 %v1417
        %v3418 = vunpack.c.l.b16 %v1418
        %v3419 = vunpack.c.h.b16 %v1418
        %v3420 = vunpack.c.l.b16 %v1419
        %v3421 = vunpack.c.h.b16 %v1419
        %v3422 = vunpack.c.l.b16 %v1420
        %v3423 = vunpack.c.h.b16 %v1420
        %v3424 = vunpack.c.l.b16 %v1421
        %v3425 = vunpack.c.h.b16 %v1421
        %v3426 = vunpack.c.l.b16 %v1422
        %v3427 = vunpack.c.h.b16 %v1422
        %v3428 = vunpack.c.l.b16 %v1423
        %v3429 = vunpack.c.h.b16 %v1423
        %v3430 = vunpack.c.l.b16 %v1424
        %v3431 = vunpack.c.h.b16 %v1424
        %v3432 = vunpack.c.l.b16 %v1425
        %v3433 = vunpack.c.h.b16 %v1425
        %v3434 = vunpack.c.l.b16 %v1426
        %v3435 = vunpack.c.h.b16 %v1426
        %v3436 = vunpack.c.l.b16 %v1427
        %v3437 = vunpack.c.h.b16 %v1427
        %v3438 = vunpack.c.l.b16 %v1428
        %v3439 = vunpack.c.h.b16 %v1428
        %v3440 = vunpack.c.l.b16 %v1429
        %v3441 = vunpack.c.h.b16 %v1429
        %v3442 = vunpack.c.l.b16 %v1430
        %v3443 = vunpack.c.h.b16 %v1430
        %v3444 = vunpack.c.l.b16 %v1431
        %v3445 = vunpack.c.h.b16 %v1431
        %v3446 = vunpack.c.l.b16 %v1432
        %v3447 = vunpack.c.h.b16 %v1432
        %v3448 = vunpack.c.l.b16 %v1433
        %v3449 = vunpack.c.h.b16 %v1433
        %v3450 = vunpack.c.l.b16 %v1434
        %v3451 = vunpack.c.h.b16 %v1434
        %v3452 = vunpack.c.l.b16 %v1435
        %v3453 = vunpack.c.h.b16 %v1435
        %v3454 = vunpack.c.l.b16 %v1436
        %v3455 = vunpack.c.h.b16 %v1436
        %v3456 = vunpack.c.l.b16 %v1437
        %v3457 = vunpack.c.h.b16 %v1437
        %v3458 = vunpack.c.l.b16 %v1438
        %v3459 = vunpack.c.h.b16 %v1438
        %v3460 = vunpack.c.l.b16 %v1439
        %v3461 = vunpack.c.h.b16 %v1439
        %v3462 = vunpack.c.l.b16 %v1440
        %v3463 = vunpack.c.h.b16 %v1440
        %v3464 = vunpack.c.l.b16 %v1441
        %v3465 = vunpack.c.h.b16 %v1441
        %v3466 = vunpack.c.l.b16 %v1442
        %v3467 = vunpack.c.h.b16 %v1442
        %v3468 = vunpack.c.l.b16 %v1443
        %v3469 = vunpack.c.h.b16 %v1443
        %v3470 = vunpack.c.l.b16 %v1444
        %v3471 = vunpack.c.h.b16 %v1444
        %v3472 = vunpack.c.l.b16 %v1445
        %v3473 = vunpack.c.h.b16 %v1445
        %v3474 = vunpack.c.l.b16 %v1446
        %v3475 = vunpack.c.h.b16 %v1446
        %v3476 = vunpack.c.l.b16 %v1447
        %v3477 = vunpack.c.h.b16 %v1447
        %v3478 = vunpack.c.l.b16 %v1448
        %v3479 = vunpack.c.h.b16 %v1448
        %v3480 = vunpack.c.l.b16 %v1449
        %v3481 = vunpack.c.h.b16 %v1449
        %v3482 = vunpack.c.l.b16 %v1450
        %v3483 = vunpack.c.h.b16 %v1450
        %v3484 = vunpack.c.l.b16 %v1451
        %v3485 = vunpack.c.h.b16 %v1451
        %v3486 = vunpack.c.l.b16 %v1452
        %v3487 = vunpack.c.h.b16 %v1452
        %v3488 = vunpack.c.l.b16 %v1453
        %v3489 = vunpack.c.h.b16 %v1453
        %v3490 = vunpack.c.l.b16 %v1454
        %v3491 = vunpack.c.h.b16 %v1454
        %v3492 = vunpack.c.l.b16 %v1455
        %v3493 = vunpack.c.h.b16 %v1455
        %v3494 = vunpack.c.l.b16 %v1456
        %v3495 = vunpack.c.h.b16 %v1456
        %v3496 = vunpack.c.l.b16 %v1457
        %v3497 = vunpack.c.h.b16 %v1457
        %v3498 = vunpack.c.l.b16 %v1458
        %v3499 = vunpack.c.h.b16 %v1458
        %v3500 = vunpack.c.l.b16 %v1459
        %v3501 = vunpack.c.h.b16 %v1459
        %v3502 = vunpack.c.l.b16 %v1460
        %v3503 = vunpack.c.h.b16 %v1460
        %v3504 = vunpack.c.l.b16 %v1461
        %v3505 = vunpack.c.h.b16 %v1461
        %v3506 = vunpack.c.l.b16 %v1462
        %v3507 = vunpack.c.h.b16 %v1462
        %v3508 = vunpack.c.l.b16 %v1463
        %v3509 = vunpack.c.h.b16 %v1463
        %v3510 = vunpack.c.l.b16 %v1464
        %v3511 = vunpack.c.h.b16 %v1464
        %v3512 = vunpack.c.l.b16 %v1465
        %v3513 = vunpack.c.h.b16 %v1465
        %v3514 = vunpack.c.l.b16 %v1466
        %v3515 = vunpack.c.h.b16 %v1466
        %v3516 = vunpack.c.l.b16 %v1467
        %v3517 = vunpack.c.h.b16 %v1467
        %v3518 = vunpack.c.l.b16 %v1468
        %v3519 = vunpack.c.h.b16 %v1468
        %v3520 = vunpack.c.l.b16 %v1469
        %v3521 = vunpack.c.h.b16 %v1469
        %v3522 = vunpack.c.l.b16 %v1470
        %v3523 = vunpack.c.h.b16 %v1470
        %v3524 = vunpack.c.l.b16 %v1471
        %v3525 = vunpack.c.h.b16 %v1471
        %v3526 = vunpack.c.l.b16 %v1472
        %v3527 = vunpack.c.h.b16 %v1472
        %v3528 = vunpack.c.l.b16 %v1473
        %v3529 = vunpack.c.h.b16 %v1473
        %v3530 = vunpack.c.l.b16 %v1474
        %v3531 = vunpack.c.h.b16 %v1474
        %v3532 = vunpack.c.l.b16 %v1475
        %v3533 = vunpack.c.h.b16 %v1475
        %v3534 = vunpack.c.l.b16 %v1476
        %v3535 = vunpack.c.h.b16 %v1476
        %v3536 = vunpack.c.l.b16 %v1477
        %v3537 = vunpack.c.h.b16 %v1477
        %v3538 = vunpack.c.l.b16 %v1478
        %v3539 = vunpack.c.h.b16 %v1478
        %v3540 = vunpack.c.l.b16 %v1479
        %v3541 = vunpack.c.h.b16 %v1479
        %v3542 = vunpack.c.l.b16 %v1480
        %v3543 = vunpack.c.h.b16 %v1480
        %v3544 = vunpack.c.l.b16 %v1481
        %v3545 = vunpack.c.h.b16 %v1481
        %v3546 = vunpack.c.l.b16 %v1482
        %v3547 = vunpack.c.h.b16 %v1482
        %v3548 = vunpack.c.l.b16 %v1483
        %v3549 = vunpack.c.h.b16 %v1483
        %v3550 = vunpack.c.l.b16 %v1484
        %v3551 = vunpack.c.h.b16 %v1484
        %v3552 = vunpack.c.l.b16 %v1485
        %v3553 = vunpack.c.h.b16 %v1485
        %v3554 = vunpack.c.l.b16 %v1486
        %v3555 = vunpack.c.h.b16 %v1486
        %v3556 = vunpack.c.l.b16 %v1487
        %v3557 = vunpack.c.h.b16 %v1487
        %v3558 = vunpack.c.l.b16 %v1488
        %v3559 = vunpack.c.h.b16 %v1488
        %v3560 = vunpack.c.l.b16 %v1489
        %v3561 = vunpack.c.h.b16 %v1489
        %v3562 = vunpack.c.l.b16 %v1490
        %v3563 = vunpack.c.h.b16 %v1490
        %v3564 = vunpack.c.l.b16 %v1491
        %v3565 = vunpack.c.h.b16 %v1491
        %v3566 = vunpack.c.l.b16 %v1492
        %v3567 = vunpack.c.h.b16 %v1492
        %v3568 = vunpack.c.l.b16 %v1493
        %v3569 = vunpack.c.h.b16 %v1493
        %v3570 = vunpack.c.l.b16 %v1494
        %v3571 = vunpack.c.h.b16 %v1494
        %v3572 = vunpack.c.l.b16 %v1495
        %v3573 = vunpack.c.h.b16 %v1495
        %v3574 = vunpack.c.l.b16 %v1496
        %v3575 = vunpack.c.h.b16 %v1496
        %v3576 = vunpack.c.l.b16 %v1497
        %v3577 = vunpack.c.h.b16 %v1497
        %v3578 = vunpack.c.l.b16 %v1498
        %v3579 = vunpack.c.h.b16 %v1498
        %v3580 = vunpack.c.l.b16 %v1499
        %v3581 = vunpack.c.h.b16 %v1499
        %v3582 = vunpack.c.l.b16 %v1500
        %v3583 = vunpack.c.h.b16 %v1500
        %v3584 = vunpack.c.l.b16 %v1501
        %v3585 = vunpack.c.h.b16 %v1501
        %v3586 = vunpack.c.l.b16 %v1502
        %v3587 = vunpack.c.h.b16 %v1502
        %v3588 = vunpack.c.l.b16 %v1503
        %v3589 = vunpack.c.h.b16 %v1503
        %v3590 = vunpack.c.l.b16 %v1504
        %v3591 = vunpack.c.h.b16 %v1504
        %v3592 = vunpack.c.l.b16 %v1505
        %v3593 = vunpack.c.h.b16 %v1505
        %v3594 = vunpack.c.l.b16 %v1506
        %v3595 = vunpack.c.h.b16 %v1506
        %v3596 = vunpack.c.l.b16 %v1507
        %v3597 = vunpack.c.h.b16 %v1507
        %v3598 = vunpack.c.l.b16 %v1508
        %v3599 = vunpack.c.h.b16 %v1508
        %v3600 = vunpack.c.l.b16 %v1509
        %v3601 = vunpack.c.h.b16 %v1509
        %v3602 = vunpack.c.l.b16 %v1510
        %v3603 = vunpack.c.h.b16 %v1510
        %v3604 = vunpack.c.l.b16 %v1511
        %v3605 = vunpack.c.h.b16 %v1511
        %v3606 = vunpack.c.l.b16 %v1512
        %v3607 = vunpack.c.h.b16 %v1512
        %v3608 = vunpack.c.l.b16 %v1513
        %v3609 = vunpack.c.h.b16 %v1513
        %v3610 = vunpack.c.l.b16 %v1514
        %v3611 = vunpack.c.h.b16 %v1514
        %v3612 = vunpack.c.l.b16 %v1515
        %v3613 = vunpack.c.h.b16 %v1515
        %v3614 = vunpack.c.l.b16 %v1516
        %v3615 = vunpack.c.h.b16 %v1516
        %v3616 = vunpack.c.l.b16 %v1517
        %v3617 = vunpack.c.h.b16 %v1517
        %v3618 = vunpack.c.l.b16 %v1518
        %v3619 = vunpack.c.h.b16 %v1518
        %v3620 = vunpack.c.l.b16 %v1519
        %v3621 = vunpack.c.h.b16 %v1519
        %v3622 = vunpack.c.l.b16 %v1520
        %v3623 = vunpack.c.h.b16 %v1520
        %v3624 = vunpack.c.l.b16 %v1521
        %v3625 = vunpack.c.h.b16 %v1521
        %v3626 = vunpack.c.l.b16 %v1522
        %v3627 = vunpack.c.h.b16 %v1522
        %v3628 = vunpack.c.l.b16 %v1523
        %v3629 = vunpack.c.h.b16 %v1523
        %v3630 = vunpack.c.l.b16 %v1524
        %v3631 = vunpack.c.h.b16 %v1524
        %v3632 = vunpack.c.l.b16 %v1525
        %v3633 = vunpack.c.h.b16 %v1525
        %v3634 = vunpack.c.l.b16 %v1526
        %v3635 = vunpack.c.h.b16 %v1526
        %v3636 = vunpack.c.l.b16 %v1527
        %v3637 = vunpack.c.h.b16 %v1527
        %v3638 = vunpack.c.l.b16 %v1528
        %v3639 = vunpack.c.h.b16 %v1528
        %v3640 = vunpack.c.l.b16 %v1529
        %v3641 = vunpack.c.h.b16 %v1529
        %v3642 = vunpack.c.l.b16 %v1530
        %v3643 = vunpack.c.h.b16 %v1530
        %v3644 = vunpack.c.l.b16 %v1531
        %v3645 = vunpack.c.h.b16 %v1531
        %v3646 = vunpack.c.l.b16 %v1532
        %v3647 = vunpack.c.h.b16 %v1532
        %v3648 = vunpack.c.l.b16 %v1533
        %v3649 = vunpack.c.h.b16 %v1533
        %v3650 = vunpack.c.l.b16 %v1534
        %v3651 = vunpack.c.h.b16 %v1534
        %v3652 = vunpack.c.l.b16 %v1535
        %v3653 = vunpack.c.h.b16 %v1535
        %v3654 = vunpack.c.l.b16 %v1536
        %v3655 = vunpack.c.h.b16 %v1536
        %v3656 = vunpack.c.l.b16 %v1537
        %v3657 = vunpack.c.h.b16 %v1537
        %v3658 = vunpack.c.l.b16 %v1538
        %v3659 = vunpack.c.h.b16 %v1538
        %v3660 = vunpack.c.l.b16 %v1539
        %v3661 = vunpack.c.h.b16 %v1539
        %v3662 = vunpack.c.l.b16 %v1540
        %v3663 = vunpack.c.h.b16 %v1540
        %v3664 = vunpack.c.l.b16 %v1541
        %v3665 = vunpack.c.h.b16 %v1541
        %v3666 = vunpack.c.l.b16 %v1542
        %v3667 = vunpack.c.h.b16 %v1542
        %v3668 = vunpack.c.l.b16 %v1543
        %v3669 = vunpack.c.h.b16 %v1543
        %v3670 = vunpack.c.l.b16 %v1544
        %v3671 = vunpack.c.h.b16 %v1544
        %v3672 = vunpack.c.l.b16 %v1545
        %v3673 = vunpack.c.h.b16 %v1545
        %v3674 = vunpack.c.l.b16 %v1546
        %v3675 = vunpack.c.h.b16 %v1546
        %v3676 = vunpack.c.l.b16 %v1547
        %v3677 = vunpack.c.h.b16 %v1547
        %v3678 = vunpack.c.l.b16 %v1548
        %v3679 = vunpack.c.h.b16 %v1548
        %v3680 = vunpack.c.l.b16 %v1549
        %v3681 = vunpack.c.h.b16 %v1549
        %v3682 = vunpack.c.l.b16 %v1550
        %v3683 = vunpack.c.h.b16 %v1550
        %v3684 = vunpack.c.l.b16 %v1551
        %v3685 = vunpack.c.h.b16 %v1551
        %v3686 = vunpack.c.l.b16 %v1552
        %v3687 = vunpack.c.h.b16 %v1552
        %v3688 = vunpack.c.l.b16 %v1553
        %v3689 = vunpack.c.h.b16 %v1553
        %v3690 = vunpack.c.l.b16 %v1554
        %v3691 = vunpack.c.h.b16 %v1554
        %v3692 = vunpack.c.l.b16 %v1555
        %v3693 = vunpack.c.h.b16 %v1555
        %v3694 = vunpack.c.l.b16 %v1556
        %v3695 = vunpack.c.h.b16 %v1556
        %v3696 = vunpack.c.l.b16 %v1557
        %v3697 = vunpack.c.h.b16 %v1557
        %v3698 = vunpack.c.l.b16 %v1558
        %v3699 = vunpack.c.h.b16 %v1558
        %v3700 = vunpack.c.l.b16 %v1559
        %v3701 = vunpack.c.h.b16 %v1559
        %v3702 = vunpack.c.l.b16 %v1560
        %v3703 = vunpack.c.h.b16 %v1560
        %v3704 = vunpack.c.l.b16 %v1561
        %v3705 = vunpack.c.h.b16 %v1561
        %v3706 = vunpack.c.l.b16 %v1562
        %v3707 = vunpack.c.h.b16 %v1562
        %v3708 = vunpack.c.l.b16 %v1563
        %v3709 = vunpack.c.h.b16 %v1563
        %v3710 = vunpack.c.l.b16 %v1564
        %v3711 = vunpack.c.h.b16 %v1564
        %v3712 = vunpack.c.l.b16 %v1565
        %v3713 = vunpack.c.h.b16 %v1565
        %v3714 = vunpack.c.l.b16 %v1566
        %v3715 = vunpack.c.h.b16 %v1566
        %v3716 = vunpack.c.l.b16 %v1567
        %v3717 = vunpack.c.h.b16 %v1567
        %v3718 = vunpack.c.l.b16 %v1568
        %v3719 = vunpack.c.h.b16 %v1568
        %v3720 = vunpack.c.l.b16 %v1569
        %v3721 = vunpack.c.h.b16 %v1569
        %v3722 = vunpack.c.l.b16 %v1570
        %v3723 = vunpack.c.h.b16 %v1570
        %v3724 = vunpack.c.l.b16 %v1571
        %v3725 = vunpack.c.h.b16 %v1571
        %v3726 = vunpack.c.l.b16 %v1572
        %v3727 = vunpack.c.h.b16 %v1572
        %v3728 = vunpack.c.l.b16 %v1573
        %v3729 = vunpack.c.h.b16 %v1573
        %v3730 = vunpack.c.l.b16 %v1574
        %v3731 = vunpack.c.h.b16 %v1574
        %v3732 = vunpack.c.l.b16 %v1575
        %v3733 = vunpack.c.h.b16 %v1575
        %v3734 = vunpack.c.l.b16 %v1576
        %v3735 = vunpack.c.h.b16 %v1576
        %v3736 = vunpack.c.l.b16 %v1577
        %v3737 = vunpack.c.h.b16 %v1577
        %v3738 = vunpack.c.l.b16 %v1578
        %v3739 = vunpack.c.h.b16 %v1578
        %v3740 = vunpack.c.l.b16 %v1579
        %v3741 = vunpack.c.h.b16 %v1579
        %v3742 = vunpack.c.l.b16 %v1580
        %v3743 = vunpack.c.h.b16 %v1580
        %v3744 = vunpack.c.l.b16 %v1581
        %v3745 = vunpack.c.h.b16 %v1581
        %v3746 = vunpack.c.l.b16 %v1582
        %v3747 = vunpack.c.h.b16 %v1582
        %v3748 = vunpack.c.l.b16 %v1583
        %v3749 = vunpack.c.h.b16 %v1583
        %v3750 = vunpack.c.l.b16 %v1584
        %v3751 = vunpack.c.h.b16 %v1584
        %v3752 = vunpack.c.l.b16 %v1585
        %v3753 = vunpack.c.h.b16 %v1585
        %v3754 = vunpack.c.l.b16 %v1586
        %v3755 = vunpack.c.h.b16 %v1586
        %v3756 = vunpack.c.l.b16 %v1587
        %v3757 = vunpack.c.h.b16 %v1587
        %v3758 = vunpack.c.l.b16 %v1588
        %v3759 = vunpack.c.h.b16 %v1588
        %v3760 = vunpack.c.l.b16 %v1589
        %v3761 = vunpack.c.h.b16 %v1589
        %v3762 = vunpack.c.l.b16 %v1590
        %v3763 = vunpack.c.h.b16 %v1590
        %v3764 = vunpack.c.l.b16 %v1591
        %v3765 = vunpack.c.h.b16 %v1591
        %v3766 = vunpack.c.l.b16 %v1592
        %v3767 = vunpack.c.h.b16 %v1592
        %v3768 = vunpack.c.l.b16 %v1593
        %v3769 = vunpack.c.h.b16 %v1593
        %v3770 = vunpack.c.l.b16 %v1594
        %v3771 = vunpack.c.h.b16 %v1594
        %v3772 = vunpack.c.l.b16 %v1595
        %v3773 = vunpack.c.h.b16 %v1595
        %v3774 = vunpack.c.l.b16 %v1596
        %v3775 = vunpack.c.h.b16 %v1596
        %v3776 = vunpack.c.l.b16 %v1597
        %v3777 = vunpack.c.h.b16 %v1597
        %v3778 = vunpack.c.l.b16 %v1598
        %v3779 = vunpack.c.h.b16 %v1598
        %v3780 = vunpack.c.l.b16 %v1599
        %v3781 = vunpack.c.h.b16 %v1599
        %v3782 = vunpack.c.l.b16 %v1600
        %v3783 = vunpack.c.h.b16 %v1600
        %v3784 = vunpack.c.l.b16 %v1601
        %v3785 = vunpack.c.h.b16 %v1601
        %v3786 = vunpack.c.l.b16 %v1602
        %v3787 = vunpack.c.h.b16 %v1602
        %v3788 = vunpack.c.l.b16 %v1603
        %v3789 = vunpack.c.h.b16 %v1603
        %v3790 = vunpack.c.l.b16 %v1604
        %v3791 = vunpack.c.h.b16 %v1604
        %v3792 = vunpack.c.l.b16 %v1605
        %v3793 = vunpack.c.h.b16 %v1605
        %v3794 = vunpack.c.l.b16 %v1606
        %v3795 = vunpack.c.h.b16 %v1606
        %v3796 = vunpack.c.l.b16 %v1607
        %v3797 = vunpack.c.h.b16 %v1607
        %v3798 = vunpack.c.l.b16 %v1608
        %v3799 = vunpack.c.h.b16 %v1608
        %v3800 = vunpack.c.l.b16 %v1609
        %v3801 = vunpack.c.h.b16 %v1609
        %v3802 = vunpack.c.l.b16 %v1610
        %v3803 = vunpack.c.h.b16 %v1610
        %v3804 = vunpack.c.l.b16 %v1611
        %v3805 = vunpack.c.h.b16 %v1611
        %v3806 = vunpack.c.l.b16 %v1612
        %v3807 = vunpack.c.h.b16 %v1612
        %v3808 = vunpack.c.l.b16 %v1613
        %v3809 = vunpack.c.h.b16 %v1613
        %v3810 = vunpack.c.l.b16 %v1614
        %v3811 = vunpack.c.h.b16 %v1614
        %v3812 = vunpack.c.l.b16 %v1615
        %v3813 = vunpack.c.h.b16 %v1615
        %v3814 = vunpack.c.l.b16 %v1616
        %v3815 = vunpack.c.h.b16 %v1616
        %v3816 = vunpack.c.l.b16 %v1617
        %v3817 = vunpack.c.h.b16 %v1617
        %v3818 = vunpack.c.l.b16 %v1618
        %v3819 = vunpack.c.h.b16 %v1618
        %v3820 = vunpack.c.l.b16 %v1619
        %v3821 = vunpack.c.h.b16 %v1619
        %v3822 = vunpack.c.l.b16 %v1620
        %v3823 = vunpack.c.h.b16 %v1620
        %v3824 = vunpack.c.l.b16 %v1621
        %v3825 = vunpack.c.h.b16 %v1621
        %v3826 = vunpack.c.l.b16 %v1622
        %v3827 = vunpack.c.h.b16 %v1622
        %v3828 = vunpack.c.l.b16 %v1623
        %v3829 = vunpack.c.h.b16 %v1623
        %v3830 = vunpack.c.l.b16 %v1624
        %v3831 = vunpack.c.h.b16 %v1624
        %v3832 = vunpack.c.l.b16 %v1625
        %v3833 = vunpack.c.h.b16 %v1625
        %v3834 = vunpack.c.l.b16 %v1626
        %v3835 = vunpack.c.h.b16 %v1626
        %v3836 = vunpack.c.l.b16 %v1627
        %v3837 = vunpack.c.h.b16 %v1627
        %v3838 = vunpack.c.l.b16 %v1628
        %v3839 = vunpack.c.h.b16 %v1628
        %v3840 = vunpack.c.l.b16 %v1629
        %v3841 = vunpack.c.h.b16 %v1629
        %v3842 = vunpack.c.l.b16 %v1630
        %v3843 = vunpack.c.h.b16 %v1630
        %v3844 = vunpack.c.l.b16 %v1631
        %v3845 = vunpack.c.h.b16 %v1631
        %v3846 = vunpack.c.l.b16 %v1632
        %v3847 = vunpack.c.h.b16 %v1632
        %v3848 = vunpack.c.l.b16 %v1633
        %v3849 = vunpack.c.h.b16 %v1633
        %v3850 = vunpack.c.l.b16 %v1634
        %v3851 = vunpack.c.h.b16 %v1634
        %v3852 = vunpack.c.l.b16 %v1635
        %v3853 = vunpack.c.h.b16 %v1635
        %v3854 = vunpack.c.l.b16 %v1636
        %v3855 = vunpack.c.h.b16 %v1636
        %v3856 = vunpack.c.l.b16 %v1637
        %v3857 = vunpack.c.h.b16 %v1637
        %v3858 = vunpack.c.l.b16 %v1638
        %v3859 = vunpack.c.h.b16 %v1638
        %v3860 = vunpack.c.l.b16 %v1639
        %v3861 = vunpack.c.h.b16 %v1639
        %v3862 = vunpack.c.l.b16 %v1640
        %v3863 = vunpack.c.h.b16 %v1640
        %v3864 = vunpack.c.l.b16 %v1641
        %v3865 = vunpack.c.h.b16 %v1641
        %v3866 = vunpack.c.l.b16 %v1642
        %v3867 = vunpack.c.h.b16 %v1642
        %v3868 = vunpack.c.l.b16 %v1643
        %v3869 = vunpack.c.h.b16 %v1643
        %v3870 = vunpack.c.l.b16 %v1644
        %v3871 = vunpack.c.h.b16 %v1644
        %v3872 = vunpack.c.l.b16 %v1645
        %v3873 = vunpack.c.h.b16 %v1645
        %v3874 = vpack.c.b16 %v2488, %v2466
        %v3875 = vpack.c.b16 %v2489, %v2467
        %v3876 = vpack.c.b16 %v2490, %v2468
        %v3877 = vpack.c.b16 %v2491, %v2469
        %v3878 = vpack.c.b16 %v2492, %v2470
        %v3879 = vpack.c.b16 %v2493, %v2471
        %v3880 = vpack.c.b16 %v2494, %v2472
        %v3881 = vpack.c.b16 %v2495, %v2473
        %v3882 = vpack.c.b16 %v2496, %v2474
        %v3883 = vpack.c.b16 %v2497, %v2475
        %v3884 = vpack.c.b16 %v2498, %v2476
        %v3885 = vpack.c.b16 %v2499, %v2477
        %v3886 = vpack.c.b16 %v2500, %v2478
        %v3887 = vpack.c.b16 %v2501, %v2479
        %v3888 = vpack.c.b16 %v2502, %v2480
        %v3889 = vpack.c.b16 %v2503, %v2481
        %v3890 = vpack.c.b16 %v2504, %v2482
        %v3891 = vpack.c.b16 %v2505, %v2483
        %v3892 = vpack.c.b16 %v2506, %v2484
        %v3893 = vpack.c.b16 %v2507, %v2485
        %v3894 = vpack.c.b16 %v2508, %v2486
        %v3895 = vpack.c.b16 %v2509, %v2487
        %v3896 = vpack.c.b16 %v2532, %v2510
        %v3897 = vpack.c.b16 %v2533, %v2511
        %v3898 = vpack.c.b16 %v2534, %v2512
        %v3899 = vpack.c.b16 %v2535, %v2513
        %v3900 = vpack.c.b16 %v2536, %v2514
        %v3901 = vpack.c.b16 %v2537, %v2515
        %v3902 = vpack.c.b16 %v2538, %v2516
        %v3903 = vpack.c.b16 %v2539, %v2517
        %v3904 = vpack.c.b16 %v2540, %v2518
        %v3905 = vpack.c.b16 %v2541, %v2519
        %v3906 = vpack.c.b16 %v2542, %v2520
        %v3907 = vpack.c.b16 %v2543, %v2521
        %v3908 = vpack.c.b16 %v2544, %v2522
        %v3909 = vpack.c.b16 %v2545, %v2523
        %v3910 = vpack.c.b16 %v2546, %v2524
        %v3911 = vpack.c.b16 %v2547, %v2525
        %v3912 = vpack.c.b16 %v2548, %v2526
        %v3913 = vpack.c.b16 %v2549, %v2527
        %v3914 = vpack.c.b16 %v2550, %v2528
        %v3915 = vpack.c.b16 %v2551, %v2529
        %v3916 = vpack.c.b16 %v2552, %v2530
        %v3917 = vpack.c.b16 %v2553, %v2531
        %v3918 = vpack.c.b16 %v2576, %v2554
        %v3919 = vpack.c.b16 %v2577, %v2555
        %v3920 = vpack.c.b16 %v2578, %v2556
        %v3921 = vpack.c.b16 %v2579, %v2557
        %v3922 = vpack.c.b16 %v2580, %v2558
        %v3923 = vpack.c.b16 %v2581, %v2559
        %v3924 = vpack.c.b16 %v2582, %v2560
        %v3925 = vpack.c.b16 %v2583, %v2561
        %v3926 = vpack.c.b16 %v2584, %v2562
        %v3927 = vpack.c.b16 %v2585, %v2563
        %v3928 = vpack.c.b16 %v2586, %v2564
        %v3929 = vpack.c.b16 %v2587, %v2565
        %v3930 = vpack.c.b16 %v2588, %v2566
        %v3931 = vpack.c.b16 %v2589, %v2567
        %v3932 = vpack.c.b16 %v2590, %v2568
        %v3933 = vpack.c.b16 %v2591, %v2569
        %v3934 = vpack.c.b16 %v2592, %v2570
        %v3935 = vpack.c.b16 %v2593, %v2571
        %v3936 = vpack.c.b16 %v2594, %v2572
        %v3937 = vpack.c.b16 %v2595, %v2573
        %v3938 = vpack.c.b16 %v2596, %v2574
        %v3939 = vpack.c.b16 %v2597, %v2575
        %v3940 = vpack.c.b16 %v2620, %v2598
        %v3941 = vpack.c.b16 %v2621, %v2599
        %v3942 = vpack.c.b16 %v2622, %v2600
        %v3943 = vpack.c.b16 %v2623, %v2601
        %v3944 = vpack.c.b16 %v2624, %v2602
        %v3945 = vpack.c.b16 %v2625, %v2603
        %v3946 = vpack.c.b16 %v2626, %v2604
        %v3947 = vpack.c.b16 %v2627, %v2605
        %v3948 = vpack.c.b16 %v2628, %v2606
        %v3949 = vpack.c.b16 %v2629, %v2607
        %v3950 = vpack.c.b16 %v2630, %v2608
        %v3951 = vpack.c.b16 %v2631, %v2609
        %v3952 = vpack.c.b16 %v2632, %v2610
        %v3953 = vpack.c.b16 %v2633, %v2611
        %v3954 = vpack.c.b16 %v2634, %v2612
        %v3955 = vpack.c.b16 %v2635, %v2613
        %v3956 = vpack.c.b16 %v2636, %v2614
        %v3957 = vpack.c.b16 %v2637, %v2615
        %v3958 = vpack.c.b16 %v2638, %v2616
        %v3959 = vpack.c.b16 %v2639, %v2617
        %v3960 = vpack.c.b16 %v2640, %v2618
        %v3961 = vpack.c.b16 %v2641, %v2619
        %v3962 = vpack.c.b16 %v2664, %v2642
        %v3963 = vpack.c.b16 %v2665, %v2643
        %v3964 = vpack.c.b16 %v2666, %v2644
        %v3965 = vpack.c.b16 %v2667, %v2645
        %v3966 = vpack.c.b16 %v2668, %v2646
        %v3967 = vpack.c.b16 %v2669, %v2647
        %v3968 = vpack.c.b16 %v2670, %v2648
        %v3969 = vpack.c.b16 %v2671, %v2649
        %v3970 = vpack.c.b16 %v2672, %v2650
        %v3971 = vpack.c.b16 %v2673, %v2651
        %v3972 = vpack.c.b16 %v2674, %v2652
        %v3973 = vpack.c.b16 %v2675, %v2653
        %v3974 = vpack.c.b16 %v2676, %v2654
        %v3975 = vpack.c.b16 %v2677, %v2655
        %v3976 = vpack.c.b16 %v2678, %v2656
        %v3977 = vpack.c.b16 %v2679, %v2657
        %v3978 = vpack.c.b16 %v2680, %v2658
        %v3979 = vpack.c.b16 %v2681, %v2659
        %v3980 = vpack.c.b16 %v2682, %v2660
        %v3981 = vpack.c.b16 %v2683, %v2661
        %v3982 = vpack.c.b16 %v2684, %v2662
        %v3983 = vpack.c.b16 %v2685, %v2663
        %v3984 = vpack.c.b16 %v2708, %v2686
        %v3985 = vpack.c.b16 %v2709, %v2687
        %v3986 = vpack.c.b16 %v2710, %v2688
        %v3987 = vpack.c.b16 %v2711, %v2689
        %v3988 = vpack.c.b16 %v2712, %v2690
        %v3989 = vpack.c.b16 %v2713, %v2691
        %v3990 = vpack.c.b16 %v2714, %v2692
        %v3991 = vpack.c.b16 %v2715, %v2693
        %v3992 = vpack.c.b16 %v2716, %v2694
        %v3993 = vpack.c.b16 %v2717, %v2695
        %v3994 = vpack.c.b16 %v2718, %v2696
        %v3995 = vpack.c.b16 %v2719, %v2697
        %v3996 = vpack.c.b16 %v2720, %v2698
        %v3997 = vpack.c.b16 %v2721, %v2699
        %v3998 = vpack.c.b16 %v2722, %v2700
        %v3999 = vpack.c.b16 %v2723, %v2701
        %v4000 = vpack.c.b16 %v2724, %v2702
        %v4001 = vpack.c.b16 %v2725, %v2703
        %v4002 = vpack.c.b16 %v2726, %v2704
        %v4003 = vpack.c.b16 %v2727, %v2705
        %v4004 = vpack.c.b16 %v2728, %v2706
        %v4005 = vpack.c.b16 %v2729, %v2707
        %v4006 = vpack.c.b16 %v2752, %v2730
        %v4007 = vpack.c.b16 %v2753, %v2731
        %v4008 = vpack.c.b16 %v2754, %v2732
        %v4009 = vpack.c.b16 %v2755, %v2733
        %v4010 = vpack.c.b16 %v2756, %v2734
        %v4011 = vpack.c.b16 %v2757, %v2735
        %v4012 = vpack.c.b16 %v2758, %v2736
        %v4013 = vpack.c.b16 %v2759, %v2737
        %v4014 = vpack.c.b16 %v2760, %v2738
        %v4015 = vpack.c.b16 %v2761, %v2739
        %v4016 = vpack.c.b16 %v2762, %v2740
        %v4017 = vpack.c.b16 %v2763, %v2741
        %v4018 = vpack.c.b16 %v2764, %v2742
        %v4019 = vpack.c.b16 %v2765, %v2743
        %v4020 = vpack.c.b16 %v2766, %v2744
        %v4021 = vpack.c.b16 %v2767, %v2745
        %v4022 = vpack.c.b16 %v2768, %v2746
        %v4023 = vpack.c.b16 %v2769, %v2747
        %v4024 = vpack.c.b16 %v2770, %v2748
        %v4025 = vpack.c.b16 %v2771, %v2749
        %v4026 = vpack.c.b16 %v2772, %v2750
        %v4027 = vpack.c.b16 %v2773, %v2751
        %v4028 = vpack.c.b16 %v2796, %v2774
        %v4029 = vpack.c.b16 %v2797, %v2775
        %v4030 = vpack.c.b16 %v2798, %v2776
        %v4031 = vpack.c.b16 %v2799, %v2777
        %v4032 = vpack.c.b16 %v2800, %v2778
        %v4033 = vpack.c.b16 %v2801, %v2779
        %v4034 = vpack.c.b16 %v2802, %v2780
        %v4035 = vpack.c.b16 %v2803, %v2781
        %v4036 = vpack.c.b16 %v2804, %v2782
        %v4037 = vpack.c.b16 %v2805, %v2783
        %v4038 = vpack.c.b16 %v2806, %v2784
        %v4039 = vpack.c.b16 %v2807, %v2785
        %v4040 = vpack.c.b16 %v2808, %v2786
        %v4041 = vpack.c.b16 %v2809, %v2787
        %v4042 = vpack.c.b16 %v2810, %v2788
        %v4043 = vpack.c.b16 %v2811, %v2789
        %v4044 = vpack.c.b16 %v2812, %v2790
        %v4045 = vpack.c.b16 %v2813, %v2791
        %v4046 = vpack.c.b16 %v2814, %v2792
        %v4047 = vpack.c.b16 %v2815, %v2793
        %v4048 = vpack.c.b16 %v2816, %v2794
        %v4049 = vpack.c.b16 %v2817, %v2795
        %v4050 = vpack.c.b16 %v2840, %v2818
        %v4051 = vpack.c.b16 %v2841, %v2819
        %v4052 = vpack.c.b16 %v2842, %v2820
        %v4053 = vpack.c.b16 %v2843, %v2821
        %v4054 = vpack.c.b16 %v2844, %v2822
        %v4055 = vpack.c.b16 %v2845, %v2823
        %v4056 = vpack.c.b16 %v2846, %v2824
        %v4057 = vpack.c.b16 %v2847, %v2825
        %v4058 = vpack.c.b16 %v2848, %v2826
        %v4059 = vpack.c.b16 %v2849, %v2827
        %v4060 = vpack.c.b16 %v2850, %v2828
        %v4061 = vpack.c.b16 %v2851, %v2829
        %v4062 = vpack.c.b16 %v2852, %v2830
        %v4063 = vpack.c.b16 %v2853, %v2831
        %v4064 = vpack.c.b16 %v2854, %v2832
        %v4065 = vpack.c.b16 %v2855, %v2833
        %v4066 = vpack.c.b16 %v2856, %v2834
        %v4067 = vpack.c.b16 %v2857, %v2835
        %v4068 = vpack.c.b16 %v2858, %v2836
        %v4069 = vpack.c.b16 %v2859, %v2837
        %v4070 = vpack.c.b16 %v2860, %v2838
        %v4071 = vpack.c.b16 %v2861, %v2839
        %v4072 = vpack.c.b16 %v2884, %v2862
        %v4073 = vpack.c.b16 %v2885, %v2863
        %v4074 = vpack.c.b16 %v2886, %v2864
        %v4075 = vpack.c.b16 %v2887, %v2865
        %v4076 = vpack.c.b16 %v2888, %v2866
        %v4077 = vpack.c.b16 %v2889, %v2867
        %v4078 = vpack.c.b16 %v2890, %v2868
        %v4079 = vpack.c.b16 %v2891, %v2869
        %v4080 = vpack.c.b16 %v2892, %v2870
        %v4081 = vpack.c.b16 %v2893, %v2871
        %v4082 = vpack.c.b16 %v2894, %v2872
        %v4083 = vpack.c.b16 %v2895, %v2873
        %v4084 = vpack.c.b16 %v2896, %v2874
        %v4085 = vpack.c.b16 %v2897, %v2875
        %v4086 = vpack.c.b16 %v2898, %v2876
        %v4087 = vpack.c.b16 %v2899, %v2877
        %v4088 = vpack.c.b16 %v2900, %v2878
        %v4089 = vpack.c.b16 %v2901, %v2879
        %v4090 = vpack.c.b16 %v2902, %v2880
        %v4091 = vpack.c.b16 %v2903, %v2881
        %v4092 = vpack.c.b16 %v2904, %v2882
        %v4093 = vpack.c.b16 %v2905, %v2883
        %v4094 = vpack.c.b16 %v2928, %v2906
        %v4095 = vpack.c.b16 %v2929, %v2907
        %v4096 = vpack.c.b16 %v2930, %v2908
        %v4097 = vpack.c.b16 %v2931, %v2909
        %v4098 = vpack.c.b16 %v2932, %v2910
        %v4099 = vpack.c.b16 %v2933, %v2911
        %v4100 = vpack.c.b16 %v2934, %v2912
        %v4101 = vpack.c.b16 %v2935, %v2913
        %v4102 = vpack.c.b16 %v2936, %v2914
        %v4103 = vpack.c.b16 %v2937, %v2915
        %v4104 = vpack.c.b16 %v2938, %v2916
        %v4105 = vpack.c.b16 %v2939, %v2917
        %v4106 = vpack.c.b16 %v2940, %v2918
        %v4107 = vpack.c.b16 %v2941, %v2919
        %v4108 = vpack.c.b16 %v2942, %v2920
        %v4109 = vpack.c.b16 %v2943, %v2921
        %v4110 = vpack.c.b16 %v2944, %v2922
        %v4111 = vpack.c.b16 %v2945, %v2923
        %v4112 = vpack.c.b16 %v2946, %v2924
        %v4113 = vpack.c.b16 %v2947, %v2925
        %v4114 = vpack.c.b16 %v2948, %v2926
        %v4115 = vpack.c.b16 %v2949, %v2927
        %v4116 = vpack.c.b16 %v2972, %v2950
        %v4117 = vpack.c.b16 %v2973, %v2951
        %v4118 = vpack.c.b16 %v2974, %v2952
        %v4119 = vpack.c.b16 %v2975, %v2953
        %v4120 = vpack.c.b16 %v2976, %v2954
        %v4121 = vpack.c.b16 %v2977, %v2955
        %v4122 = vpack.c.b16 %v2978, %v2956
        %v4123 = vpack.c.b16 %v2979, %v2957
        %v4124 = vpack.c.b16 %v2980, %v2958
        %v4125 = vpack.c.b16 %v2981, %v2959
        %v4126 = vpack.c.b16 %v2982, %v2960
        %v4127 = vpack.c.b16 %v2983, %v2961
        %v4128 = vpack.c.b16 %v2984, %v2962
        %v4129 = vpack.c.b16 %v2985, %v2963
        %v4130 = vpack.c.b16 %v2986, %v2964
        %v4131 = vpack.c.b16 %v2987, %v2965
        %v4132 = vpack.c.b16 %v2988, %v2966
        %v4133 = vpack.c.b16 %v2989, %v2967
        %v4134 = vpack.c.b16 %v2990, %v2968
        %v4135 = vpack.c.b16 %v2991, %v2969
        %v4136 = vpack.c.b16 %v2992, %v2970
        %v4137 = vpack.c.b16 %v2993, %v2971
        %v4138 = vpack.c.b16 %v3016, %v2994
        %v4139 = vpack.c.b16 %v3017, %v2995
        %v4140 = vpack.c.b16 %v3018, %v2996
        %v4141 = vpack.c.b16 %v3019, %v2997
        %v4142 = vpack.c.b16 %v3020, %v2998
        %v4143 = vpack.c.b16 %v3021, %v2999
        %v4144 = vpack.c.b16 %v3022, %v3000
        %v4145 = vpack.c.b16 %v3023, %v3001
        %v4146 = vpack.c.b16 %v3024, %v3002
        %v4147 = vpack.c.b16 %v3025, %v3003
        %v4148 = vpack.c.b16 %v3026, %v3004
        %v4149 = vpack.c.b16 %v3027, %v3005
        %v4150 = vpack.c.b16 %v3028, %v3006
        %v4151 = vpack.c.b16 %v3029, %v3007
        %v4152 = vpack.c.b16 %v3030, %v3008
        %v4153 = vpack.c.b16 %v3031, %v3009
        %v4154 = vpack.c.b16 %v3032, %v3010
        %v4155 = vpack.c.b16 %v3033, %v3011
        %v4156 = vpack.c.b16 %v3034, %v3012
        %v4157 = vpack.c.b16 %v3035, %v3013
        %v4158 = vpack.c.b16 %v3036, %v3014
        %v4159 = vpack.c.b16 %v3037, %v3015
        %v4160 = vpack.c.b16 %v3060, %v3038
        %v4161 = vpack.c.b16 %v3061, %v3039
        %v4162 = vpack.c.b16 %v3062, %v3040
        %v4163 = vpack.c.b16 %v3063, %v3041
        %v4164 = vpack.c.b16 %v3064, %v3042
        %v4165 = vpack.c.b16 %v3065, %v3043
        %v4166 = vpack.c.b16 %v3066, %v3044
        %v4167 = vpack.c.b16 %v3067, %v3045
        %v4168 = vpack.c.b16 %v3068, %v3046
        %v4169 = vpack.c.b16 %v3069, %v3047
        %v4170 = vpack.c.b16 %v3070, %v3048
        %v4171 = vpack.c.b16 %v3071, %v3049
        %v4172 = vpack.c.b16 %v3072, %v3050
        %v4173 = vpack.c.b16 %v3073, %v3051
        %v4174 = vpack.c.b16 %v3074, %v3052
        %v4175 = vpack.c.b16 %v3075, %v3053
        %v4176 = vpack.c.b16 %v3076, %v3054
        %v4177 = vpack.c.b16 %v3077, %v3055
        %v4178 = vpack.c.b16 %v3078, %v3056
        %v4179 = vpack.c.b16 %v3079, %v3057
        %v4180 = vpack.c.b16 %v3080, %v3058
        %v4181 = vpack.c.b16 %v3081, %v3059
        %v4182 = vpack.c.b16 %v3104, %v3082
        %v4183 = vpack.c.b16 %v3105, %v3083
        %v4184 = vpack.c.b16 %v3106, %v3084
        %v4185 = vpack.c.b16 %v3107, %v3085
        %v4186 = vpack.c.b16 %v3108, %v3086
        %v4187 = vpack.c.b16 %v3109, %v3087
        %v4188 = vpack.c.b16 %v3110, %v3088
        %v4189 = vpack.c.b16 %v3111, %v3089
        %v4190 = vpack.c.b16 %v3112, %v3090
        %v4191 = vpack.c.b16 %v3113, %v3091
        %v4192 = vpack.c.b16 %v3114, %v3092
        %v4193 = vpack.c.b16 %v3115, %v3093
        %v4194 = vpack.c.b16 %v3116, %v3094
        %v4195 = vpack.c.b16 %v3117, %v3095
        %v4196 = vpack.c.b16 %v3118, %v3096
        %v4197 = vpack.c.b16 %v3119, %v3097
        %v4198 = vpack.c.b16 %v3120, %v3098
        %v4199 = vpack.c.b16 %v3121, %v3099
        %v4200 = vpack.c.b16 %v3122, %v3100
        %v4201 = vpack.c.b16 %v3123, %v3101
        %v4202 = vpack.c.b16 %v3124, %v3102
        %v4203 = vpack.c.b16 %v3125, %v3103
        %v4204 = vpack.c.b16 %v3148, %v3126
        %v4205 = vpack.c.b16 %v3149, %v3127
        %v4206 = vpack.c.b16 %v3150, %v3128
        %v4207 = vpack.c.b16 %v3151, %v3129
        %v4208 = vpack.c.b16 %v3152, %v3130
        %v4209 = vpack.c.b16 %v3153, %v3131
        %v4210 = vpack.c.b16 %v3154, %v3132
        %v4211 = vpack.c.b16 %v3155, %v3133
        %v4212 = vpack.c.b16 %v3156, %v3134
        %v4213 = vpack.c.b16 %v3157, %v3135
        %v4214 = vpack.c.b16 %v3158, %v3136
        %v4215 = vpack.c.b16 %v3159, %v3137
        %v4216 = vpack.c.b16 %v3160, %v3138
        %v4217 = vpack.c.b16 %v3161, %v3139
        %v4218 = vpack.c.b16 %v3162, %v3140
        %v4219 = vpack.c.b16 %v3163, %v3141
        %v4220 = vpack.c.b16 %v3164, %v3142
        %v4221 = vpack.c.b16 %v3165, %v3143
        %v4222 = vpack.c.b16 %v3166, %v3144
        %v4223 = vpack.c.b16 %v3167, %v3145
        %v4224 = vpack.c.b16 %v3168, %v3146
        %v4225 = vpack.c.b16 %v3169, %v3147
        %v4226 = vpack.c.b16 %v3192, %v3170
        %v4227 = vpack.c.b16 %v3193, %v3171
        %v4228 = vpack.c.b16 %v3194, %v3172
        %v4229 = vpack.c.b16 %v3195, %v3173
        %v4230 = vpack.c.b16 %v3196, %v3174
        %v4231 = vpack.c.b16 %v3197, %v3175
        %v4232 = vpack.c.b16 %v3198, %v3176
        %v4233 = vpack.c.b16 %v3199, %v3177
        %v4234 = vpack.c.b16 %v3200, %v3178
        %v4235 = vpack.c.b16 %v3201, %v3179
        %v4236 = vpack.c.b16 %v3202, %v3180
        %v4237 = vpack.c.b16 %v3203, %v3181
        %v4238 = vpack.c.b16 %v3204, %v3182
        %v4239 = vpack.c.b16 %v3205, %v3183
        %v4240 = vpack.c.b16 %v3206, %v3184
        %v4241 = vpack.c.b16 %v3207, %v3185
        %v4242 = vpack.c.b16 %v3208, %v3186
        %v4243 = vpack.c.b16 %v3209, %v3187
        %v4244 = vpack.c.b16 %v3210, %v3188
        %v4245 = vpack.c.b16 %v3211, %v3189
        %v4246 = vpack.c.b16 %v3212, %v3190
        %v4247 = vpack.c.b16 %v3213, %v3191
        %v4248 = vpack.c.b16 %v3236, %v3214
        %v4249 = vpack.c.b16 %v3237, %v3215
        %v4250 = vpack.c.b16 %v3238, %v3216
        %v4251 = vpack.c.b16 %v3239, %v3217
        %v4252 = vpack.c.b16 %v3240, %v3218
        %v4253 = vpack.c.b16 %v3241, %v3219
        %v4254 = vpack.c.b16 %v3242, %v3220
        %v4255 = vpack.c.b16 %v3243, %v3221
        %v4256 = vpack.c.b16 %v3244, %v3222
        %v4257 = vpack.c.b16 %v3245, %v3223
        %v4258 = vpack.c.b16 %v3246, %v3224
        %v4259 = vpack.c.b16 %v3247, %v3225
        %v4260 = vpack.c.b16 %v3248, %v3226
        %v4261 = vpack.c.b16 %v3249, %v3227
        %v4262 = vpack.c.b16 %v3250, %v3228
        %v4263 = vpack.c.b16 %v3251, %v3229
        %v4264 = vpack.c.b16 %v3252, %v3230
        %v4265 = vpack.c.b16 %v3253, %v3231
        %v4266 = vpack.c.b16 %v3254, %v3232
        %v4267 = vpack.c.b16 %v3255, %v3233
        %v4268 = vpack.c.b16 %v3256, %v3234
        %v4269 = vpack.c.b16 %v3257, %v3235
        %v4270 = vpack.c.b16 %v3280, %v3258
        %v4271 = vpack.c.b16 %v3281, %v3259
        %v4272 = vpack.c.b16 %v3282, %v3260
        %v4273 = vpack.c.b16 %v3283, %v3261
        %v4274 = vpack.c.b16 %v3284, %v3262
        %v4275 = vpack.c.b16 %v3285, %v3263
        %v4276 = vpack.c.b16 %v3286, %v3264
        %v4277 = vpack.c.b16 %v3287, %v3265
        %v4278 = vpack.c.b16 %v3288, %v3266
        %v4279 = vpack.c.b16 %v3289, %v3267
        %v4280 = vpack.c.b16 %v3290, %v3268
        %v4281 = vpack.c.b16 %v3291, %v3269
        %v4282 = vpack.c.b16 %v3292, %v3270
        %v4283 = vpack.c.b16 %v3293, %v3271
        %v4284 = vpack.c.b16 %v3294, %v3272
        %v4285 = vpack.c.b16 %v3295, %v3273
        %v4286 = vpack.c.b16 %v3296, %v3274
        %v4287 = vpack.c.b16 %v3297, %v3275
        %v4288 = vpack.c.b16 %v3298, %v3276
        %v4289 = vpack.c.b16 %v3299, %v3277
        %v4290 = vpack.c.b16 %v3300, %v3278
        %v4291 = vpack.c.b16 %v3301, %v3279
        %v4292 = vpack.c.b16 %v3324, %v3302
        %v4293 = vpack.c.b16 %v3325, %v3303
        %v4294 = vpack.c.b16 %v3326, %v3304
        %v4295 = vpack.c.b16 %v3327, %v3305
        %v4296 = vpack.c.b16 %v3328, %v3306
        %v4297 = vpack.c.b16 %v3329, %v3307
        %v4298 = vpack.c.b16 %v3330, %v3308
        %v4299 = vpack.c.b16 %v3331, %v3309
        %v4300 = vpack.c.b16 %v3332, %v3310
        %v4301 = vpack.c.b16 %v3333, %v3311
        %v4302 = vpack.c.b16 %v3334, %v3312
        %v4303 = vpack.c.b16 %v3335, %v3313
        %v4304 = vpack.c.b16 %v3336, %v3314
        %v4305 = vpack.c.b16 %v3337, %v3315
        %v4306 = vpack.c.b16 %v3338, %v3316
        %v4307 = vpack.c.b16 %v3339, %v3317
        %v4308 = vpack.c.b16 %v3340, %v3318
        %v4309 = vpack.c.b16 %v3341, %v3319
        %v4310 = vpack.c.b16 %v3342, %v3320
        %v4311 = vpack.c.b16 %v3343, %v3321
        %v4312 = vpack.c.b16 %v3344, %v3322
        %v4313 = vpack.c.b16 %v3345, %v3323
        %v4314 = vpack.c.b16 %v3368, %v3346
        %v4315 = vpack.c.b16 %v3369, %v3347
        %v4316 = vpack.c.b16 %v3370, %v3348
        %v4317 = vpack.c.b16 %v3371, %v3349
        %v4318 = vpack.c.b16 %v3372, %v3350
        %v4319 = vpack.c.b16 %v3373, %v3351
        %v4320 = vpack.c.b16 %v3374, %v3352
        %v4321 = vpack.c.b16 %v3375, %v3353
        %v4322 = vpack.c.b16 %v3376, %v3354
        %v4323 = vpack.c.b16 %v3377, %v3355
        %v4324 = vpack.c.b16 %v3378, %v3356
        %v4325 = vpack.c.b16 %v3379, %v3357
        %v4326 = vpack.c.b16 %v3380, %v3358
        %v4327 = vpack.c.b16 %v3381, %v3359
        %v4328 = vpack.c.b16 %v3382, %v3360
        %v4329 = vpack.c.b16 %v3383, %v3361
        %v4330 = vpack.c.b16 %v3384, %v3362
        %v4331 = vpack.c.b16 %v3385, %v3363
        %v4332 = vpack.c.b16 %v3386, %v3364
        %v4333 = vpack.c.b16 %v3387, %v3365
        %v4334 = vpack.c.b16 %v3388, %v3366
        %v4335 = vpack.c.b16 %v3389, %v3367
        %v4336 = vpack.c.b16 %v3412, %v3390
        %v4337 = vpack.c.b16 %v3413, %v3391
        %v4338 = vpack.c.b16 %v3414, %v3392
        %v4339 = vpack.c.b16 %v3415, %v3393
        %v4340 = vpack.c.b16 %v3416, %v3394
        %v4341 = vpack.c.b16 %v3417, %v3395
        %v4342 = vpack.c.b16 %v3418, %v3396
        %v4343 = vpack.c.b16 %v3419, %v3397
        %v4344 = vpack.c.b16 %v3420, %v3398
        %v4345 = vpack.c.b16 %v3421, %v3399
        %v4346 = vpack.c.b16 %v3422, %v3400
        %v4347 = vpack.c.b16 %v3423, %v3401
        %v4348 = vpack.c.b16 %v3424, %v3402
        %v4349 = vpack.c.b16 %v3425, %v3403
        %v4350 = vpack.c.b16 %v3426, %v3404
        %v4351 = vpack.c.b16 %v3427, %v3405
        %v4352 = vpack.c.b16 %v3428, %v3406
        %v4353 = vpack.c.b16 %v3429, %v3407
        %v4354 = vpack.c.b16 %v3430, %v3408
        %v4355 = vpack.c.b16 %v3431, %v3409
        %v4356 = vpack.c.b16 %v3432, %v3410
        %v4357 = vpack.c.b16 %v3433, %v3411
        %v4358 = vpack.c.b16 %v3456, %v3434
        %v4359 = vpack.c.b16 %v3457, %v3435
        %v4360 = vpack.c.b16 %v3458, %v3436
        %v4361 = vpack.c.b16 %v3459, %v3437
        %v4362 = vpack.c.b16 %v3460, %v3438
        %v4363 = vpack.c.b16 %v3461, %v3439
        %v4364 = vpack.c.b16 %v3462, %v3440
        %v4365 = vpack.c.b16 %v3463, %v3441
        %v4366 = vpack.c.b16 %v3464, %v3442
        %v4367 = vpack.c.b16 %v3465, %v3443
        %v4368 = vpack.c.b16 %v3466, %v3444
        %v4369 = vpack.c.b16 %v3467, %v3445
        %v4370 = vpack.c.b16 %v3468, %v3446
        %v4371 = vpack.c.b16 %v3469, %v3447
        %v4372 = vpack.c.b16 %v3470, %v3448
        %v4373 = vpack.c.b16 %v3471, %v3449
        %v4374 = vpack.c.b16 %v3472, %v3450
        %v4375 = vpack.c.b16 %v3473, %v3451
        %v4376 = vpack.c.b16 %v3474, %v3452
        %v4377 = vpack.c.b16 %v3475, %v3453
        %v4378 = vpack.c.b16 %v3476, %v3454
        %v4379 = vpack.c.b16 %v3477, %v3455
        %v4380 = vpack.c.b16 %v3500, %v3478
        %v4381 = vpack.c.b16 %v3501, %v3479
        %v4382 = vpack.c.b16 %v3502, %v3480
        %v4383 = vpack.c.b16 %v3503, %v3481
        %v4384 = vpack.c.b16 %v3504, %v3482
        %v4385 = vpack.c.b16 %v3505, %v3483
        %v4386 = vpack.c.b16 %v3506, %v3484
        %v4387 = vpack.c.b16 %v3507, %v3485
        %v4388 = vpack.c.b16 %v3508, %v3486
        %v4389 = vpack.c.b16 %v3509, %v3487
        %v4390 = vpack.c.b16 %v3510, %v3488
        %v4391 = vpack.c.b16 %v3511, %v3489
        %v4392 = vpack.c.b16 %v3512, %v3490
        %v4393 = vpack.c.b16 %v3513, %v3491
        %v4394 = vpack.c.b16 %v3514, %v3492
        %v4395 = vpack.c.b16 %v3515, %v3493
        %v4396 = vpack.c.b16 %v3516, %v3494
        %v4397 = vpack.c.b16 %v3517, %v3495
        %v4398 = vpack.c.b16 %v3518, %v3496
        %v4399 = vpack.c.b16 %v3519, %v3497
        %v4400 = vpack.c.b16 %v3520, %v3498
        %v4401 = vpack.c.b16 %v3521, %v3499
        %v4402 = vpack.c.b16 %v3544, %v3522
        %v4403 = vpack.c.b16 %v3545, %v3523
        %v4404 = vpack.c.b16 %v3546, %v3524
        %v4405 = vpack.c.b16 %v3547, %v3525
        %v4406 = vpack.c.b16 %v3548, %v3526
        %v4407 = vpack.c.b16 %v3549, %v3527
        %v4408 = vpack.c.b16 %v3550, %v3528
        %v4409 = vpack.c.b16 %v3551, %v3529
        %v4410 = vpack.c.b16 %v3552, %v3530
        %v4411 = vpack.c.b16 %v3553, %v3531
        %v4412 = vpack.c.b16 %v3554, %v3532
        %v4413 = vpack.c.b16 %v3555, %v3533
        %v4414 = vpack.c.b16 %v3556, %v3534
        %v4415 = vpack.c.b16 %v3557, %v3535
        %v4416 = vpack.c.b16 %v3558, %v3536
        %v4417 = vpack.c.b16 %v3559, %v3537
        %v4418 = vpack.c.b16 %v3560, %v3538
        %v4419 = vpack.c.b16 %v3561, %v3539
        %v4420 = vpack.c.b16 %v3562, %v3540
        %v4421 = vpack.c.b16 %v3563, %v3541
        %v4422 = vpack.c.b16 %v3564, %v3542
        %v4423 = vpack.c.b16 %v3565, %v3543
        %v4424 = vpack.c.b16 %v3588, %v3566
        %v4425 = vpack.c.b16 %v3589, %v3567
        %v4426 = vpack.c.b16 %v3590, %v3568
        %v4427 = vpack.c.b16 %v3591, %v3569
        %v4428 = vpack.c.b16 %v3592, %v3570
        %v4429 = vpack.c.b16 %v3593, %v3571
        %v4430 = vpack.c.b16 %v3594, %v3572
        %v4431 = vpack.c.b16 %v3595, %v3573
        %v4432 = vpack.c.b16 %v3596, %v3574
        %v4433 = vpack.c.b16 %v3597, %v3575
        %v4434 = vpack.c.b16 %v3598, %v3576
        %v4435 = vpack.c.b16 %v3599, %v3577
        %v4436 = vpack.c.b16 %v3600, %v3578
        %v4437 = vpack.c.b16 %v3601, %v3579
        %v4438 = vpack.c.b16 %v3602, %v3580
        %v4439 = vpack.c.b16 %v3603, %v3581
        %v4440 = vpack.c.b16 %v3604, %v3582
        %v4441 = vpack.c.b16 %v3605, %v3583
        %v4442 = vpack.c.b16 %v3606, %v3584
        %v4443 = vpack.c.b16 %v3607, %v3585
        %v4444 = vpack.c.b16 %v3608, %v3586
        %v4445 = vpack.c.b16 %v3609, %v3587
        %v4446 = vpack.c.b16 %v3632, %v3610
        %v4447 = vpack.c.b16 %v3633, %v3611
        %v4448 = vpack.c.b16 %v3634, %v3612
        %v4449 = vpack.c.b16 %v3635, %v3613
        %v4450 = vpack.c.b16 %v3636, %v3614
        %v4451 = vpack.c.b16 %v3637, %v3615
        %v4452 = vpack.c.b16 %v3638, %v3616
        %v4453 = vpack.c.b16 %v3639, %v3617
        %v4454 = vpack.c.b16 %v3640, %v3618
        %v4455 = vpack.c.b16 %v3641, %v3619
        %v4456 = vpack.c.b16 %v3642, %v3620
        %v4457 = vpack.c.b16 %v3643, %v3621
        %v4458 = vpack.c.b16 %v3644, %v3622
        %v4459 = vpack.c.b16 %v3645, %v3623
        %v4460 = vpack.c.b16 %v3646, %v3624
        %v4461 = vpack.c.b16 %v3647, %v3625
        %v4462 = vpack.c.b16 %v3648, %v3626
        %v4463 = vpack.c.b16 %v3649, %v3627
        %v4464 = vpack.c.b16 %v3650, %v3628
        %v4465 = vpack.c.b16 %v3651, %v3629
        %v4466 = vpack.c.b16 %v3652, %v3630
        %v4467 = vpack.c.b16 %v3653, %v3631
        %v4468 = vpack.c.b16 %v3676, %v3654
        %v4469 = vpack.c.b16 %v3677, %v3655
        %v4470 = vpack.c.b16 %v3678, %v3656
        %v4471 = vpack.c.b16 %v3679, %v3657
        %v4472 = vpack.c.b16 %v3680, %v3658
        %v4473 = vpack.c.b16 %v3681, %v3659
        %v4474 = vpack.c.b16 %v3682, %v3660
        %v4475 = vpack.c.b16 %v3683, %v3661
        %v4476 = vpack.c.b16 %v3684, %v3662
        %v4477 = vpack.c.b16 %v3685, %v3663
        %v4478 = vpack.c.b16 %v3686, %v3664
        %v4479 = vpack.c.b16 %v3687, %v3665
        %v4480 = vpack.c.b16 %v3688, %v3666
        %v4481 = vpack.c.b16 %v3689, %v3667
        %v4482 = vpack.c.b16 %v3690, %v3668
        %v4483 = vpack.c.b16 %v3691, %v3669
        %v4484 = vpack.c.b16 %v3692, %v3670
        %v4485 = vpack.c.b16 %v3693, %v3671
        %v4486 = vpack.c.b16 %v3694, %v3672
        %v4487 = vpack.c.b16 %v3695, %v3673
        %v4488 = vpack.c.b16 %v3696, %v3674
        %v4489 = vpack.c.b16 %v3697, %v3675
        %v4490 = vpack.c.b16 %v3720, %v3698
        %v4491 = vpack.c.b16 %v3721, %v3699
        %v4492 = vpack.c.b16 %v3722, %v3700
        %v4493 = vpack.c.b16 %v3723, %v3701
        %v4494 = vpack.c.b16 %v3724, %v3702
        %v4495 = vpack.c.b16 %v3725, %v3703
        %v4496 = vpack.c.b16 %v3726, %v3704
        %v4497 = vpack.c.b16 %v3727, %v3705
        %v4498 = vpack.c.b16 %v3728, %v3706
        %v4499 = vpack.c.b16 %v3729, %v3707
        %v4500 = vpack.c.b16 %v3730, %v3708
        %v4501 = vpack.c.b16 %v3731, %v3709
        %v4502 = vpack.c.b16 %v3732, %v3710
        %v4503 = vpack.c.b16 %v3733, %v3711
        %v4504 = vpack.c.b16 %v3734, %v3712
        %v4505 = vpack.c.b16 %v3735, %v3713
        %v4506 = vpack.c.b16 %v3736, %v3714
        %v4507 = vpack.c.b16 %v3737, %v3715
        %v4508 = vpack.c.b16 %v3738, %v3716
        %v4509 = vpack.c.b16 %v3739, %v3717
        %v4510 = vpack.c.b16 %v3740, %v3718
        %v4511 = vpack.c.b16 %v3741, %v3719
        %v4512 = vpack.c.b16 %v3764, %v3742
        %v4513 = vpack.c.b16 %v3765, %v3743
        %v4514 = vpack.c.b16 %v3766, %v3744
        %v4515 = vpack.c.b16 %v3767, %v3745
        %v4516 = vpack.c.b16 %v3768, %v3746
        %v4517 = vpack.c.b16 %v3769, %v3747
        %v4518 = vpack.c.b16 %v3770, %v3748
        %v4519 = vpack.c.b16 %v3771, %v3749
        %v4520 = vpack.c.b16 %v3772, %v3750
        %v4521 = vpack.c.b16 %v3773, %v3751
        %v4522 = vpack.c.b16 %v3774, %v3752
        %v4523 = vpack.c.b16 %v3775, %v3753
        %v4524 = vpack.c.b16 %v3776, %v3754
        %v4525 = vpack.c.b16 %v3777, %v3755
        %v4526 = vpack.c.b16 %v3778, %v3756
        %v4527 = vpack.c.b16 %v3779, %v3757
        %v4528 = vpack.c.b16 %v3780, %v3758
        %v4529 = vpack.c.b16 %v3781, %v3759
        %v4530 = vpack.c.b16 %v3782, %v3760
        %v4531 = vpack.c.b16 %v3783, %v3761
        %v4532 = vpack.c.b16 %v3784, %v3762
        %v4533 = vpack.c.b16 %v3785, %v3763
        %v4534 = vpack.c.b16 %v3808, %v3786
        %v4535 = vpack.c.b16 %v3809, %v3787
        %v4536 = vpack.c.b16 %v3810, %v3788
        %v4537 = vpack.c.b16 %v3811, %v3789
        %v4538 = vpack.c.b16 %v3812, %v3790
        %v4539 = vpack.c.b16 %v3813, %v3791
        %v4540 = vpack.c.b16 %v3814, %v3792
        %v4541 = vpack.c.b16 %v3815, %v3793
        %v4542 = vpack.c.b16 %v3816, %v3794
        %v4543 = vpack.c.b16 %v3817, %v3795
        %v4544 = vpack.c.b16 %v3818, %v3796
        %v4545 = vpack.c.b16 %v3819, %v3797
        %v4546 = vpack.c.b16 %v3820, %v3798
        %v4547 = vpack.c.b16 %v3821, %v3799
        %v4548 = vpack.c.b16 %v3822, %v3800
        %v4549 = vpack.c.b16 %v3823, %v3801
        %v4550 = vpack.c.b16 %v3824, %v3802
        %v4551 = vpack.c.b16 %v3825, %v3803
        %v4552 = vpack.c.b16 %v3826, %v3804
        %v4553 = vpack.c.b16 %v3827, %v3805
        %v4554 = vpack.c.b16 %v3828, %v3806
        %v4555 = vpack.c.b16 %v3829, %v3807
        %v4556 = vpack.c.b16 %v3852, %v3830
        %v4557 = vpack.c.b16 %v3853, %v3831
        %v4558 = vpack.c.b16 %v3854, %v3832
        %v4559 = vpack.c.b16 %v3855, %v3833
        %v4560 = vpack.c.b16 %v3856, %v3834
        %v4561 = vpack.c.b16 %v3857, %v3835
        %v4562 = vpack.c.b16 %v3858, %v3836
        %v4563 = vpack.c.b16 %v3859, %v3837
        %v4564 = vpack.c.b16 %v3860, %v3838
        %v4565 = vpack.c.b16 %v3861, %v3839
        %v4566 = vpack.c.b16 %v3862, %v3840
        %v4567 = vpack.c.b16 %v3863, %v3841
        %v4568 = vpack.c.b16 %v3864, %v3842
        %v4569 = vpack.c.b16 %v3865, %v3843
        %v4570 = vpack.c.b16 %v3866, %v3844
        %v4571 = vpack.c.b16 %v3867, %v3845
        %v4572 = vpack.c.b16 %v3868, %v3846
        %v4573 = vpack.c.b16 %v3869, %v3847
        %v4574 = vpack.c.b16 %v3870, %v3848
        %v4575 = vpack.c.b16 %v3871, %v3849
        %v4576 = vpack.c.b16 %v3872, %v3850
        %v4577 = vpack.c.b16 %v3873, %v3851
        %5282 = vmatprep.subr.bf16.mxu0 %v3875
        %5283 = vmatpush1.bf16.msra.mxu0 %v3874
        %5284 = vmatprep.subr.bf16.mxu0 %v3897
        %5285 = vmatpush1.bf16.msra.mxu0 %v3896
        %5286 = vmatprep.subr.bf16.mxu0 %v3919
        %5287 = vmatpush1.bf16.msra.mxu0 %v3918
        %5288 = vmatprep.subr.bf16.mxu0 %v3941
        %5289 = vmatpush1.bf16.msra.mxu0 %v3940
        %5290 = vmatprep.subr.bf16.mxu0 %v3963
        %5291 = vmatpush1.bf16.msra.mxu0 %v3962
        %5292 = vmatprep.subr.bf16.mxu0 %v3985
        %5293 = vmatpush1.bf16.msra.mxu0 %v3984
        %5294 = vmatprep.subr.bf16.mxu0 %v4007
        %5295 = vmatpush1.bf16.msra.mxu0 %v4006
        %5296 = vmatprep.subr.bf16.mxu0 %v4029
        %5297 = vmatpush1.bf16.msra.mxu0 %v4028
        %5298 = vmatprep.subr.bf16.mxu0 %v4051
        %5299 = vmatpush1.bf16.msra.mxu0 %v4050
        %5300 = vmatprep.subr.bf16.mxu0 %v4073
        %5301 = vmatpush1.bf16.msra.mxu0 %v4072
        %5302 = vmatprep.subr.bf16.mxu0 %v4095
        %5303 = vmatpush1.bf16.msra.mxu0 %v4094
        %5304 = vmatprep.subr.bf16.mxu0 %v4117
        %5305 = vmatpush1.bf16.msra.mxu0 %v4116
        %5306 = vmatprep.subr.bf16.mxu0 %v4139
        %5307 = vmatpush1.bf16.msra.mxu0 %v4138
        %5308 = vmatprep.subr.bf16.mxu0 %v4161
        %5309 = vmatpush1.bf16.msra.mxu0 %v4160
        %5310 = vmatprep.subr.bf16.mxu0 %v4183
        %5311 = vmatpush1.bf16.msra.mxu0 %v4182
        %5312 = vmatprep.subr.bf16.mxu0 %v4205
        %5313 = vmatpush1.bf16.msra.mxu0 %v4204
        %5314 = vmatprep.mubr.bf16.mxu0 %v939
        %5315 = vmatmul.mubr.bf16.gmra.mrb[0].mxu0 %v938
        %v5316 = vpop.f32.mrb[0].mxu0
        %v5317 = vadd.f32 %v1655, %v5316
        %v5318 = vpop.f32.mrb[0].mxu0
        %v5319 = vadd.f32 %v1659, %v5318
        %v5320 = vpop.f32.mrb[0].mxu0
        %v5321 = vpop.f32.mrb[0].mxu0
        %5322 = vdwg.mxu0
        %5323 = vmatprep.subr.bf16.mxu0 %v4227
        %5324 = vmatpush1.bf16.msra.mxu0 %v4226
        %5325 = vmatprep.subr.bf16.mxu0 %v4249
        %5326 = vmatpush1.bf16.msra.mxu0 %v4248
        %5327 = vmatprep.subr.bf16.mxu0 %v4271
        %5328 = vmatpush1.bf16.msra.mxu0 %v4270
        %5329 = vmatprep.subr.bf16.mxu0 %v4293
        %5330 = vmatpush1.bf16.msra.mxu0 %v4292
        %5331 = vmatprep.subr.bf16.mxu0 %v4315
        %5332 = vmatpush1.bf16.msra.mxu0 %v4314
        %5333 = vmatprep.subr.bf16.mxu0 %v4337
        %5334 = vmatpush1.bf16.msra.mxu0 %v4336
        %5335 = vmatprep.subr.bf16.mxu0 %v4359
        %5336 = vmatpush1.bf16.msra.mxu0 %v4358
        %5337 = vmatprep.subr.bf16.mxu0 %v4381
        %5338 = vmatpush1.bf16.msra.mxu0 %v4380
        %5339 = vmatprep.subr.bf16.mxu0 %v4403
        %5340 = vmatpush1.bf16.msra.mxu0 %v4402
        %5341 = vmatprep.subr.bf16.mxu0 %v4425
        %5342 = vmatpush1.bf16.msra.mxu0 %v4424
        %5343 = vmatprep.subr.bf16.mxu0 %v4447
        %5344 = vmatpush1.bf16.msra.mxu0 %v4446
        %5345 = vmatprep.subr.bf16.mxu0 %v4469
        %5346 = vmatpush1.bf16.msra.mxu0 %v4468
        %5347 = vmatprep.subr.bf16.mxu0 %v4491
        %5348 = vmatpush1.bf16.msra.mxu0 %v4490
        %5349 = vmatprep.subr.bf16.mxu0 %v4513
        %5350 = vmatpush1.bf16.msra.mxu0 %v4512
        %5351 = vmatprep.subr.bf16.mxu0 %v4535
        %5352 = vmatpush1.bf16.msra.mxu0 %v4534
        %5353 = vmatprep.subr.bf16.mxu0 %v4557
        %5354 = vmatpush1.bf16.msra.mxu0 %v4556
        %5355 = vmatprep.mubr.bf16.mxu0 %v941
        %5356 = vmatmul.mubr.bf16.gmra.mrb[0].mxu0 %v940
        %v5357 = vpop.f32.mrb[0].mxu0
        %v5358 = vadd.f32 %v5317, %v5357
        %v5359 = vpop.f32.mrb[0].mxu0
        %v5360 = vadd.f32 %v5319, %v5359
        %v5361 = vpop.f32.mrb[0].mxu0
        %v5362 = vpop.f32.mrb[0].mxu0
        %5363 = vdwg.mxu0
        %5364 = vmatprep.subr.bf16.mxu0 %v3877
        %5365 = vmatpush1.bf16.msra.mxu0 %v3876
        %5366 = vmatprep.subr.bf16.mxu0 %v3899
        %5367 = vmatpush1.bf16.msra.mxu0 %v3898
        %5368 = vmatprep.subr.bf16.mxu0 %v3921
        %5369 = vmatpush1.bf16.msra.mxu0 %v3920
        %5370 = vmatprep.subr.bf16.mxu0 %v3943
        %5371 = vmatpush1.bf16.msra.mxu0 %v3942
        %5372 = vmatprep.subr.bf16.mxu0 %v3965
        %5373 = vmatpush1.bf16.msra.mxu0 %v3964
        %5374 = vmatprep.subr.bf16.mxu0 %v3987
        %5375 = vmatpush1.bf16.msra.mxu0 %v3986
        %5376 = vmatprep.subr.bf16.mxu0 %v4009
        %5377 = vmatpush1.bf16.msra.mxu0 %v4008
        %5378 = vmatprep.subr.bf16.mxu0 %v4031
        %5379 = vmatpush1.bf16.msra.mxu0 %v4030
        %5380 = vmatprep.subr.bf16.mxu0 %v4053
        %5381 = vmatpush1.bf16.msra.mxu0 %v4052
        %5382 = vmatprep.subr.bf16.mxu0 %v4075
        %5383 = vmatpush1.bf16.msra.mxu0 %v4074
        %5384 = vmatprep.subr.bf16.mxu0 %v4097
        %5385 = vmatpush1.bf16.msra.mxu0 %v4096
        %5386 = vmatprep.subr.bf16.mxu0 %v4119
        %5387 = vmatpush1.bf16.msra.mxu0 %v4118
        %5388 = vmatprep.subr.bf16.mxu0 %v4141
        %5389 = vmatpush1.bf16.msra.mxu0 %v4140
        %5390 = vmatprep.subr.bf16.mxu0 %v4163
        %5391 = vmatpush1.bf16.msra.mxu0 %v4162
        %5392 = vmatprep.subr.bf16.mxu0 %v4185
        %5393 = vmatpush1.bf16.msra.mxu0 %v4184
        %5394 = vmatprep.subr.bf16.mxu0 %v4207
        %5395 = vmatpush1.bf16.msra.mxu0 %v4206
        %5396 = vmatprep.mubr.bf16.mxu0 %v939
        %5397 = vmatmul.mubr.bf16.gmra.mrb[0].mxu0 %v938
        %v5398 = vpop.f32.mrb[0].mxu0
        %v5399 = vadd.f32 %v1663, %v5398
        %v5400 = vpop.f32.mrb[0].mxu0
        %v5401 = vadd.f32 %v1667, %v5400
        %v5402 = vpop.f32.mrb[0].mxu0
        %v5403 = vpop.f32.mrb[0].mxu0
        %5404 = vdwg.mxu0
        %5405 = vmatprep.subr.bf16.mxu0 %v4229
        %5406 = vmatpush1.bf16.msra.mxu0 %v4228
        %5407 = vmatprep.subr.bf16.mxu0 %v4251
        %5408 = vmatpush1.bf16.msra.mxu0 %v4250
        %5409 = vmatprep.subr.bf16.mxu0 %v4273
        %5410 = vmatpush1.bf16.msra.mxu0 %v4272
        %5411 = vmatprep.subr.bf16.mxu0 %v4295
        %5412 = vmatpush1.bf16.msra.mxu0 %v4294
        %5413 = vmatprep.subr.bf16.mxu0 %v4317
        %5414 = vmatpush1.bf16.msra.mxu0 %v4316
        %5415 = vmatprep.subr.bf16.mxu0 %v4339
        %5416 = vmatpush1.bf16.msra.mxu0 %v4338
        %5417 = vmatprep.subr.bf16.mxu0 %v4361
        %5418 = vmatpush1.bf16.msra.mxu0 %v4360
        %5419 = vmatprep.subr.bf16.mxu0 %v4383
        %5420 = vmatpush1.bf16.msra.mxu0 %v4382
        %5421 = vmatprep.subr.bf16.mxu0 %v4405
        %5422 = vmatpush1.bf16.msra.mxu0 %v4404
        %5423 = vmatprep.subr.bf16.mxu0 %v4427
        %5424 = vmatpush1.bf16.msra.mxu0 %v4426
        %5425 = vmatprep.subr.bf16.mxu0 %v4449
        %5426 = vmatpush1.bf16.msra.mxu0 %v4448
        %5427 = vmatprep.subr.bf16.mxu0 %v4471
        %5428 = vmatpush1.bf16.msra.mxu0 %v4470
        %5429 = vmatprep.subr.bf16.mxu0 %v4493
        %5430 = vmatpush1.bf16.msra.mxu0 %v4492
        %5431 = vmatprep.subr.bf16.mxu0 %v4515
        %5432 = vmatpush1.bf16.msra.mxu0 %v4514
        %5433 = vmatprep.subr.bf16.mxu0 %v4537
        %5434 = vmatpush1.bf16.msra.mxu0 %v4536
        %5435 = vmatprep.subr.bf16.mxu0 %v4559
        %5436 = vmatpush1.bf16.msra.mxu0 %v4558
        %5437 = vmatprep.mubr.bf16.mxu0 %v941
        %5438 = vmatmul.mubr.bf16.gmra.mrb[0].mxu0 %v940
        %v5439 = vpop.f32.mrb[0].mxu0
        %v5440 = vadd.f32 %v5399, %v5439
        %v5441 = vpop.f32.mrb[0].mxu0
        %v5442 = vadd.f32 %v5401, %v5441
        %v5443 = vpop.f32.mrb[0].mxu0
        %v5444 = vpop.f32.mrb[0].mxu0
        %5445 = vdwg.mxu0
        %5446 = vmatprep.subr.bf16.mxu0 %v3879
        %5447 = vmatpush1.bf16.msra.mxu0 %v3878
        %5448 = vmatprep.subr.bf16.mxu0 %v3901
        %5449 = vmatpush1.bf16.msra.mxu0 %v3900
        %5450 = vmatprep.subr.bf16.mxu0 %v3923
        %5451 = vmatpush1.bf16.msra.mxu0 %v3922
        %5452 = vmatprep.subr.bf16.mxu0 %v3945
        %5453 = vmatpush1.bf16.msra.mxu0 %v3944
        %5454 = vmatprep.subr.bf16.mxu0 %v3967
        %5455 = vmatpush1.bf16.msra.mxu0 %v3966
        %5456 = vmatprep.subr.bf16.mxu0 %v3989
        %5457 = vmatpush1.bf16.msra.mxu0 %v3988
        %5458 = vmatprep.subr.bf16.mxu0 %v4011
        %5459 = vmatpush1.bf16.msra.mxu0 %v4010
        %5460 = vmatprep.subr.bf16.mxu0 %v4033
        %5461 = vmatpush1.bf16.msra.mxu0 %v4032
        %5462 = vmatprep.subr.bf16.mxu0 %v4055
        %5463 = vmatpush1.bf16.msra.mxu0 %v4054
        %5464 = vmatprep.subr.bf16.mxu0 %v4077
        %5465 = vmatpush1.bf16.msra.mxu0 %v4076
        %5466 = vmatprep.subr.bf16.mxu0 %v4099
        %5467 = vmatpush1.bf16.msra.mxu0 %v4098
        %5468 = vmatprep.subr.bf16.mxu0 %v4121
        %5469 = vmatpush1.bf16.msra.mxu0 %v4120
        %5470 = vmatprep.subr.bf16.mxu0 %v4143
        %5471 = vmatpush1.bf16.msra.mxu0 %v4142
        %5472 = vmatprep.subr.bf16.mxu0 %v4165
        %5473 = vmatpush1.bf16.msra.mxu0 %v4164
        %5474 = vmatprep.subr.bf16.mxu0 %v4187
        %5475 = vmatpush1.bf16.msra.mxu0 %v4186
        %5476 = vmatprep.subr.bf16.mxu0 %v4209
        %5477 = vmatpush1.bf16.msra.mxu0 %v4208
        %5478 = vmatprep.mubr.bf16.mxu0 %v939
        %5479 = vmatmul.mubr.bf16.gmra.mrb[0].mxu0 %v938
        %v5480 = vpop.f32.mrb[0].mxu0
        %v5481 = vadd.f32 %v1671, %v5480
        %v5482 = vpop.f32.mrb[0].mxu0
        %v5483 = vadd.f32 %v1675, %v5482
        %v5484 = vpop.f32.mrb[0].mxu0
        %v5485 = vpop.f32.mrb[0].mxu0
        %5486 = vdwg.mxu0
        %5487 = vmatprep.subr.bf16.mxu0 %v4231
        %5488 = vmatpush1.bf16.msra.mxu0 %v4230
        %5489 = vmatprep.subr.bf16.mxu0 %v4253
        %5490 = vmatpush1.bf16.msra.mxu0 %v4252
        %5491 = vmatprep.subr.bf16.mxu0 %v4275
        %5492 = vmatpush1.bf16.msra.mxu0 %v4274
        %5493 = vmatprep.subr.bf16.mxu0 %v4297
        %5494 = vmatpush1.bf16.msra.mxu0 %v4296
        %5495 = vmatprep.subr.bf16.mxu0 %v4319
        %5496 = vmatpush1.bf16.msra.mxu0 %v4318
        %5497 = vmatprep.subr.bf16.mxu0 %v4341
        %5498 = vmatpush1.bf16.msra.mxu0 %v4340
        %5499 = vmatprep.subr.bf16.mxu0 %v4363
        %5500 = vmatpush1.bf16.msra.mxu0 %v4362
        %5501 = vmatprep.subr.bf16.mxu0 %v4385
        %5502 = vmatpush1.bf16.msra.mxu0 %v4384
        %5503 = vmatprep.subr.bf16.mxu0 %v4407
        %5504 = vmatpush1.bf16.msra.mxu0 %v4406
        %5505 = vmatprep.subr.bf16.mxu0 %v4429
        %5506 = vmatpush1.bf16.msra.mxu0 %v4428
        %5507 = vmatprep.subr.bf16.mxu0 %v4451
        %5508 = vmatpush1.bf16.msra.mxu0 %v4450
        %5509 = vmatprep.subr.bf16.mxu0 %v4473
        %5510 = vmatpush1.bf16.msra.mxu0 %v4472
        %5511 = vmatprep.subr.bf16.mxu0 %v4495
        %5512 = vmatpush1.bf16.msra.mxu0 %v4494
        %5513 = vmatprep.subr.bf16.mxu0 %v4517
        %5514 = vmatpush1.bf16.msra.mxu0 %v4516
        %5515 = vmatprep.subr.bf16.mxu0 %v4539
        %5516 = vmatpush1.bf16.msra.mxu0 %v4538
        %5517 = vmatprep.subr.bf16.mxu0 %v4561
        %5518 = vmatpush1.bf16.msra.mxu0 %v4560
        %5519 = vmatprep.mubr.bf16.mxu0 %v941
        %5520 = vmatmul.mubr.bf16.gmra.mrb[0].mxu0 %v940
        %v5521 = vpop.f32.mrb[0].mxu0
        %v5522 = vadd.f32 %v5481, %v5521
        %v5523 = vpop.f32.mrb[0].mxu0
        %v5524 = vadd.f32 %v5483, %v5523
        %v5525 = vpop.f32.mrb[0].mxu0
        %v5526 = vpop.f32.mrb[0].mxu0
        %5527 = vdwg.mxu0
        %5528 = vmatprep.subr.bf16.mxu0 %v3881
        %5529 = vmatpush1.bf16.msra.mxu0 %v3880
        %5530 = vmatprep.subr.bf16.mxu0 %v3903
        %5531 = vmatpush1.bf16.msra.mxu0 %v3902
        %5532 = vmatprep.subr.bf16.mxu0 %v3925
        %5533 = vmatpush1.bf16.msra.mxu0 %v3924
        %5534 = vmatprep.subr.bf16.mxu0 %v3947
        %5535 = vmatpush1.bf16.msra.mxu0 %v3946
        %5536 = vmatprep.subr.bf16.mxu0 %v3969
        %5537 = vmatpush1.bf16.msra.mxu0 %v3968
        %5538 = vmatprep.subr.bf16.mxu0 %v3991
        %5539 = vmatpush1.bf16.msra.mxu0 %v3990
        %5540 = vmatprep.subr.bf16.mxu0 %v4013
        %5541 = vmatpush1.bf16.msra.mxu0 %v4012
        %5542 = vmatprep.subr.bf16.mxu0 %v4035
        %5543 = vmatpush1.bf16.msra.mxu0 %v4034
        %5544 = vmatprep.subr.bf16.mxu0 %v4057
        %5545 = vmatpush1.bf16.msra.mxu0 %v4056
        %5546 = vmatprep.subr.bf16.mxu0 %v4079
        %5547 = vmatpush1.bf16.msra.mxu0 %v4078
        %5548 = vmatprep.subr.bf16.mxu0 %v4101
        %5549 = vmatpush1.bf16.msra.mxu0 %v4100
        %5550 = vmatprep.subr.bf16.mxu0 %v4123
        %5551 = vmatpush1.bf16.msra.mxu0 %v4122
        %5552 = vmatprep.subr.bf16.mxu0 %v4145
        %5553 = vmatpush1.bf16.msra.mxu0 %v4144
        %5554 = vmatprep.subr.bf16.mxu0 %v4167
        %5555 = vmatpush1.bf16.msra.mxu0 %v4166
        %5556 = vmatprep.subr.bf16.mxu0 %v4189
        %5557 = vmatpush1.bf16.msra.mxu0 %v4188
        %5558 = vmatprep.subr.bf16.mxu0 %v4211
        %5559 = vmatpush1.bf16.msra.mxu0 %v4210
        %5560 = vmatprep.mubr.bf16.mxu0 %v939
        %5561 = vmatmul.mubr.bf16.gmra.mrb[0].mxu0 %v938
        %v5562 = vpop.f32.mrb[0].mxu0
        %v5563 = vadd.f32 %v1679, %v5562
        %v5564 = vpop.f32.mrb[0].mxu0
        %v5565 = vadd.f32 %v1683, %v5564
        %v5566 = vpop.f32.mrb[0].mxu0
        %v5567 = vpop.f32.mrb[0].mxu0
        %5568 = vdwg.mxu0
        %5569 = vmatprep.subr.bf16.mxu0 %v4233
        %5570 = vmatpush1.bf16.msra.mxu0 %v4232
        %5571 = vmatprep.subr.bf16.mxu0 %v4255
        %5572 = vmatpush1.bf16.msra.mxu0 %v4254
        %5573 = vmatprep.subr.bf16.mxu0 %v4277
        %5574 = vmatpush1.bf16.msra.mxu0 %v4276
        %5575 = vmatprep.subr.bf16.mxu0 %v4299
        %5576 = vmatpush1.bf16.msra.mxu0 %v4298
        %5577 = vmatprep.subr.bf16.mxu0 %v4321
        %5578 = vmatpush1.bf16.msra.mxu0 %v4320
        %5579 = vmatprep.subr.bf16.mxu0 %v4343
        %5580 = vmatpush1.bf16.msra.mxu0 %v4342
        %5581 = vmatprep.subr.bf16.mxu0 %v4365
        %5582 = vmatpush1.bf16.msra.mxu0 %v4364
        %5583 = vmatprep.subr.bf16.mxu0 %v4387
        %5584 = vmatpush1.bf16.msra.mxu0 %v4386
        %5585 = vmatprep.subr.bf16.mxu0 %v4409
        %5586 = vmatpush1.bf16.msra.mxu0 %v4408
        %5587 = vmatprep.subr.bf16.mxu0 %v4431
        %5588 = vmatpush1.bf16.msra.mxu0 %v4430
        %5589 = vmatprep.subr.bf16.mxu0 %v4453
        %5590 = vmatpush1.bf16.msra.mxu0 %v4452
        %5591 = vmatprep.subr.bf16.mxu0 %v4475
        %5592 = vmatpush1.bf16.msra.mxu0 %v4474
        %5593 = vmatprep.subr.bf16.mxu0 %v4497
        %5594 = vmatpush1.bf16.msra.mxu0 %v4496
        %5595 = vmatprep.subr.bf16.mxu0 %v4519
        %5596 = vmatpush1.bf16.msra.mxu0 %v4518
        %5597 = vmatprep.subr.bf16.mxu0 %v4541
        %5598 = vmatpush1.bf16.msra.mxu0 %v4540
        %5599 = vmatprep.subr.bf16.mxu0 %v4563
        %5600 = vmatpush1.bf16.msra.mxu0 %v4562
        %5601 = vmatprep.mubr.bf16.mxu0 %v941
        %5602 = vmatmul.mubr.bf16.gmra.mrb[0].mxu0 %v940
        %v5603 = vpop.f32.mrb[0].mxu0
        %v5604 = vadd.f32 %v5563, %v5603
        %v5605 = vpop.f32.mrb[0].mxu0
        %v5606 = vadd.f32 %v5565, %v5605
        %v5607 = vpop.f32.mrb[0].mxu0
        %v5608 = vpop.f32.mrb[0].mxu0
        %5609 = vdwg.mxu0
        %5610 = vmatprep.subr.bf16.mxu0 %v3883
        %5611 = vmatpush1.bf16.msra.mxu0 %v3882
        %5612 = vmatprep.subr.bf16.mxu0 %v3905
        %5613 = vmatpush1.bf16.msra.mxu0 %v3904
        %5614 = vmatprep.subr.bf16.mxu0 %v3927
        %5615 = vmatpush1.bf16.msra.mxu0 %v3926
        %5616 = vmatprep.subr.bf16.mxu0 %v3949
        %5617 = vmatpush1.bf16.msra.mxu0 %v3948
        %5618 = vmatprep.subr.bf16.mxu0 %v3971
        %5619 = vmatpush1.bf16.msra.mxu0 %v3970
        %5620 = vmatprep.subr.bf16.mxu0 %v3993
        %5621 = vmatpush1.bf16.msra.mxu0 %v3992
        %5622 = vmatprep.subr.bf16.mxu0 %v4015
        %5623 = vmatpush1.bf16.msra.mxu0 %v4014
        %5624 = vmatprep.subr.bf16.mxu0 %v4037
        %5625 = vmatpush1.bf16.msra.mxu0 %v4036
        %5626 = vmatprep.subr.bf16.mxu0 %v4059
        %5627 = vmatpush1.bf16.msra.mxu0 %v4058
        %5628 = vmatprep.subr.bf16.mxu0 %v4081
        %5629 = vmatpush1.bf16.msra.mxu0 %v4080
        %5630 = vmatprep.subr.bf16.mxu0 %v4103
        %5631 = vmatpush1.bf16.msra.mxu0 %v4102
        %5632 = vmatprep.subr.bf16.mxu0 %v4125
        %5633 = vmatpush1.bf16.msra.mxu0 %v4124
        %5634 = vmatprep.subr.bf16.mxu0 %v4147
        %5635 = vmatpush1.bf16.msra.mxu0 %v4146
        %5636 = vmatprep.subr.bf16.mxu0 %v4169
        %5637 = vmatpush1.bf16.msra.mxu0 %v4168
        %5638 = vmatprep.subr.bf16.mxu0 %v4191
        %5639 = vmatpush1.bf16.msra.mxu0 %v4190
        %5640 = vmatprep.subr.bf16.mxu0 %v4213
        %5641 = vmatpush1.bf16.msra.mxu0 %v4212
        %5642 = vmatprep.mubr.bf16.mxu0 %v939
        %5643 = vmatmul.mubr.bf16.gmra.mrb[0].mxu0 %v938
        %v5644 = vpop.f32.mrb[0].mxu0
        %v5645 = vadd.f32 %v1687, %v5644
        %v5646 = vpop.f32.mrb[0].mxu0
        %v5647 = vadd.f32 %v1691, %v5646
        %v5648 = vpop.f32.mrb[0].mxu0
        %v5649 = vpop.f32.mrb[0].mxu0
        %5650 = vdwg.mxu0
        %5651 = vmatprep.subr.bf16.mxu0 %v4235
        %5652 = vmatpush1.bf16.msra.mxu0 %v4234
        %5653 = vmatprep.subr.bf16.mxu0 %v4257
        %5654 = vmatpush1.bf16.msra.mxu0 %v4256
        %5655 = vmatprep.subr.bf16.mxu0 %v4279
        %5656 = vmatpush1.bf16.msra.mxu0 %v4278
        %5657 = vmatprep.subr.bf16.mxu0 %v4301
        %5658 = vmatpush1.bf16.msra.mxu0 %v4300
        %5659 = vmatprep.subr.bf16.mxu0 %v4323
        %5660 = vmatpush1.bf16.msra.mxu0 %v4322
        %5661 = vmatprep.subr.bf16.mxu0 %v4345
        %5662 = vmatpush1.bf16.msra.mxu0 %v4344
        %5663 = vmatprep.subr.bf16.mxu0 %v4367
        %5664 = vmatpush1.bf16.msra.mxu0 %v4366
        %5665 = vmatprep.subr.bf16.mxu0 %v4389
        %5666 = vmatpush1.bf16.msra.mxu0 %v4388
        %5667 = vmatprep.subr.bf16.mxu0 %v4411
        %5668 = vmatpush1.bf16.msra.mxu0 %v4410
        %5669 = vmatprep.subr.bf16.mxu0 %v4433
        %5670 = vmatpush1.bf16.msra.mxu0 %v4432
        %5671 = vmatprep.subr.bf16.mxu0 %v4455
        %5672 = vmatpush1.bf16.msra.mxu0 %v4454
        %5673 = vmatprep.subr.bf16.mxu0 %v4477
        %5674 = vmatpush1.bf16.msra.mxu0 %v4476
        %5675 = vmatprep.subr.bf16.mxu0 %v4499
        %5676 = vmatpush1.bf16.msra.mxu0 %v4498
        %5677 = vmatprep.subr.bf16.mxu0 %v4521
        %5678 = vmatpush1.bf16.msra.mxu0 %v4520
        %5679 = vmatprep.subr.bf16.mxu0 %v4543
        %5680 = vmatpush1.bf16.msra.mxu0 %v4542
        %5681 = vmatprep.subr.bf16.mxu0 %v4565
        %5682 = vmatpush1.bf16.msra.mxu0 %v4564
        %5683 = vmatprep.mubr.bf16.mxu0 %v941
        %5684 = vmatmul.mubr.bf16.gmra.mrb[0].mxu0 %v940
        %v5685 = vpop.f32.mrb[0].mxu0
        %v5686 = vadd.f32 %v5645, %v5685
        %v5687 = vpop.f32.mrb[0].mxu0
        %v5688 = vadd.f32 %v5647, %v5687
        %v5689 = vpop.f32.mrb[0].mxu0
        %v5690 = vpop.f32.mrb[0].mxu0
        %5691 = vdwg.mxu0
        %5692 = vmatprep.subr.bf16.mxu0 %v3885
        %5693 = vmatpush1.bf16.msra.mxu0 %v3884
        %5694 = vmatprep.subr.bf16.mxu0 %v3907
        %5695 = vmatpush1.bf16.msra.mxu0 %v3906
        %5696 = vmatprep.subr.bf16.mxu0 %v3929
        %5697 = vmatpush1.bf16.msra.mxu0 %v3928
        %5698 = vmatprep.subr.bf16.mxu0 %v3951
        %5699 = vmatpush1.bf16.msra.mxu0 %v3950
        %5700 = vmatprep.subr.bf16.mxu0 %v3973
        %5701 = vmatpush1.bf16.msra.mxu0 %v3972
        %5702 = vmatprep.subr.bf16.mxu0 %v3995
        %5703 = vmatpush1.bf16.msra.mxu0 %v3994
        %5704 = vmatprep.subr.bf16.mxu0 %v4017
        %5705 = vmatpush1.bf16.msra.mxu0 %v4016
        %5706 = vmatprep.subr.bf16.mxu0 %v4039
        %5707 = vmatpush1.bf16.msra.mxu0 %v4038
        %5708 = vmatprep.subr.bf16.mxu0 %v4061
        %5709 = vmatpush1.bf16.msra.mxu0 %v4060
        %5710 = vmatprep.subr.bf16.mxu0 %v4083
        %5711 = vmatpush1.bf16.msra.mxu0 %v4082
        %5712 = vmatprep.subr.bf16.mxu0 %v4105
        %5713 = vmatpush1.bf16.msra.mxu0 %v4104
        %5714 = vmatprep.subr.bf16.mxu0 %v4127
        %5715 = vmatpush1.bf16.msra.mxu0 %v4126
        %5716 = vmatprep.subr.bf16.mxu0 %v4149
        %5717 = vmatpush1.bf16.msra.mxu0 %v4148
        %5718 = vmatprep.subr.bf16.mxu0 %v4171
        %5719 = vmatpush1.bf16.msra.mxu0 %v4170
        %5720 = vmatprep.subr.bf16.mxu0 %v4193
        %5721 = vmatpush1.bf16.msra.mxu0 %v4192
        %5722 = vmatprep.subr.bf16.mxu0 %v4215
        %5723 = vmatpush1.bf16.msra.mxu0 %v4214
        %5724 = vmatprep.mubr.bf16.mxu0 %v939
        %5725 = vmatmul.mubr.bf16.gmra.mrb[0].mxu0 %v938
        %v5726 = vpop.f32.mrb[0].mxu0
        %v5727 = vadd.f32 %v1695, %v5726
        %v5728 = vpop.f32.mrb[0].mxu0
        %v5729 = vadd.f32 %v1699, %v5728
        %v5730 = vpop.f32.mrb[0].mxu0
        %v5731 = vpop.f32.mrb[0].mxu0
        %5732 = vdwg.mxu0
        %5733 = vmatprep.subr.bf16.mxu0 %v4237
        %5734 = vmatpush1.bf16.msra.mxu0 %v4236
        %5735 = vmatprep.subr.bf16.mxu0 %v4259
        %5736 = vmatpush1.bf16.msra.mxu0 %v4258
        %5737 = vmatprep.subr.bf16.mxu0 %v4281
        %5738 = vmatpush1.bf16.msra.mxu0 %v4280
        %5739 = vmatprep.subr.bf16.mxu0 %v4303
        %5740 = vmatpush1.bf16.msra.mxu0 %v4302
        %5741 = vmatprep.subr.bf16.mxu0 %v4325
        %5742 = vmatpush1.bf16.msra.mxu0 %v4324
        %5743 = vmatprep.subr.bf16.mxu0 %v4347
        %5744 = vmatpush1.bf16.msra.mxu0 %v4346
        %5745 = vmatprep.subr.bf16.mxu0 %v4369
        %5746 = vmatpush1.bf16.msra.mxu0 %v4368
        %5747 = vmatprep.subr.bf16.mxu0 %v4391
        %5748 = vmatpush1.bf16.msra.mxu0 %v4390
        %5749 = vmatprep.subr.bf16.mxu0 %v4413
        %5750 = vmatpush1.bf16.msra.mxu0 %v4412
        %5751 = vmatprep.subr.bf16.mxu0 %v4435
        %5752 = vmatpush1.bf16.msra.mxu0 %v4434
        %5753 = vmatprep.subr.bf16.mxu0 %v4457
        %5754 = vmatpush1.bf16.msra.mxu0 %v4456
        %5755 = vmatprep.subr.bf16.mxu0 %v4479
        %5756 = vmatpush1.bf16.msra.mxu0 %v4478
        %5757 = vmatprep.subr.bf16.mxu0 %v4501
        %5758 = vmatpush1.bf16.msra.mxu0 %v4500
        %5759 = vmatprep.subr.bf16.mxu0 %v4523
        %5760 = vmatpush1.bf16.msra.mxu0 %v4522
        %5761 = vmatprep.subr.bf16.mxu0 %v4545
        %5762 = vmatpush1.bf16.msra.mxu0 %v4544
        %5763 = vmatprep.subr.bf16.mxu0 %v4567
        %5764 = vmatpush1.bf16.msra.mxu0 %v4566
        %5765 = vmatprep.mubr.bf16.mxu0 %v941
        %5766 = vmatmul.mubr.bf16.gmra.mrb[0].mxu0 %v940
        %v5767 = vpop.f32.mrb[0].mxu0
        %v5768 = vadd.f32 %v5727, %v5767
        %v5769 = vpop.f32.mrb[0].mxu0
        %v5770 = vadd.f32 %v5729, %v5769
        %v5771 = vpop.f32.mrb[0].mxu0
        %v5772 = vpop.f32.mrb[0].mxu0
        %5773 = vdwg.mxu0
        %5774 = vmatprep.subr.bf16.mxu0 %v3887
        %5775 = vmatpush1.bf16.msra.mxu0 %v3886
        %5776 = vmatprep.subr.bf16.mxu0 %v3909
        %5777 = vmatpush1.bf16.msra.mxu0 %v3908
        %5778 = vmatprep.subr.bf16.mxu0 %v3931
        %5779 = vmatpush1.bf16.msra.mxu0 %v3930
        %5780 = vmatprep.subr.bf16.mxu0 %v3953
        %5781 = vmatpush1.bf16.msra.mxu0 %v3952
        %5782 = vmatprep.subr.bf16.mxu0 %v3975
        %5783 = vmatpush1.bf16.msra.mxu0 %v3974
        %5784 = vmatprep.subr.bf16.mxu0 %v3997
        %5785 = vmatpush1.bf16.msra.mxu0 %v3996
        %5786 = vmatprep.subr.bf16.mxu0 %v4019
        %5787 = vmatpush1.bf16.msra.mxu0 %v4018
        %5788 = vmatprep.subr.bf16.mxu0 %v4041
        %5789 = vmatpush1.bf16.msra.mxu0 %v4040
        %5790 = vmatprep.subr.bf16.mxu0 %v4063
        %5791 = vmatpush1.bf16.msra.mxu0 %v4062
        %5792 = vmatprep.subr.bf16.mxu0 %v4085
        %5793 = vmatpush1.bf16.msra.mxu0 %v4084
        %5794 = vmatprep.subr.bf16.mxu0 %v4107
        %5795 = vmatpush1.bf16.msra.mxu0 %v4106
        %5796 = vmatprep.subr.bf16.mxu0 %v4129
        %5797 = vmatpush1.bf16.msra.mxu0 %v4128
        %5798 = vmatprep.subr.bf16.mxu0 %v4151
        %5799 = vmatpush1.bf16.msra.mxu0 %v4150
        %5800 = vmatprep.subr.bf16.mxu0 %v4173
        %5801 = vmatpush1.bf16.msra.mxu0 %v4172
        %5802 = vmatprep.subr.bf16.mxu0 %v4195
        %5803 = vmatpush1.bf16.msra.mxu0 %v4194
        %5804 = vmatprep.subr.bf16.mxu0 %v4217
        %5805 = vmatpush1.bf16.msra.mxu0 %v4216
        %5806 = vmatprep.mubr.bf16.mxu0 %v939
        %5807 = vmatmul.mubr.bf16.gmra.mrb[0].mxu0 %v938
        %v5808 = vpop.f32.mrb[0].mxu0
        %v5809 = vadd.f32 %v1703, %v5808
        %v5810 = vpop.f32.mrb[0].mxu0
        %v5811 = vadd.f32 %v1707, %v5810
        %v5812 = vpop.f32.mrb[0].mxu0
        %v5813 = vpop.f32.mrb[0].mxu0
        %5814 = vdwg.mxu0
        %5815 = vmatprep.subr.bf16.mxu0 %v4239
        %5816 = vmatpush1.bf16.msra.mxu0 %v4238
        %5817 = vmatprep.subr.bf16.mxu0 %v4261
        %5818 = vmatpush1.bf16.msra.mxu0 %v4260
        %5819 = vmatprep.subr.bf16.mxu0 %v4283
        %5820 = vmatpush1.bf16.msra.mxu0 %v4282
        %5821 = vmatprep.subr.bf16.mxu0 %v4305
        %5822 = vmatpush1.bf16.msra.mxu0 %v4304
        %5823 = vmatprep.subr.bf16.mxu0 %v4327
        %5824 = vmatpush1.bf16.msra.mxu0 %v4326
        %5825 = vmatprep.subr.bf16.mxu0 %v4349
        %5826 = vmatpush1.bf16.msra.mxu0 %v4348
        %5827 = vmatprep.subr.bf16.mxu0 %v4371
        %5828 = vmatpush1.bf16.msra.mxu0 %v4370
        %5829 = vmatprep.subr.bf16.mxu0 %v4393
        %5830 = vmatpush1.bf16.msra.mxu0 %v4392
        %5831 = vmatprep.subr.bf16.mxu0 %v4415
        %5832 = vmatpush1.bf16.msra.mxu0 %v4414
        %5833 = vmatprep.subr.bf16.mxu0 %v4437
        %5834 = vmatpush1.bf16.msra.mxu0 %v4436
        %5835 = vmatprep.subr.bf16.mxu0 %v4459
        %5836 = vmatpush1.bf16.msra.mxu0 %v4458
        %5837 = vmatprep.subr.bf16.mxu0 %v4481
        %5838 = vmatpush1.bf16.msra.mxu0 %v4480
        %5839 = vmatprep.subr.bf16.mxu0 %v4503
        %5840 = vmatpush1.bf16.msra.mxu0 %v4502
        %5841 = vmatprep.subr.bf16.mxu0 %v4525
        %5842 = vmatpush1.bf16.msra.mxu0 %v4524
        %5843 = vmatprep.subr.bf16.mxu0 %v4547
        %5844 = vmatpush1.bf16.msra.mxu0 %v4546
        %5845 = vmatprep.subr.bf16.mxu0 %v4569
        %5846 = vmatpush1.bf16.msra.mxu0 %v4568
        %5847 = vmatprep.mubr.bf16.mxu0 %v941
        %5848 = vmatmul.mubr.bf16.gmra.mrb[0].mxu0 %v940
        %v5849 = vpop.f32.mrb[0].mxu0
        %v5850 = vadd.f32 %v5809, %v5849
        %v5851 = vpop.f32.mrb[0].mxu0
        %v5852 = vadd.f32 %v5811, %v5851
        %v5853 = vpop.f32.mrb[0].mxu0
        %v5854 = vpop.f32.mrb[0].mxu0
        %5855 = vdwg.mxu0
        %5856 = vmatprep.subr.bf16.mxu0 %v3889
        %5857 = vmatpush1.bf16.msra.mxu0 %v3888
        %5858 = vmatprep.subr.bf16.mxu0 %v3911
        %5859 = vmatpush1.bf16.msra.mxu0 %v3910
        %5860 = vmatprep.subr.bf16.mxu0 %v3933
        %5861 = vmatpush1.bf16.msra.mxu0 %v3932
        %5862 = vmatprep.subr.bf16.mxu0 %v3955
        %5863 = vmatpush1.bf16.msra.mxu0 %v3954
        %5864 = vmatprep.subr.bf16.mxu0 %v3977
        %5865 = vmatpush1.bf16.msra.mxu0 %v3976
        %5866 = vmatprep.subr.bf16.mxu0 %v3999
        %5867 = vmatpush1.bf16.msra.mxu0 %v3998
        %5868 = vmatprep.subr.bf16.mxu0 %v4021
        %5869 = vmatpush1.bf16.msra.mxu0 %v4020
        %5870 = vmatprep.subr.bf16.mxu0 %v4043
        %5871 = vmatpush1.bf16.msra.mxu0 %v4042
        %5872 = vmatprep.subr.bf16.mxu0 %v4065
        %5873 = vmatpush1.bf16.msra.mxu0 %v4064
        %5874 = vmatprep.subr.bf16.mxu0 %v4087
        %5875 = vmatpush1.bf16.msra.mxu0 %v4086
        %5876 = vmatprep.subr.bf16.mxu0 %v4109
        %5877 = vmatpush1.bf16.msra.mxu0 %v4108
        %5878 = vmatprep.subr.bf16.mxu0 %v4131
        %5879 = vmatpush1.bf16.msra.mxu0 %v4130
        %5880 = vmatprep.subr.bf16.mxu0 %v4153
        %5881 = vmatpush1.bf16.msra.mxu0 %v4152
        %5882 = vmatprep.subr.bf16.mxu0 %v4175
        %5883 = vmatpush1.bf16.msra.mxu0 %v4174
        %5884 = vmatprep.subr.bf16.mxu0 %v4197
        %5885 = vmatpush1.bf16.msra.mxu0 %v4196
        %5886 = vmatprep.subr.bf16.mxu0 %v4219
        %5887 = vmatpush1.bf16.msra.mxu0 %v4218
        %5888 = vmatprep.mubr.bf16.mxu0 %v939
        %5889 = vmatmul.mubr.bf16.gmra.mrb[0].mxu0 %v938
        %v5890 = vpop.f32.mrb[0].mxu0
        %v5891 = vadd.f32 %v1711, %v5890
        %v5892 = vpop.f32.mrb[0].mxu0
        %v5893 = vadd.f32 %v1715, %v5892
        %v5894 = vpop.f32.mrb[0].mxu0
        %v5895 = vpop.f32.mrb[0].mxu0
        %5896 = vdwg.mxu0
        %5897 = vmatprep.subr.bf16.mxu0 %v4241
        %5898 = vmatpush1.bf16.msra.mxu0 %v4240
        %5899 = vmatprep.subr.bf16.mxu0 %v4263
        %5900 = vmatpush1.bf16.msra.mxu0 %v4262
        %5901 = vmatprep.subr.bf16.mxu0 %v4285
        %5902 = vmatpush1.bf16.msra.mxu0 %v4284
        %5903 = vmatprep.subr.bf16.mxu0 %v4307
        %5904 = vmatpush1.bf16.msra.mxu0 %v4306
        %5905 = vmatprep.subr.bf16.mxu0 %v4329
        %5906 = vmatpush1.bf16.msra.mxu0 %v4328
        %5907 = vmatprep.subr.bf16.mxu0 %v4351
        %5908 = vmatpush1.bf16.msra.mxu0 %v4350
        %5909 = vmatprep.subr.bf16.mxu0 %v4373
        %5910 = vmatpush1.bf16.msra.mxu0 %v4372
        %5911 = vmatprep.subr.bf16.mxu0 %v4395
        %5912 = vmatpush1.bf16.msra.mxu0 %v4394
        %5913 = vmatprep.subr.bf16.mxu0 %v4417
        %5914 = vmatpush1.bf16.msra.mxu0 %v4416
        %5915 = vmatprep.subr.bf16.mxu0 %v4439
        %5916 = vmatpush1.bf16.msra.mxu0 %v4438
        %5917 = vmatprep.subr.bf16.mxu0 %v4461
        %5918 = vmatpush1.bf16.msra.mxu0 %v4460
        %5919 = vmatprep.subr.bf16.mxu0 %v4483
        %5920 = vmatpush1.bf16.msra.mxu0 %v4482
        %5921 = vmatprep.subr.bf16.mxu0 %v4505
        %5922 = vmatpush1.bf16.msra.mxu0 %v4504
        %5923 = vmatprep.subr.bf16.mxu0 %v4527
        %5924 = vmatpush1.bf16.msra.mxu0 %v4526
        %5925 = vmatprep.subr.bf16.mxu0 %v4549
        %5926 = vmatpush1.bf16.msra.mxu0 %v4548
        %5927 = vmatprep.subr.bf16.mxu0 %v4571
        %5928 = vmatpush1.bf16.msra.mxu0 %v4570
        %5929 = vmatprep.mubr.bf16.mxu0 %v941
        %5930 = vmatmul.mubr.bf16.gmra.mrb[0].mxu0 %v940
        %v5931 = vpop.f32.mrb[0].mxu0
        %v5932 = vadd.f32 %v5891, %v5931
        %v5933 = vpop.f32.mrb[0].mxu0
        %v5934 = vadd.f32 %v5893, %v5933
        %v5935 = vpop.f32.mrb[0].mxu0
        %v5936 = vpop.f32.mrb[0].mxu0
        %5937 = vdwg.mxu0
        %5938 = vmatprep.subr.bf16.mxu0 %v3891
        %5939 = vmatpush1.bf16.msra.mxu0 %v3890
        %5940 = vmatprep.subr.bf16.mxu0 %v3913
        %5941 = vmatpush1.bf16.msra.mxu0 %v3912
        %5942 = vmatprep.subr.bf16.mxu0 %v3935
        %5943 = vmatpush1.bf16.msra.mxu0 %v3934
        %5944 = vmatprep.subr.bf16.mxu0 %v3957
        %5945 = vmatpush1.bf16.msra.mxu0 %v3956
        %5946 = vmatprep.subr.bf16.mxu0 %v3979
        %5947 = vmatpush1.bf16.msra.mxu0 %v3978
        %5948 = vmatprep.subr.bf16.mxu0 %v4001
        %5949 = vmatpush1.bf16.msra.mxu0 %v4000
        %5950 = vmatprep.subr.bf16.mxu0 %v4023
        %5951 = vmatpush1.bf16.msra.mxu0 %v4022
        %5952 = vmatprep.subr.bf16.mxu0 %v4045
        %5953 = vmatpush1.bf16.msra.mxu0 %v4044
        %5954 = vmatprep.subr.bf16.mxu0 %v4067
        %5955 = vmatpush1.bf16.msra.mxu0 %v4066
        %5956 = vmatprep.subr.bf16.mxu0 %v4089
        %5957 = vmatpush1.bf16.msra.mxu0 %v4088
        %5958 = vmatprep.subr.bf16.mxu0 %v4111
        %5959 = vmatpush1.bf16.msra.mxu0 %v4110
        %5960 = vmatprep.subr.bf16.mxu0 %v4133
        %5961 = vmatpush1.bf16.msra.mxu0 %v4132
        %5962 = vmatprep.subr.bf16.mxu0 %v4155
        %5963 = vmatpush1.bf16.msra.mxu0 %v4154
        %5964 = vmatprep.subr.bf16.mxu0 %v4177
        %5965 = vmatpush1.bf16.msra.mxu0 %v4176
        %5966 = vmatprep.subr.bf16.mxu0 %v4199
        %5967 = vmatpush1.bf16.msra.mxu0 %v4198
        %5968 = vmatprep.subr.bf16.mxu0 %v4221
        %5969 = vmatpush1.bf16.msra.mxu0 %v4220
        %5970 = vmatprep.mubr.bf16.mxu0 %v939
        %5971 = vmatmul.mubr.bf16.gmra.mrb[0].mxu0 %v938
        %v5972 = vpop.f32.mrb[0].mxu0
        %v5973 = vadd.f32 %v1719, %v5972
        %v5974 = vpop.f32.mrb[0].mxu0
        %v5975 = vadd.f32 %v1723, %v5974
        %v5976 = vpop.f32.mrb[0].mxu0
        %v5977 = vpop.f32.mrb[0].mxu0
        %5978 = vdwg.mxu0
        %5979 = vmatprep.subr.bf16.mxu0 %v4243
        %5980 = vmatpush1.bf16.msra.mxu0 %v4242
        %5981 = vmatprep.subr.bf16.mxu0 %v4265
        %5982 = vmatpush1.bf16.msra.mxu0 %v4264
        %5983 = vmatprep.subr.bf16.mxu0 %v4287
        %5984 = vmatpush1.bf16.msra.mxu0 %v4286
        %5985 = vmatprep.subr.bf16.mxu0 %v4309
        %5986 = vmatpush1.bf16.msra.mxu0 %v4308
        %5987 = vmatprep.subr.bf16.mxu0 %v4331
        %5988 = vmatpush1.bf16.msra.mxu0 %v4330
        %5989 = vmatprep.subr.bf16.mxu0 %v4353
        %5990 = vmatpush1.bf16.msra.mxu0 %v4352
        %5991 = vmatprep.subr.bf16.mxu0 %v4375
        %5992 = vmatpush1.bf16.msra.mxu0 %v4374
        %5993 = vmatprep.subr.bf16.mxu0 %v4397
        %5994 = vmatpush1.bf16.msra.mxu0 %v4396
        %5995 = vmatprep.subr.bf16.mxu0 %v4419
        %5996 = vmatpush1.bf16.msra.mxu0 %v4418
        %5997 = vmatprep.subr.bf16.mxu0 %v4441
        %5998 = vmatpush1.bf16.msra.mxu0 %v4440
        %5999 = vmatprep.subr.bf16.mxu0 %v4463
        %6000 = vmatpush1.bf16.msra.mxu0 %v4462
        %6001 = vmatprep.subr.bf16.mxu0 %v4485
        %6002 = vmatpush1.bf16.msra.mxu0 %v4484
        %6003 = vmatprep.subr.bf16.mxu0 %v4507
        %6004 = vmatpush1.bf16.msra.mxu0 %v4506
        %6005 = vmatprep.subr.bf16.mxu0 %v4529
        %6006 = vmatpush1.bf16.msra.mxu0 %v4528
        %6007 = vmatprep.subr.bf16.mxu0 %v4551
        %6008 = vmatpush1.bf16.msra.mxu0 %v4550
        %6009 = vmatprep.subr.bf16.mxu0 %v4573
        %6010 = vmatpush1.bf16.msra.mxu0 %v4572
        %6011 = vmatprep.mubr.bf16.mxu0 %v941
        %6012 = vmatmul.mubr.bf16.gmra.mrb[0].mxu0 %v940
        %v6013 = vpop.f32.mrb[0].mxu0
        %v6014 = vadd.f32 %v5973, %v6013
        %v6015 = vpop.f32.mrb[0].mxu0
        %v6016 = vadd.f32 %v5975, %v6015
        %v6017 = vpop.f32.mrb[0].mxu0
        %v6018 = vpop.f32.mrb[0].mxu0
        %6019 = vdwg.mxu0
        %6020 = vmatprep.subr.bf16.mxu0 %v3893
        %6021 = vmatpush1.bf16.msra.mxu0 %v3892
        %6022 = vmatprep.subr.bf16.mxu0 %v3915
        %6023 = vmatpush1.bf16.msra.mxu0 %v3914
        %6024 = vmatprep.subr.bf16.mxu0 %v3937
        %6025 = vmatpush1.bf16.msra.mxu0 %v3936
        %6026 = vmatprep.subr.bf16.mxu0 %v3959
        %6027 = vmatpush1.bf16.msra.mxu0 %v3958
        %6028 = vmatprep.subr.bf16.mxu0 %v3981
        %6029 = vmatpush1.bf16.msra.mxu0 %v3980
        %6030 = vmatprep.subr.bf16.mxu0 %v4003
        %6031 = vmatpush1.bf16.msra.mxu0 %v4002
        %6032 = vmatprep.subr.bf16.mxu0 %v4025
        %6033 = vmatpush1.bf16.msra.mxu0 %v4024
        %6034 = vmatprep.subr.bf16.mxu0 %v4047
        %6035 = vmatpush1.bf16.msra.mxu0 %v4046
        %6036 = vmatprep.subr.bf16.mxu0 %v4069
        %6037 = vmatpush1.bf16.msra.mxu0 %v4068
        %6038 = vmatprep.subr.bf16.mxu0 %v4091
        %6039 = vmatpush1.bf16.msra.mxu0 %v4090
        %6040 = vmatprep.subr.bf16.mxu0 %v4113
        %6041 = vmatpush1.bf16.msra.mxu0 %v4112
        %6042 = vmatprep.subr.bf16.mxu0 %v4135
        %6043 = vmatpush1.bf16.msra.mxu0 %v4134
        %6044 = vmatprep.subr.bf16.mxu0 %v4157
        %6045 = vmatpush1.bf16.msra.mxu0 %v4156
        %6046 = vmatprep.subr.bf16.mxu0 %v4179
        %6047 = vmatpush1.bf16.msra.mxu0 %v4178
        %6048 = vmatprep.subr.bf16.mxu0 %v4201
        %6049 = vmatpush1.bf16.msra.mxu0 %v4200
        %6050 = vmatprep.subr.bf16.mxu0 %v4223
        %6051 = vmatpush1.bf16.msra.mxu0 %v4222
        %6052 = vmatprep.mubr.bf16.mxu0 %v939
        %6053 = vmatmul.mubr.bf16.gmra.mrb[0].mxu0 %v938
        %v6054 = vpop.f32.mrb[0].mxu0
        %v6055 = vadd.f32 %v1727, %v6054
        %v6056 = vpop.f32.mrb[0].mxu0
        %v6057 = vadd.f32 %v1731, %v6056
        %v6058 = vpop.f32.mrb[0].mxu0
        %v6059 = vpop.f32.mrb[0].mxu0
        %6060 = vdwg.mxu0
        %6061 = vmatprep.subr.bf16.mxu0 %v4245
        %6062 = vmatpush1.bf16.msra.mxu0 %v4244
        %6063 = vmatprep.subr.bf16.mxu0 %v4267
        %6064 = vmatpush1.bf16.msra.mxu0 %v4266
        %6065 = vmatprep.subr.bf16.mxu0 %v4289
        %6066 = vmatpush1.bf16.msra.mxu0 %v4288
        %6067 = vmatprep.subr.bf16.mxu0 %v4311
        %6068 = vmatpush1.bf16.msra.mxu0 %v4310
        %6069 = vmatprep.subr.bf16.mxu0 %v4333
        %6070 = vmatpush1.bf16.msra.mxu0 %v4332
        %6071 = vmatprep.subr.bf16.mxu0 %v4355
        %6072 = vmatpush1.bf16.msra.mxu0 %v4354
        %6073 = vmatprep.subr.bf16.mxu0 %v4377
        %6074 = vmatpush1.bf16.msra.mxu0 %v4376
        %6075 = vmatprep.subr.bf16.mxu0 %v4399
        %6076 = vmatpush1.bf16.msra.mxu0 %v4398
        %6077 = vmatprep.subr.bf16.mxu0 %v4421
        %6078 = vmatpush1.bf16.msra.mxu0 %v4420
        %6079 = vmatprep.subr.bf16.mxu0 %v4443
        %6080 = vmatpush1.bf16.msra.mxu0 %v4442
        %6081 = vmatprep.subr.bf16.mxu0 %v4465
        %6082 = vmatpush1.bf16.msra.mxu0 %v4464
        %6083 = vmatprep.subr.bf16.mxu0 %v4487
        %6084 = vmatpush1.bf16.msra.mxu0 %v4486
        %6085 = vmatprep.subr.bf16.mxu0 %v4509
        %6086 = vmatpush1.bf16.msra.mxu0 %v4508
        %6087 = vmatprep.subr.bf16.mxu0 %v4531
        %6088 = vmatpush1.bf16.msra.mxu0 %v4530
        %6089 = vmatprep.subr.bf16.mxu0 %v4553
        %6090 = vmatpush1.bf16.msra.mxu0 %v4552
        %6091 = vmatprep.subr.bf16.mxu0 %v4575
        %6092 = vmatpush1.bf16.msra.mxu0 %v4574
        %6093 = vmatprep.mubr.bf16.mxu0 %v941
        %6094 = vmatmul.mubr.bf16.gmra.mrb[0].mxu0 %v940
        %v6095 = vpop.f32.mrb[0].mxu0
        %v6096 = vadd.f32 %v6055, %v6095
        %v6097 = vpop.f32.mrb[0].mxu0
        %v6098 = vadd.f32 %v6057, %v6097
        %v6099 = vpop.f32.mrb[0].mxu0
        %v6100 = vpop.f32.mrb[0].mxu0
        %6101 = vdwg.mxu0
        %6102 = vmatprep.subr.bf16.mxu0 %v3895
        %6103 = vmatpush1.bf16.msra.mxu0 %v3894
        %6104 = vmatprep.subr.bf16.mxu0 %v3917
        %6105 = vmatpush1.bf16.msra.mxu0 %v3916
        %6106 = vmatprep.subr.bf16.mxu0 %v3939
        %6107 = vmatpush1.bf16.msra.mxu0 %v3938
        %6108 = vmatprep.subr.bf16.mxu0 %v3961
        %6109 = vmatpush1.bf16.msra.mxu0 %v3960
        %6110 = vmatprep.subr.bf16.mxu0 %v3983
        %6111 = vmatpush1.bf16.msra.mxu0 %v3982
        %6112 = vmatprep.subr.bf16.mxu0 %v4005
        %6113 = vmatpush1.bf16.msra.mxu0 %v4004
        %6114 = vmatprep.subr.bf16.mxu0 %v4027
        %6115 = vmatpush1.bf16.msra.mxu0 %v4026
        %6116 = vmatprep.subr.bf16.mxu0 %v4049
        %6117 = vmatpush1.bf16.msra.mxu0 %v4048
        %6118 = vmatprep.subr.bf16.mxu0 %v4071
        %6119 = vmatpush1.bf16.msra.mxu0 %v4070
        %6120 = vmatprep.subr.bf16.mxu0 %v4093
        %6121 = vmatpush1.bf16.msra.mxu0 %v4092
        %6122 = vmatprep.subr.bf16.mxu0 %v4115
        %6123 = vmatpush1.bf16.msra.mxu0 %v4114
        %6124 = vmatprep.subr.bf16.mxu0 %v4137
        %6125 = vmatpush1.bf16.msra.mxu0 %v4136
        %6126 = vmatprep.subr.bf16.mxu0 %v4159
        %6127 = vmatpush1.bf16.msra.mxu0 %v4158
        %6128 = vmatprep.subr.bf16.mxu0 %v4181
        %6129 = vmatpush1.bf16.msra.mxu0 %v4180
        %6130 = vmatprep.subr.bf16.mxu0 %v4203
        %6131 = vmatpush1.bf16.msra.mxu0 %v4202
        %6132 = vmatprep.subr.bf16.mxu0 %v4225
        %6133 = vmatpush1.bf16.msra.mxu0 %v4224
        %6134 = vmatprep.mubr.bf16.mxu0 %v939
        %6135 = vmatmul.mubr.bf16.gmra.mrb[0].mxu0 %v938
        %v6136 = vpop.f32.mrb[0].mxu0
        %v6137 = vadd.f32 %v1735, %v6136
        %v6138 = vpop.f32.mrb[0].mxu0
        %v6139 = vadd.f32 %v1739, %v6138
        %v6140 = vpop.f32.mrb[0].mxu0
        %v6141 = vpop.f32.mrb[0].mxu0
        %6142 = vdwg.mxu0
        %6143 = vmatprep.subr.bf16.mxu0 %v4247
        %6144 = vmatpush1.bf16.msra.mxu0 %v4246
        %6145 = vmatprep.subr.bf16.mxu0 %v4269
        %6146 = vmatpush1.bf16.msra.mxu0 %v4268
        %6147 = vmatprep.subr.bf16.mxu0 %v4291
        %6148 = vmatpush1.bf16.msra.mxu0 %v4290
        %6149 = vmatprep.subr.bf16.mxu0 %v4313
        %6150 = vmatpush1.bf16.msra.mxu0 %v4312
        %6151 = vmatprep.subr.bf16.mxu0 %v4335
        %6152 = vmatpush1.bf16.msra.mxu0 %v4334
        %6153 = vmatprep.subr.bf16.mxu0 %v4357
        %6154 = vmatpush1.bf16.msra.mxu0 %v4356
        %6155 = vmatprep.subr.bf16.mxu0 %v4379
        %6156 = vmatpush1.bf16.msra.mxu0 %v4378
        %6157 = vmatprep.subr.bf16.mxu0 %v4401
        %6158 = vmatpush1.bf16.msra.mxu0 %v4400
        %6159 = vmatprep.subr.bf16.mxu0 %v4423
        %6160 = vmatpush1.bf16.msra.mxu0 %v4422
        %6161 = vmatprep.subr.bf16.mxu0 %v4445
        %6162 = vmatpush1.bf16.msra.mxu0 %v4444
        %6163 = vmatprep.subr.bf16.mxu0 %v4467
        %6164 = vmatpush1.bf16.msra.mxu0 %v4466
        %6165 = vmatprep.subr.bf16.mxu0 %v4489
        %6166 = vmatpush1.bf16.msra.mxu0 %v4488
        %6167 = vmatprep.subr.bf16.mxu0 %v4511
        %6168 = vmatpush1.bf16.msra.mxu0 %v4510
        %6169 = vmatprep.subr.bf16.mxu0 %v4533
        %6170 = vmatpush1.bf16.msra.mxu0 %v4532
        %6171 = vmatprep.subr.bf16.mxu0 %v4555
        %6172 = vmatpush1.bf16.msra.mxu0 %v4554
        %6173 = vmatprep.subr.bf16.mxu0 %v4577
        %6174 = vmatpush1.bf16.msra.mxu0 %v4576
        %6175 = vmatprep.mubr.bf16.mxu0 %v941
        %6176 = vmatmul.mubr.bf16.gmra.mrb[0].mxu0 %v940
        %v6177 = vpop.f32.mrb[0].mxu0
        %v6178 = vadd.f32 %v6137, %v6177
        %v6179 = vpop.f32.mrb[0].mxu0
        %v6180 = vadd.f32 %v6139, %v6179
        %v6181 = vpop.f32.mrb[0].mxu0
        %v6182 = vpop.f32.mrb[0].mxu0
        %6183 = vdwg.mxu0
        %6184 = vst [vmem:[%s347] sm:$0xff] %v5358
        %6185 = vst [vmem:[%s347 + $0x8] sm:$0xff] %v5360
        %6186 = vst [vmem:[%s347 + $0x10] sm:$0xff] %v5440
        %6187 = vst [vmem:[%s347 + $0x18] sm:$0xff] %v5442
        %6188 = vst [vmem:[%s347 + $0x20] sm:$0xff] %v5522
        %6189 = vst [vmem:[%s347 + $0x28] sm:$0xff] %v5524
        %6190 = vst [vmem:[%s347 + $0x30] sm:$0xff] %v5604
        %6191 = vst [vmem:[%s347 + $0x38] sm:$0xff] %v5606
        %6192 = vst [vmem:[%s347 + $0x40] sm:$0xff] %v5686
        %6193 = vst [vmem:[%s347 + $0x48] sm:$0xff] %v5688
        %6194 = vst [vmem:[%s347 + $0x50] sm:$0xff] %v5768
        %6195 = vst [vmem:[%s347 + $0x58] sm:$0xff] %v5770
        %6196 = vst [vmem:[%s347 + $0x60] sm:$0xff] %v5850
        %6197 = vst [vmem:[%s347 + $0x68] sm:$0xff] %v5852
        %6198 = vst [vmem:[%s347 + $0x70] sm:$0xff] %v5932
        %6199 = vst [vmem:[%s347 + $0x78] sm:$0xff] %v5934
        %6200 = vst [vmem:[%s347 + $0x80] sm:$0xff] %v6014
        %6201 = vst [vmem:[%s347 + $0x88] sm:$0xff] %v6016
        %6202 = vst [vmem:[%s347 + $0x90] sm:$0xff] %v6096
        %6203 = vst [vmem:[%s347 + $0x98] sm:$0xff] %v6098
        %6204 = vst [vmem:[%s347 + $0xa0] sm:$0xff] %v6178
        %6205 = vst [vmem:[%s347 + $0xa8] sm:$0xff] %v6180
        %s6206 = smul.u32 22, %s24
        %p6207 = scmp.lt.s32.totalorder %s6206, 87
        %s6208 = scalar_select %p6207, %s6206, 87
        %s6209 = smul.addr %s6208, 8
        %s6210 = scalar_lea.vmem %s6, %s6209
        // Predicated region
        $region61: #{ft_model_forward.1} parent=39 // pred_check
          %p6211 = pneg %p152
        $region62: #{ft_model_forward.1} parent=39 // pred_check_branch
          %6213 = sbr.rel (%p6211) target = $region64
        $region63: #{ft_model_forward.1} parent=39 // pred_region
          %s6215 = ssub.s32 512, 512
          %6216 = vsyncadd [#allocation4], %s6215
          %s6218 = sshll.u32 [#allocation11], 4
          %s6219 = int_to_ptr.vmem [resolvable:$true] %s6218
          %6221 = dma.vmem_to_hbm [thread:$0]  %s6219, 512, %s5, [#allocation4]
        $region64: #{ft_model_forward.1} parent=39 // pred_fallthru
          _
        // Predicated region
        $region65: #{ft_model_forward.1} parent=39 // pred_check
          %p6222 = pneg %p178
        $region66: #{ft_model_forward.1} parent=39 // pred_check_branch
          %6224 = sbr.rel (%p6222) target = $region68
        $region67: #{ft_model_forward.1} parent=39 // pred_region
          %s6225 = smul.u32 22, %s24
        $region68: #{ft_model_forward.1} parent=39 // pred_fallthru
          _
        // Predicated region
        $region69: #{ft_model_forward.1} parent=39 // pred_check
          %p6226 = pneg %p152
        $region70: #{ft_model_forward.1} parent=39 // pred_check_branch
          %6228 = sbr.rel (%p6226) target = $region72
        $region71: #{ft_model_forward.1} parent=39 // pred_region
          %6229 = dma.done [#allocation4], 512
        $region72: #{ft_model_forward.1} parent=39 // pred_fallthru
          _
      $region40: #{ft_model_forward.1} parent=5 // pred_fallthru
        _
      %p6230 = scmp.le.s32.totalorder 2, %s19
      // Predicated region
      $region73: #{ft_model_forward.1} parent=5 // pred_check
        %p6231 = pneg %p6230
      $region74: #{ft_model_forward.1} parent=5 // pred_check_branch
        %6233 = sbr.rel (%p6231) target = $region76
      $region75: #{ft_model_forward.1} parent=5 // pred_region
        %s6234 = ssub.s32 %s19, 2
        // Predicated region
        $region77: #{ft_model_forward.1} parent=75 // pred_check
          %p6235 = pneg %p184
        $region78: #{ft_model_forward.1} parent=75 // pred_check_branch
          %6237 = sbr.rel (%p6235) target = $region80
        $region79: #{ft_model_forward.1} parent=75 // pred_region
          %s6238 = smul.u32 22, %s25
          %p6239 = scmp.lt.s32.totalorder %s6238, 87
          %s6240 = scalar_select %p6239, %s6238, 87
          %s6241 = smul.addr %s6240, 8
          %s6242 = scalar_lea.vmem %s6, %s6241
        $region80: #{ft_model_forward.1} parent=75 // pred_fallthru
          _
      $region76: #{ft_model_forward.1} parent=5 // pred_fallthru
        _
    $region6: #{ft_model_forward.1} parent=1 // loop_footer
      %s23 = sadd.s32 1, %s19
    $region7: #{ft_model_forward.1} parent=1 // loop_footer_branch
      %18 = sbr.rel target = $region3
    $region8: #{ft_model_forward.1} parent=1 // loop_exit
      _
    %6243 = vsyncpa [#allocation3], 1
    %s6244 = scalar_lea.sflag [#allocation3], 1
    %6245 = vsyncpa %s6244, 1
    %6246 = vsyncpa [#allocation6], 1
    %6247 = vsyncpa [#allocation9], 1
    %s6248 = scalar_lea.sflag [#allocation9], 1
    %6249 = vsyncpa %s6248, 1
    %6250 = vsyncpa [#allocation4], 1
    %s6251 = scalar_lea.sflag [#allocation4], 1
    %6252 = vsyncpa %s6251, 1

</llo_original>
